<compile_context>
chip_gen: v6e
topology: v6e:2x2x1
jax: 0.10.0
libtpu: 0.0.40
codegen_flags: <defaults>
</compile_context>

<pallas_src>
import math
import functools

import jax
import jax.numpy as jnp
from jax.experimental import pallas as pl
from jax.experimental.pallas import tpu as pltpu

EPS = 1e-6


def _layernorm(x, a, b, eps=EPS):
    """torch-style LayerNorm: mean over last dim, unbiased std, eps on std.

    The per-row divide is replaced by an EUP reciprocal + VPU multiply."""
    d = x.shape[-1]
    s1 = jnp.sum(x, axis=-1, keepdims=True)
    s2 = jnp.sum(x * x, axis=-1, keepdims=True)
    mean = s1 * (1.0 / d)
    var = jnp.maximum((s2 - s1 * mean) * (1.0 / (d - 1)), 0.0)
    inv = pl.reciprocal(jnp.sqrt(var) + eps, approx=True)
    return (x - mean) * (a * inv) + b


def encoder_kernel(x_ref, qcode_ref, kcode_ref,
                   ln1a_ref, ln1b_ref,
                   wqkv_ref, bqkv_ref, wo_ref, bo_ref,
                   ln2a_ref, ln2b_ref,
                   w1_ref, b1_ref, w2_ref, b2_ref,
                   fa_ref, fb_ref,
                   o_ref, x_scr, bias_scr, *, num_heads, resident):
    l = pl.program_id(1)
    last = pl.num_programs(1) - 1
    li = l if resident else 0            # resident weights: index the layer axis in-kernel

    R, D = x_scr.shape
    H = num_heads
    dk = D // H

    @pl.when(l == 0)
    def _():
        x_scr[...] = x_ref[...].astype(jnp.float32)
        # Additive attention bias, built in VMEM once per batch block:
        # 0 where the query and key belong to the same sequence AND the key is
        # a real token, -1e9 otherwise (padding keys carry code -1).
        allow = qcode_ref[0] == kcode_ref[0]            # (R,1)==(1,R) -> (R,R)
        bias_scr[...] = jnp.where(allow, 0.0, -1e9).astype(jnp.float32)

    x = x_scr[...]                                      # (R, D) f32 residual stream
    bias = bias_scr[...]                                # (R, R) f32

    # ---- sublayer 1: x + SelfAttention(LayerNorm(x))   (dropout == identity)
    xn = _layernorm(x, ln1a_ref[li], ln1b_ref[li]).astype(jnp.bfloat16)
    # One lane-dense matmul for all of Q|K|V (1/sqrt(dk) already folded in).
    qkv = jnp.dot(xn, wqkv_ref[li],
                  preferred_element_type=jnp.float32) + bqkv_ref[li]   # (R, 3D)

    ctx = []
    for h in range(H):                                   # static unroll over heads
        qh = qkv[:, h * dk:(h + 1) * dk].astype(jnp.bfloat16)
        kh = qkv[:, D + h * dk:D + (h + 1) * dk].astype(jnp.bfloat16)
        vh = qkv[:, 2 * D + h * dk:2 * D + (h + 1) * dk].astype(jnp.bfloat16)
        s = jnp.einsum('qd,kd->qk', qh, kh,
                       preferred_element_type=jnp.float32) + bias      # (R, R)
        m = jnp.max(s, axis=-1, keepdims=True)
        p = jnp.exp(s - m)
        p = p * pl.reciprocal(jnp.sum(p, axis=-1, keepdims=True), approx=True)
        ctx.append(jnp.einsum('qk,kd->qd', p.astype(jnp.bfloat16), vh,
                              preferred_element_type=jnp.float32))     # (R, dk)
    ctx = jnp.concatenate(ctx, axis=-1).astype(jnp.bfloat16)           # (R, D)
    # Single K=D output projection (wo kept in its original (D, D) layout).
    attn = jnp.dot(ctx, wo_ref[li],
                   preferred_element_type=jnp.float32) + bo_ref[li]
    x = x + attn

    # ---- sublayer 2: x + FFN(LayerNorm(x))   (dropout == identity)
    xn2 = _layernorm(x, ln2a_ref[li], ln2b_ref[li]).astype(jnp.bfloat16)
    h1 = jnp.maximum(
        jnp.dot(xn2, w1_ref[li], preferred_element_type=jnp.float32) + b1_ref[li],
        0.0)
    ff = jnp.dot(h1.astype(jnp.bfloat16), w2_ref[li],
                 preferred_element_type=jnp.float32) + b2_ref[li]
    x = x + ff

    @pl.when(l != last)                  # last layer's residual writeback is dead
    def _():
        x_scr[...] = x

    # ---- fused final LayerNorm on the last layer
    @pl.when(l == last)
    def _():
        o_ref[...] = _layernorm(x, fa_ref[...], fb_ref[...]).astype(o_ref.dtype)


def init_layer_params(key, d_model, d_ff):
    ks = jax.random.split(key, 6)
    w = lambda k, s: jax.random.normal(k, s, jnp.float32) * 0.02
    z = lambda n: jnp.zeros((n,), jnp.float32)
    return dict(
        ln1_a=jnp.ones((d_model,), jnp.float32), ln1_b=z(d_model),
        wq=w(ks[0], (d_model, d_model)), bq=z(d_model),
        wk=w(ks[1], (d_model, d_model)), bk=z(d_model),
        wv=w(ks[2], (d_model, d_model)), bv=z(d_model),
        wo=w(ks[3], (d_model, d_model)), bo=z(d_model),
        ln2_a=jnp.ones((d_model,), jnp.float32), ln2_b=z(d_model),
        w1=w(ks[4], (d_model, d_ff)), b1=z(d_ff),
        w2=w(ks[5], (d_ff, d_model)), b2=z(d_model),
    )


# Order of the stacked parameter tensors as passed to the kernel.
WEIGHT_KEYS = ('ln1_a', 'ln1_b', 'wqkv', 'bqkv', 'wo', 'bo',
               'ln2_a', 'ln2_b', 'w1', 'b1', 'w2', 'b2')


def pack_encoder_params(layers, num_heads):
    """Stack per-layer params with a leading layer axis.  Q|K|V are fused into
    one (D, 3D) matrix with 1/sqrt(dk) folded into the Q columns (host-side,
    free).  Matmul weights -> bf16; biases / norm params stay f32."""
    D = layers[0]['wq'].shape[0]
    dk = D // num_heads
    scale = 1.0 / math.sqrt(dk)

    def stack(f):
        return jnp.stack([f(p) for p in layers], axis=0)

    return dict(
        ln1_a=stack(lambda p: p['ln1_a'].reshape(1, D)),
        ln1_b=stack(lambda p: p['ln1_b'].reshape(1, D)),
        wqkv=stack(lambda p: jnp.concatenate(
            [p['wq'] * scale, p['wk'], p['wv']], axis=1)).astype(jnp.bfloat16),
        bqkv=stack(lambda p: jnp.concatenate(
            [p['bq'] * scale, p['bk'], p['bv']]).reshape(1, 3 * D)),
        wo=stack(lambda p: p['wo']).astype(jnp.bfloat16),
        bo=stack(lambda p: p['bo'].reshape(1, D)),
        ln2_a=stack(lambda p: p['ln2_a'].reshape(1, D)),
        ln2_b=stack(lambda p: p['ln2_b'].reshape(1, D)),
        w1=stack(lambda p: p['w1']).astype(jnp.bfloat16),
        b1=stack(lambda p: p['b1'].reshape(1, -1)),
        w2=stack(lambda p: p['w2']).astype(jnp.bfloat16),
        b2=stack(lambda p: p['b2'].reshape(1, D)),
    )


def encoder_forward(x, mask, packed, norm_a, norm_b, *, num_heads, batch_block):
    B, S, D = x.shape
    assert B % batch_block == 0
    nb = B // batch_block
    R = batch_block * S
    n_layers = packed['wqkv'].shape[0]

    x2 = x.reshape(B * S, D)

    # Tiny O(R)-per-block mask codes (the O(R^2) bias is built in-kernel):
    # key code  = sequence id if the token is real, -1 if padding
    # query code = sequence id
    # attention is allowed iff query code == key code.
    seq_id = jnp.repeat(jnp.arange(B, dtype=jnp.float32), S).reshape(nb, R)
    valid = mask.reshape(B, S).reshape(nb, R)
    k_code = jnp.where(valid > 0, seq_id, -1.0).reshape(nb, 1, R)
    q_code = seq_id.reshape(nb, R, 1)

    # Keep all layers' weights VMEM-resident (fetched once, constant block)
    # when the stacked parameter set is small; otherwise stream per layer.
    w_bytes = sum(int(packed[k].size) * packed[k].dtype.itemsize for k in WEIGHT_KEYS)
    resident = w_bytes <= 8 * 1024 * 1024

    def wspec(arr):
        if resident:
            full = tuple(arr.shape)
            return pl.BlockSpec(full, lambda i, l: (0,) * len(full))
        shape = (1,) + tuple(arr.shape[1:])
        zeros = (0,) * (arr.ndim - 1)
        return pl.BlockSpec(shape, lambda i, l: (l,) + zeros)

    in_specs = [
        pl.BlockSpec((R, D), lambda i, l: (i, 0)),          # activation rows
        pl.BlockSpec((1, R, 1), lambda i, l: (i, 0, 0)),    # query codes
        pl.BlockSpec((1, 1, R), lambda i, l: (i, 0, 0)),    # key codes
    ] + [wspec(packed[k]) for k in WEIGHT_KEYS] + [
        pl.BlockSpec((1, D), lambda i, l: (0, 0)),          # final norm a
        pl.BlockSpec((1, D), lambda i, l: (0, 0)),          # final norm b
    ]

    kernel = functools.partial(encoder_kernel, num_heads=num_heads, resident=resident)
    out = pl.pallas_call(
        kernel,
        out_shape=jax.ShapeDtypeStruct((B * S, D), x.dtype),
        grid=(nb, n_layers),
        in_specs=in_specs,
        out_specs=pl.BlockSpec((R, D), lambda i, l: (i, 0)),
        scratch_shapes=[pltpu.VMEM((R, D), jnp.float32),     # residual stream
                        pltpu.VMEM((R, R), jnp.float32)],    # attention bias
        compiler_params=pltpu.CompilerParams(
            dimension_semantics=("parallel", "arbitrary")),
    )(x2, q_code, k_code, *(packed[k] for k in WEIGHT_KEYS),
      norm_a.reshape(1, D), norm_b.reshape(1, D))
    return out.reshape(B, S, D)


if __name__ == "__main__":
    # TODO(synk): dropout is identity here (eval mode); training-mode dropout
    # (stateful PRNG) is not implemented.
    B, S, D, H, D_FF, N_LAYERS = 4, 16, 128, 4, 256, 2
    BATCH_BLOCK = 2   # nb=2 "parallel" batch blocks (feeds both v7x TensorCores)

    key = jax.random.PRNGKey(0)
    keys = jax.random.split(key, N_LAYERS + 2)
    layers = [init_layer_params(keys[i], D, D_FF) for i in range(N_LAYERS)]
    packed = pack_encoder_params(layers, H)
    norm_a = jnp.ones((D,), jnp.float32)
    norm_b = jnp.zeros((D,), jnp.float32)

    x = jax.random.normal(keys[-1], (B, S, D), jnp.float32)

    # src-style padding mask: (B, 1, S), 1 = real token, 0 = padding.
    lengths = jnp.array([S, S - 3, S, 5], dtype=jnp.int32)
    pos = jnp.arange(S, dtype=jnp.int32)[None, None, :]
    mask = (pos < lengths[:, None, None]).astype(jnp.float32)

    out = encoder_forward(x, mask, packed, norm_a, norm_b,
                          num_heads=H, batch_block=BATCH_BLOCK)
    out = jax.block_until_ready(out)
    assert out.shape == (B, S, D)
    assert bool(jnp.all(jnp.isfinite(out)))
    print("KERNEL_OK")
</pallas_src>

<mosaic_0001>
module attributes {stable_mosaic.version = 11 : i64} {
  func.func @encoder_kernel(%arg0: i32, %arg1: i32, %arg2: memref<32x128xf32, #tpu.memory_space<vmem>>, %arg3: memref<1x32x1xf32, #tpu.memory_space<vmem>>, %arg4: memref<1x1x32xf32, #tpu.memory_space<vmem>>, %arg5: memref<2x1x128xf32, #tpu.memory_space<vmem>>, %arg6: memref<2x1x128xf32, #tpu.memory_space<vmem>>, %arg7: memref<2x128x384xbf16, #tpu.memory_space<vmem>>, %arg8: memref<2x1x384xf32, #tpu.memory_space<vmem>>, %arg9: memref<2x128x128xbf16, #tpu.memory_space<vmem>>, %arg10: memref<2x1x128xf32, #tpu.memory_space<vmem>>, %arg11: memref<2x1x128xf32, #tpu.memory_space<vmem>>, %arg12: memref<2x1x128xf32, #tpu.memory_space<vmem>>, %arg13: memref<2x128x256xbf16, #tpu.memory_space<vmem>>, %arg14: memref<2x1x256xf32, #tpu.memory_space<vmem>>, %arg15: memref<2x256x128xbf16, #tpu.memory_space<vmem>>, %arg16: memref<2x1x128xf32, #tpu.memory_space<vmem>>, %arg17: memref<1x128xf32, #tpu.memory_space<vmem>>, %arg18: memref<1x128xf32, #tpu.memory_space<vmem>>, %arg19: memref<32x128xf32, #tpu.memory_space<vmem>>, %arg20: memref<32x128xf32, #tpu.memory_space<vmem>>, %arg21: memref<32x32xf32, #tpu.memory_space<vmem>>) attributes {dimension_semantics = [#tpu.dimension_semantics<parallel>, #tpu.dimension_semantics<arbitrary>], iteration_bounds = array<i64: 2, 2>, scalar_prefetch = 0 : i64, scratch_operands = 2 : i64, tpu.core_type = #tpu.core_type<tc>, window_params = [{transform_indices = @transform_0, window_bounds = array<i64: 32, 128>}, {transform_indices = @transform_1, window_bounds = array<i64: 1, 32, 1>}, {transform_indices = @transform_2, window_bounds = array<i64: 1, 1, 32>}, {pipeline_mode = #tpu.pipeline_mode<synchronous>, transform_indices = @transform_3, window_bounds = array<i64: 2, 1, 128>}, {pipeline_mode = #tpu.pipeline_mode<synchronous>, transform_indices = @transform_4, window_bounds = array<i64: 2, 1, 128>}, {pipeline_mode = #tpu.pipeline_mode<synchronous>, transform_indices = @transform_5, window_bounds = array<i64: 2, 128, 384>}, {pipeline_mode = #tpu.pipeline_mode<synchronous>, transform_indices = @transform_6, window_bounds = array<i64: 2, 1, 384>}, {pipeline_mode = #tpu.pipeline_mode<synchronous>, transform_indices = @transform_7, window_bounds = array<i64: 2, 128, 128>}, {pipeline_mode = #tpu.pipeline_mode<synchronous>, transform_indices = @transform_8, window_bounds = array<i64: 2, 1, 128>}, {pipeline_mode = #tpu.pipeline_mode<synchronous>, transform_indices = @transform_9, window_bounds = array<i64: 2, 1, 128>}, {pipeline_mode = #tpu.pipeline_mode<synchronous>, transform_indices = @transform_10, window_bounds = array<i64: 2, 1, 128>}, {pipeline_mode = #tpu.pipeline_mode<synchronous>, transform_indices = @transform_11, window_bounds = array<i64: 2, 128, 256>}, {pipeline_mode = #tpu.pipeline_mode<synchronous>, transform_indices = @transform_12, window_bounds = array<i64: 2, 1, 256>}, {pipeline_mode = #tpu.pipeline_mode<synchronous>, transform_indices = @transform_13, window_bounds = array<i64: 2, 256, 128>}, {pipeline_mode = #tpu.pipeline_mode<synchronous>, transform_indices = @transform_14, window_bounds = array<i64: 2, 1, 128>}, {pipeline_mode = #tpu.pipeline_mode<synchronous>, transform_indices = @transform_15, window_bounds = array<i64: 1, 128>}, {pipeline_mode = #tpu.pipeline_mode<synchronous>, transform_indices = @transform_16, window_bounds = array<i64: 1, 128>}, {transform_indices = @transform_17, window_bounds = array<i64: 32, 128>}]} {
    %c0_i32 = arith.constant 0 : i32
    %0 = arith.cmpi eq, %arg1, %c0_i32 : i32
    %1 = arith.extui %0 : i1 to i32
    %c0_i32_0 = arith.constant 0 : i32
    %2 = arith.cmpi ne, %1, %c0_i32_0 : i32
    scf.if %2 {
      %c0_63 = arith.constant 0 : index
      %c0_64 = arith.constant 0 : index
      %198 = vector.load %arg2[%c0_63, %c0_64] : memref<32x128xf32, #tpu.memory_space<vmem>>, vector<32x128xf32>
      %c0_65 = arith.constant 0 : index
      %c0_66 = arith.constant 0 : index
      %199 = vector.load %arg20[%c0_65, %c0_66] : memref<32x128xf32, #tpu.memory_space<vmem>>, vector<32x128xf32>
      tpu.vector_store %arg20[%c0_65, %c0_66], %198 {strides = array<i32>} : memref<32x128xf32, #tpu.memory_space<vmem>>, vector<32x128xf32>,
      %c0_67 = arith.constant 0 : index
      %c0_68 = arith.constant 0 : index
      %c0_69 = arith.constant 0 : index
      %200 = vector.load %arg3[%c0_67, %c0_68, %c0_69] : memref<1x32x1xf32, #tpu.memory_space<vmem>>, vector<1x32x1xf32>
      %201 = vector.shape_cast %200 : vector<1x32x1xf32> to vector<32x1xf32>
      %c0_70 = arith.constant 0 : index
      %c0_71 = arith.constant 0 : index
      %c0_72 = arith.constant 0 : index
      %202 = vector.load %arg4[%c0_70, %c0_71, %c0_72] : memref<1x1x32xf32, #tpu.memory_space<vmem>>, vector<1x1x32xf32>
      %203 = vector.shape_cast %202 : vector<1x1x32xf32> to vector<1x32xf32>
      %204 = vector.broadcast %201 : vector<32x1xf32> to vector<32x32xf32>
      %205 = vector.broadcast %203 : vector<1x32xf32> to vector<32x32xf32>
      %206 = arith.cmpf oeq, %204, %205 : vector<32x32xf32>
      %cst_73 = arith.constant 0.000000e+00 : f32
      %cst_74 = arith.constant -1.000000e+09 : f32
      %207 = vector.broadcast %cst_73 : f32 to vector<32x32xf32>
      %208 = vector.broadcast %cst_74 : f32 to vector<32x32xf32>
      %209 = arith.select %206, %207, %208 : vector<32x32xi1>, vector<32x32xf32>
      %c0_75 = arith.constant 0 : index
      %c0_76 = arith.constant 0 : index
      %210 = vector.load %arg21[%c0_75, %c0_76] : memref<32x32xf32, #tpu.memory_space<vmem>>, vector<32x32xf32>
      tpu.vector_store %arg21[%c0_75, %c0_76], %209 {strides = array<i32>} : memref<32x32xf32, #tpu.memory_space<vmem>>, vector<32x32xf32>,
    } else {
    }
    %c0 = arith.constant 0 : index
    %c0_1 = arith.constant 0 : index
    %3 = vector.load %arg20[%c0, %c0_1] : memref<32x128xf32, #tpu.memory_space<vmem>>, vector<32x128xf32>
    %c0_2 = arith.constant 0 : index
    %c0_3 = arith.constant 0 : index
    %4 = vector.load %arg21[%c0_2, %c0_3] : memref<32x32xf32, #tpu.memory_space<vmem>>, vector<32x32xf32>
    %5 = arith.index_cast %arg1 : i32 to index
    %c0_4 = arith.constant 0 : index
    %c0_5 = arith.constant 0 : index
    %6 = vector.load %arg5[%5, %c0_4, %c0_5] : memref<2x1x128xf32, #tpu.memory_space<vmem>>, vector<1x1x128xf32>
    %7 = vector.shape_cast %6 : vector<1x1x128xf32> to vector<1x128xf32>
    %8 = arith.index_cast %arg1 : i32 to index
    %c0_6 = arith.constant 0 : index
    %c0_7 = arith.constant 0 : index
    %9 = vector.load %arg6[%8, %c0_6, %c0_7] : memref<2x1x128xf32, #tpu.memory_space<vmem>>, vector<1x1x128xf32>
    %10 = vector.shape_cast %9 : vector<1x1x128xf32> to vector<1x128xf32>
    %cst = arith.constant dense<0.000000e+00> : vector<32xf32>
    %11 = vector.multi_reduction <add>, %3, %cst [1] : vector<32x128xf32> to vector<32xf32>
    %12 = vector.shape_cast %11 : vector<32xf32> to vector<32x1xf32>
    %13 = arith.mulf %3, %3 : vector<32x128xf32>
    %cst_8 = arith.constant dense<0.000000e+00> : vector<32xf32>
    %14 = vector.multi_reduction <add>, %13, %cst_8 [1] : vector<32x128xf32> to vector<32xf32>
    %15 = vector.shape_cast %14 : vector<32xf32> to vector<32x1xf32>
    %cst_9 = arith.constant 7.812500e-03 : f32
    %16 = vector.broadcast %cst_9 : f32 to vector<32x1xf32>
    %17 = arith.mulf %12, %16 : vector<32x1xf32>
    %18 = arith.mulf %12, %17 : vector<32x1xf32>
    %19 = arith.subf %15, %18 : vector<32x1xf32>
    %cst_10 = arith.constant 0.00787401571 : f32
    %20 = vector.broadcast %cst_10 : f32 to vector<32x1xf32>
    %21 = arith.mulf %19, %20 : vector<32x1xf32>
    %cst_11 = arith.constant 0.000000e+00 : f32
    %22 = vector.broadcast %cst_11 : f32 to vector<32x1xf32>
    %23 = arith.maximumf %21, %22 : vector<32x1xf32>
    %24 = math.sqrt %23 : vector<32x1xf32>
    %cst_12 = arith.constant 9.99999997E-7 : f32
    %25 = vector.broadcast %cst_12 : f32 to vector<32x1xf32>
    %26 = arith.addf %24, %25 : vector<32x1xf32>
    %27 = tpu.reciprocal %26 {approx = true} : vector<32x1xf32> -> vector<32x1xf32>
    %28 = vector.broadcast %17 : vector<32x1xf32> to vector<32x128xf32>
    %29 = arith.subf %3, %28 : vector<32x128xf32>
    %30 = vector.broadcast %7 : vector<1x128xf32> to vector<32x128xf32>
    %31 = vector.broadcast %27 : vector<32x1xf32> to vector<32x128xf32>
    %32 = arith.mulf %30, %31 : vector<32x128xf32>
    %33 = arith.mulf %29, %32 : vector<32x128xf32>
    %34 = vector.broadcast %10 : vector<1x128xf32> to vector<32x128xf32>
    %35 = arith.addf %33, %34 : vector<32x128xf32>
    %36 = arith.truncf %35 : vector<32x128xf32> to vector<32x128xbf16>
    %37 = arith.index_cast %arg1 : i32 to index
    %c0_13 = arith.constant 0 : index
    %c0_14 = arith.constant 0 : index
    %38 = vector.load %arg7[%37, %c0_13, %c0_14] : memref<2x128x384xbf16, #tpu.memory_space<vmem>>, vector<1x128x384xbf16>
    %39 = vector.shape_cast %38 : vector<1x128x384xbf16> to vector<128x384xbf16>
    %cst_15 = arith.constant dense<0.000000e+00> : vector<32x384xf32>
    %40 = tpu.matmul %36, %39, %cst_15 {dimension_numbers = #tpu.dot_dimension_numbers<[1], [0], [0], [1], [0, 0, 1, 1], [], []>} : vector<32x128xbf16>, vector<128x384xbf16>, vector<32x384xf32> -> vector<32x384xf32>
    %41 = arith.index_cast %arg1 : i32 to index
    %c0_16 = arith.constant 0 : index
    %c0_17 = arith.constant 0 : index
    %42 = vector.load %arg8[%41, %c0_16, %c0_17] : memref<2x1x384xf32, #tpu.memory_space<vmem>>, vector<1x1x384xf32>
    %43 = vector.shape_cast %42 : vector<1x1x384xf32> to vector<1x384xf32>
    %44 = vector.broadcast %43 : vector<1x384xf32> to vector<32x384xf32>
    %45 = arith.addf %40, %44 : vector<32x384xf32>
    %46 = vector.extract_strided_slice %45 {offsets = [0, 0], sizes = [32, 32], strides = [1, 1]} : vector<32x384xf32> to vector<32x32xf32>
    %47 = arith.truncf %46 : vector<32x32xf32> to vector<32x32xbf16>
    %48 = vector.extract_strided_slice %45 {offsets = [0, 128], sizes = [32, 32], strides = [1, 1]} : vector<32x384xf32> to vector<32x32xf32>
    %49 = arith.truncf %48 : vector<32x32xf32> to vector<32x32xbf16>
    %50 = vector.extract_strided_slice %45 {offsets = [0, 256], sizes = [32, 32], strides = [1, 1]} : vector<32x384xf32> to vector<32x32xf32>
    %51 = arith.truncf %50 : vector<32x32xf32> to vector<32x32xbf16>
    "tpu.trace_start"() <{level = 10 : i32, message = "qd,kd->qk"}> : () -> ()
    %cst_18 = arith.constant dense<0.000000e+00> : vector<32x32xf32>
    %52 = tpu.matmul %47, %49, %cst_18 {dimension_numbers = #tpu.dot_dimension_numbers<[1], [1], [0], [0], [0, 0, 1, 0], [], []>} : vector<32x32xbf16>, vector<32x32xbf16>, vector<32x32xf32> -> vector<32x32xf32>
    "tpu.trace_stop"() : () -> ()
    %53 = arith.addf %52, %4 : vector<32x32xf32>
    %cst_19 = arith.constant dense<0xFF800000> : vector<32xf32>
    %54 = vector.multi_reduction <maximumf>, %53, %cst_19 [1] : vector<32x32xf32> to vector<32xf32>
    %55 = vector.shape_cast %54 : vector<32xf32> to vector<32x1xf32>
    %56 = vector.broadcast %55 : vector<32x1xf32> to vector<32x32xf32>
    %57 = arith.subf %53, %56 : vector<32x32xf32>
    %58 = math.exp %57 : vector<32x32xf32>
    %cst_20 = arith.constant dense<0.000000e+00> : vector<32xf32>
    %59 = vector.multi_reduction <add>, %58, %cst_20 [1] : vector<32x32xf32> to vector<32xf32>
    %60 = vector.shape_cast %59 : vector<32xf32> to vector<32x1xf32>
    %61 = tpu.reciprocal %60 {approx = true} : vector<32x1xf32> -> vector<32x1xf32>
    %62 = vector.broadcast %61 : vector<32x1xf32> to vector<32x32xf32>
    %63 = arith.mulf %58, %62 : vector<32x32xf32>
    %64 = arith.truncf %63 : vector<32x32xf32> to vector<32x32xbf16>
    "tpu.trace_start"() <{level = 10 : i32, message = "qk,kd->qd"}> : () -> ()
    %cst_21 = arith.constant dense<0.000000e+00> : vector<32x32xf32>
    %65 = tpu.matmul %64, %51, %cst_21 {dimension_numbers = #tpu.dot_dimension_numbers<[1], [0], [0], [1], [0, 0, 1, 1], [], []>} : vector<32x32xbf16>, vector<32x32xbf16>, vector<32x32xf32> -> vector<32x32xf32>
    "tpu.trace_stop"() : () -> ()
    %66 = vector.extract_strided_slice %45 {offsets = [0, 32], sizes = [32, 32], strides = [1, 1]} : vector<32x384xf32> to vector<32x32xf32>
    %67 = arith.truncf %66 : vector<32x32xf32> to vector<32x32xbf16>
    %68 = vector.extract_strided_slice %45 {offsets = [0, 160], sizes = [32, 32], strides = [1, 1]} : vector<32x384xf32> to vector<32x32xf32>
    %69 = arith.truncf %68 : vector<32x32xf32> to vector<32x32xbf16>
    %70 = vector.extract_strided_slice %45 {offsets = [0, 288], sizes = [32, 32], strides = [1, 1]} : vector<32x384xf32> to vector<32x32xf32>
    %71 = arith.truncf %70 : vector<32x32xf32> to vector<32x32xbf16>
    "tpu.trace_start"() <{level = 10 : i32, message = "qd,kd->qk"}> : () -> ()
    %cst_22 = arith.constant dense<0.000000e+00> : vector<32x32xf32>
    %72 = tpu.matmul %67, %69, %cst_22 {dimension_numbers = #tpu.dot_dimension_numbers<[1], [1], [0], [0], [0, 0, 1, 0], [], []>} : vector<32x32xbf16>, vector<32x32xbf16>, vector<32x32xf32> -> vector<32x32xf32>
    "tpu.trace_stop"() : () -> ()
    %73 = arith.addf %72, %4 : vector<32x32xf32>
    %cst_23 = arith.constant dense<0xFF800000> : vector<32xf32>
    %74 = vector.multi_reduction <maximumf>, %73, %cst_23 [1] : vector<32x32xf32> to vector<32xf32>
    %75 = vector.shape_cast %74 : vector<32xf32> to vector<32x1xf32>
    %76 = vector.broadcast %75 : vector<32x1xf32> to vector<32x32xf32>
    %77 = arith.subf %73, %76 : vector<32x32xf32>
    %78 = math.exp %77 : vector<32x32xf32>
    %cst_24 = arith.constant dense<0.000000e+00> : vector<32xf32>
    %79 = vector.multi_reduction <add>, %78, %cst_24 [1] : vector<32x32xf32> to vector<32xf32>
    %80 = vector.shape_cast %79 : vector<32xf32> to vector<32x1xf32>
    %81 = tpu.reciprocal %80 {approx = true} : vector<32x1xf32> -> vector<32x1xf32>
    %82 = vector.broadcast %81 : vector<32x1xf32> to vector<32x32xf32>
    %83 = arith.mulf %78, %82 : vector<32x32xf32>
    %84 = arith.truncf %83 : vector<32x32xf32> to vector<32x32xbf16>
    "tpu.trace_start"() <{level = 10 : i32, message = "qk,kd->qd"}> : () -> ()
    %cst_25 = arith.constant dense<0.000000e+00> : vector<32x32xf32>
    %85 = tpu.matmul %84, %71, %cst_25 {dimension_numbers = #tpu.dot_dimension_numbers<[1], [0], [0], [1], [0, 0, 1, 1], [], []>} : vector<32x32xbf16>, vector<32x32xbf16>, vector<32x32xf32> -> vector<32x32xf32>
    "tpu.trace_stop"() : () -> ()
    %86 = vector.extract_strided_slice %45 {offsets = [0, 64], sizes = [32, 32], strides = [1, 1]} : vector<32x384xf32> to vector<32x32xf32>
    %87 = arith.truncf %86 : vector<32x32xf32> to vector<32x32xbf16>
    %88 = vector.extract_strided_slice %45 {offsets = [0, 192], sizes = [32, 32], strides = [1, 1]} : vector<32x384xf32> to vector<32x32xf32>
    %89 = arith.truncf %88 : vector<32x32xf32> to vector<32x32xbf16>
    %90 = vector.extract_strided_slice %45 {offsets = [0, 320], sizes = [32, 32], strides = [1, 1]} : vector<32x384xf32> to vector<32x32xf32>
    %91 = arith.truncf %90 : vector<32x32xf32> to vector<32x32xbf16>
    "tpu.trace_start"() <{level = 10 : i32, message = "qd,kd->qk"}> : () -> ()
    %cst_26 = arith.constant dense<0.000000e+00> : vector<32x32xf32>
    %92 = tpu.matmul %87, %89, %cst_26 {dimension_numbers = #tpu.dot_dimension_numbers<[1], [1], [0], [0], [0, 0, 1, 0], [], []>} : vector<32x32xbf16>, vector<32x32xbf16>, vector<32x32xf32> -> vector<32x32xf32>
    "tpu.trace_stop"() : () -> ()
    %93 = arith.addf %92, %4 : vector<32x32xf32>
    %cst_27 = arith.constant dense<0xFF800000> : vector<32xf32>
    %94 = vector.multi_reduction <maximumf>, %93, %cst_27 [1] : vector<32x32xf32> to vector<32xf32>
    %95 = vector.shape_cast %94 : vector<32xf32> to vector<32x1xf32>
    %96 = vector.broadcast %95 : vector<32x1xf32> to vector<32x32xf32>
    %97 = arith.subf %93, %96 : vector<32x32xf32>
    %98 = math.exp %97 : vector<32x32xf32>
    %cst_28 = arith.constant dense<0.000000e+00> : vector<32xf32>
    %99 = vector.multi_reduction <add>, %98, %cst_28 [1] : vector<32x32xf32> to vector<32xf32>
    %100 = vector.shape_cast %99 : vector<32xf32> to vector<32x1xf32>
    %101 = tpu.reciprocal %100 {approx = true} : vector<32x1xf32> -> vector<32x1xf32>
    %102 = vector.broadcast %101 : vector<32x1xf32> to vector<32x32xf32>
    %103 = arith.mulf %98, %102 : vector<32x32xf32>
    %104 = arith.truncf %103 : vector<32x32xf32> to vector<32x32xbf16>
    "tpu.trace_start"() <{level = 10 : i32, message = "qk,kd->qd"}> : () -> ()
    %cst_29 = arith.constant dense<0.000000e+00> : vector<32x32xf32>
    %105 = tpu.matmul %104, %91, %cst_29 {dimension_numbers = #tpu.dot_dimension_numbers<[1], [0], [0], [1], [0, 0, 1, 1], [], []>} : vector<32x32xbf16>, vector<32x32xbf16>, vector<32x32xf32> -> vector<32x32xf32>
    "tpu.trace_stop"() : () -> ()
    %106 = vector.extract_strided_slice %45 {offsets = [0, 96], sizes = [32, 32], strides = [1, 1]} : vector<32x384xf32> to vector<32x32xf32>
    %107 = arith.truncf %106 : vector<32x32xf32> to vector<32x32xbf16>
    %108 = vector.extract_strided_slice %45 {offsets = [0, 224], sizes = [32, 32], strides = [1, 1]} : vector<32x384xf32> to vector<32x32xf32>
    %109 = arith.truncf %108 : vector<32x32xf32> to vector<32x32xbf16>
    %110 = vector.extract_strided_slice %45 {offsets = [0, 352], sizes = [32, 32], strides = [1, 1]} : vector<32x384xf32> to vector<32x32xf32>
    %111 = arith.truncf %110 : vector<32x32xf32> to vector<32x32xbf16>
    "tpu.trace_start"() <{level = 10 : i32, message = "qd,kd->qk"}> : () -> ()
    %cst_30 = arith.constant dense<0.000000e+00> : vector<32x32xf32>
    %112 = tpu.matmul %107, %109, %cst_30 {dimension_numbers = #tpu.dot_dimension_numbers<[1], [1], [0], [0], [0, 0, 1, 0], [], []>} : vector<32x32xbf16>, vector<32x32xbf16>, vector<32x32xf32> -> vector<32x32xf32>
    "tpu.trace_stop"() : () -> ()
    %113 = arith.addf %112, %4 : vector<32x32xf32>
    %cst_31 = arith.constant dense<0xFF800000> : vector<32xf32>
    %114 = vector.multi_reduction <maximumf>, %113, %cst_31 [1] : vector<32x32xf32> to vector<32xf32>
    %115 = vector.shape_cast %114 : vector<32xf32> to vector<32x1xf32>
    %116 = vector.broadcast %115 : vector<32x1xf32> to vector<32x32xf32>
    %117 = arith.subf %113, %116 : vector<32x32xf32>
    %118 = math.exp %117 : vector<32x32xf32>
    %cst_32 = arith.constant dense<0.000000e+00> : vector<32xf32>
    %119 = vector.multi_reduction <add>, %118, %cst_32 [1] : vector<32x32xf32> to vector<32xf32>
    %120 = vector.shape_cast %119 : vector<32xf32> to vector<32x1xf32>
    %121 = tpu.reciprocal %120 {approx = true} : vector<32x1xf32> -> vector<32x1xf32>
    %122 = vector.broadcast %121 : vector<32x1xf32> to vector<32x32xf32>
    %123 = arith.mulf %118, %122 : vector<32x32xf32>
    %124 = arith.truncf %123 : vector<32x32xf32> to vector<32x32xbf16>
    "tpu.trace_start"() <{level = 10 : i32, message = "qk,kd->qd"}> : () -> ()
    %cst_33 = arith.constant dense<0.000000e+00> : vector<32x32xf32>
    %125 = tpu.matmul %124, %111, %cst_33 {dimension_numbers = #tpu.dot_dimension_numbers<[1], [0], [0], [1], [0, 0, 1, 1], [], []>} : vector<32x32xbf16>, vector<32x32xbf16>, vector<32x32xf32> -> vector<32x32xf32>
    "tpu.trace_stop"() : () -> ()
    %126 = tpu.concatenate %65, %85, %105, %125 in 1 : vector<32x32xf32>, vector<32x32xf32>, vector<32x32xf32>, vector<32x32xf32> -> vector<32x128xf32>
    %127 = arith.truncf %126 : vector<32x128xf32> to vector<32x128xbf16>
    %128 = arith.index_cast %arg1 : i32 to index
    %c0_34 = arith.constant 0 : index
    %c0_35 = arith.constant 0 : index
    %129 = vector.load %arg9[%128, %c0_34, %c0_35] : memref<2x128x128xbf16, #tpu.memory_space<vmem>>, vector<1x128x128xbf16>
    %130 = vector.shape_cast %129 : vector<1x128x128xbf16> to vector<128x128xbf16>
    %cst_36 = arith.constant dense<0.000000e+00> : vector<32x128xf32>
    %131 = tpu.matmul %127, %130, %cst_36 {dimension_numbers = #tpu.dot_dimension_numbers<[1], [0], [0], [1], [0, 0, 1, 1], [], []>} : vector<32x128xbf16>, vector<128x128xbf16>, vector<32x128xf32> -> vector<32x128xf32>
    %132 = arith.index_cast %arg1 : i32 to index
    %c0_37 = arith.constant 0 : index
    %c0_38 = arith.constant 0 : index
    %133 = vector.load %arg10[%132, %c0_37, %c0_38] : memref<2x1x128xf32, #tpu.memory_space<vmem>>, vector<1x1x128xf32>
    %134 = vector.shape_cast %133 : vector<1x1x128xf32> to vector<1x128xf32>
    %135 = vector.broadcast %134 : vector<1x128xf32> to vector<32x128xf32>
    %136 = arith.addf %131, %135 : vector<32x128xf32>
    %137 = arith.addf %3, %136 : vector<32x128xf32>
    %138 = arith.index_cast %arg1 : i32 to index
    %c0_39 = arith.constant 0 : index
    %c0_40 = arith.constant 0 : index
    %139 = vector.load %arg11[%138, %c0_39, %c0_40] : memref<2x1x128xf32, #tpu.memory_space<vmem>>, vector<1x1x128xf32>
    %140 = vector.shape_cast %139 : vector<1x1x128xf32> to vector<1x128xf32>
    %141 = arith.index_cast %arg1 : i32 to index
    %c0_41 = arith.constant 0 : index
    %c0_42 = arith.constant 0 : index
    %142 = vector.load %arg12[%141, %c0_41, %c0_42] : memref<2x1x128xf32, #tpu.memory_space<vmem>>, vector<1x1x128xf32>
    %143 = vector.shape_cast %142 : vector<1x1x128xf32> to vector<1x128xf32>
    %cst_43 = arith.constant dense<0.000000e+00> : vector<32xf32>
    %144 = vector.multi_reduction <add>, %137, %cst_43 [1] : vector<32x128xf32> to vector<32xf32>
    %145 = vector.shape_cast %144 : vector<32xf32> to vector<32x1xf32>
    %146 = arith.mulf %137, %137 : vector<32x128xf32>
    %cst_44 = arith.constant dense<0.000000e+00> : vector<32xf32>
    %147 = vector.multi_reduction <add>, %146, %cst_44 [1] : vector<32x128xf32> to vector<32xf32>
    %148 = vector.shape_cast %147 : vector<32xf32> to vector<32x1xf32>
    %cst_45 = arith.constant 7.812500e-03 : f32
    %149 = vector.broadcast %cst_45 : f32 to vector<32x1xf32>
    %150 = arith.mulf %145, %149 : vector<32x1xf32>
    %151 = arith.mulf %145, %150 : vector<32x1xf32>
    %152 = arith.subf %148, %151 : vector<32x1xf32>
    %cst_46 = arith.constant 0.00787401571 : f32
    %153 = vector.broadcast %cst_46 : f32 to vector<32x1xf32>
    %154 = arith.mulf %152, %153 : vector<32x1xf32>
    %cst_47 = arith.constant 0.000000e+00 : f32
    %155 = vector.broadcast %cst_47 : f32 to vector<32x1xf32>
    %156 = arith.maximumf %154, %155 : vector<32x1xf32>
    %157 = math.sqrt %156 : vector<32x1xf32>
    %cst_48 = arith.constant 9.99999997E-7 : f32
    %158 = vector.broadcast %cst_48 : f32 to vector<32x1xf32>
    %159 = arith.addf %157, %158 : vector<32x1xf32>
    %160 = tpu.reciprocal %159 {approx = true} : vector<32x1xf32> -> vector<32x1xf32>
    %161 = vector.broadcast %150 : vector<32x1xf32> to vector<32x128xf32>
    %162 = arith.subf %137, %161 : vector<32x128xf32>
    %163 = vector.broadcast %140 : vector<1x128xf32> to vector<32x128xf32>
    %164 = vector.broadcast %160 : vector<32x1xf32> to vector<32x128xf32>
    %165 = arith.mulf %163, %164 : vector<32x128xf32>
    %166 = arith.mulf %162, %165 : vector<32x128xf32>
    %167 = vector.broadcast %143 : vector<1x128xf32> to vector<32x128xf32>
    %168 = arith.addf %166, %167 : vector<32x128xf32>
    %169 = arith.truncf %168 : vector<32x128xf32> to vector<32x128xbf16>
    %170 = arith.index_cast %arg1 : i32 to index
    %c0_49 = arith.constant 0 : index
    %c0_50 = arith.constant 0 : index
    %171 = vector.load %arg13[%170, %c0_49, %c0_50] : memref<2x128x256xbf16, #tpu.memory_space<vmem>>, vector<1x128x256xbf16>
    %172 = vector.shape_cast %171 : vector<1x128x256xbf16> to vector<128x256xbf16>
    %cst_51 = arith.constant dense<0.000000e+00> : vector<32x256xf32>
    %173 = tpu.matmul %169, %172, %cst_51 {dimension_numbers = #tpu.dot_dimension_numbers<[1], [0], [0], [1], [0, 0, 1, 1], [], []>} : vector<32x128xbf16>, vector<128x256xbf16>, vector<32x256xf32> -> vector<32x256xf32>
    %174 = arith.index_cast %arg1 : i32 to index
    %c0_52 = arith.constant 0 : index
    %c0_53 = arith.constant 0 : index
    %175 = vector.load %arg14[%174, %c0_52, %c0_53] : memref<2x1x256xf32, #tpu.memory_space<vmem>>, vector<1x1x256xf32>
    %176 = vector.shape_cast %175 : vector<1x1x256xf32> to vector<1x256xf32>
    %177 = vector.broadcast %176 : vector<1x256xf32> to vector<32x256xf32>
    %178 = arith.addf %173, %177 : vector<32x256xf32>
    %cst_54 = arith.constant 0.000000e+00 : f32
    %179 = vector.broadcast %cst_54 : f32 to vector<32x256xf32>
    %180 = arith.maximumf %178, %179 : vector<32x256xf32>
    %181 = arith.truncf %180 : vector<32x256xf32> to vector<32x256xbf16>
    %182 = arith.index_cast %arg1 : i32 to index
    %c0_55 = arith.constant 0 : index
    %c0_56 = arith.constant 0 : index
    %183 = vector.load %arg15[%182, %c0_55, %c0_56] : memref<2x256x128xbf16, #tpu.memory_space<vmem>>, vector<1x256x128xbf16>
    %184 = vector.shape_cast %183 : vector<1x256x128xbf16> to vector<256x128xbf16>
    %cst_57 = arith.constant dense<0.000000e+00> : vector<32x128xf32>
    %185 = tpu.matmul %181, %184, %cst_57 {dimension_numbers = #tpu.dot_dimension_numbers<[1], [0], [0], [1], [0, 0, 1, 1], [], []>} : vector<32x256xbf16>, vector<256x128xbf16>, vector<32x128xf32> -> vector<32x128xf32>
    %186 = arith.index_cast %arg1 : i32 to index
    %c0_58 = arith.constant 0 : index
    %c0_59 = arith.constant 0 : index
    %187 = vector.load %arg16[%186, %c0_58, %c0_59] : memref<2x1x128xf32, #tpu.memory_space<vmem>>, vector<1x1x128xf32>
    %188 = vector.shape_cast %187 : vector<1x1x128xf32> to vector<1x128xf32>
    %189 = vector.broadcast %188 : vector<1x128xf32> to vector<32x128xf32>
    %190 = arith.addf %185, %189 : vector<32x128xf32>
    %191 = arith.addf %137, %190 : vector<32x128xf32>
    %c1_i32 = arith.constant 1 : i32
    %192 = arith.cmpi ne, %arg1, %c1_i32 : i32
    %193 = arith.extui %192 : i1 to i32
    %c0_i32_60 = arith.constant 0 : i32
    %194 = arith.cmpi ne, %193, %c0_i32_60 : i32
    scf.if %194 {
      %c0_63 = arith.constant 0 : index
      %c0_64 = arith.constant 0 : index
      %198 = vector.load %arg20[%c0_63, %c0_64] : memref<32x128xf32, #tpu.memory_space<vmem>>, vector<32x128xf32>
      tpu.vector_store %arg20[%c0_63, %c0_64], %191 {strides = array<i32>} : memref<32x128xf32, #tpu.memory_space<vmem>>, vector<32x128xf32>,
    } else {
    }
    %c1_i32_61 = arith.constant 1 : i32
    %195 = arith.cmpi eq, %arg1, %c1_i32_61 : i32
    %196 = arith.extui %195 : i1 to i32
    %c0_i32_62 = arith.constant 0 : i32
    %197 = arith.cmpi ne, %196, %c0_i32_62 : i32
    scf.if %197 {
      %c0_63 = arith.constant 0 : index
      %c0_64 = arith.constant 0 : index
      %198 = vector.load %arg17[%c0_63, %c0_64] : memref<1x128xf32, #tpu.memory_space<vmem>>, vector<1x128xf32>
      %c0_65 = arith.constant 0 : index
      %c0_66 = arith.constant 0 : index
      %199 = vector.load %arg18[%c0_65, %c0_66] : memref<1x128xf32, #tpu.memory_space<vmem>>, vector<1x128xf32>
      %cst_67 = arith.constant dense<0.000000e+00> : vector<32xf32>
      %200 = vector.multi_reduction <add>, %191, %cst_67 [1] : vector<32x128xf32> to vector<32xf32>
      %201 = vector.shape_cast %200 : vector<32xf32> to vector<32x1xf32>
      %202 = arith.mulf %191, %191 : vector<32x128xf32>
      %cst_68 = arith.constant dense<0.000000e+00> : vector<32xf32>
      %203 = vector.multi_reduction <add>, %202, %cst_68 [1] : vector<32x128xf32> to vector<32xf32>
      %204 = vector.shape_cast %203 : vector<32xf32> to vector<32x1xf32>
      %cst_69 = arith.constant 7.812500e-03 : f32
      %205 = vector.broadcast %cst_69 : f32 to vector<32x1xf32>
      %206 = arith.mulf %201, %205 : vector<32x1xf32>
      %207 = arith.mulf %201, %206 : vector<32x1xf32>
      %208 = arith.subf %204, %207 : vector<32x1xf32>
      %cst_70 = arith.constant 0.00787401571 : f32
      %209 = vector.broadcast %cst_70 : f32 to vector<32x1xf32>
      %210 = arith.mulf %208, %209 : vector<32x1xf32>
      %cst_71 = arith.constant 0.000000e+00 : f32
      %211 = vector.broadcast %cst_71 : f32 to vector<32x1xf32>
      %212 = arith.maximumf %210, %211 : vector<32x1xf32>
      %213 = math.sqrt %212 : vector<32x1xf32>
      %cst_72 = arith.constant 9.99999997E-7 : f32
      %214 = vector.broadcast %cst_72 : f32 to vector<32x1xf32>
      %215 = arith.addf %213, %214 : vector<32x1xf32>
      %216 = tpu.reciprocal %215 {approx = true} : vector<32x1xf32> -> vector<32x1xf32>
      %217 = vector.broadcast %206 : vector<32x1xf32> to vector<32x128xf32>
      %218 = arith.subf %191, %217 : vector<32x128xf32>
      %219 = vector.broadcast %198 : vector<1x128xf32> to vector<32x128xf32>
      %220 = vector.broadcast %216 : vector<32x1xf32> to vector<32x128xf32>
      %221 = arith.mulf %219, %220 : vector<32x128xf32>
      %222 = arith.mulf %218, %221 : vector<32x128xf32>
      %223 = vector.broadcast %199 : vector<1x128xf32> to vector<32x128xf32>
      %224 = arith.addf %222, %223 : vector<32x128xf32>
      %c0_73 = arith.constant 0 : index
      %c0_74 = arith.constant 0 : index
      %225 = vector.load %arg19[%c0_73, %c0_74] : memref<32x128xf32, #tpu.memory_space<vmem>>, vector<32x128xf32>
      tpu.vector_store %arg19[%c0_73, %c0_74], %224 {strides = array<i32>} : memref<32x128xf32, #tpu.memory_space<vmem>>, vector<32x128xf32>,
    } else {
    }
    return
  }
  func.func @transform_0(%arg0: i32, %arg1: i32) -> (i32, i32) {
    %c0_i32 = arith.constant 0 : i32
    %c0_i32_0 = arith.constant 0 : i32
    return %arg0, %c0_i32 : i32, i32
  }
  func.func @transform_1(%arg0: i32, %arg1: i32) -> (i32, i32, i32) {
    %c0_i32 = arith.constant 0 : i32
    %c0_i32_0 = arith.constant 0 : i32
    %c0_i32_1 = arith.constant 0 : i32
    return %arg0, %c0_i32, %c0_i32_0 : i32, i32, i32
  }
  func.func @transform_2(%arg0: i32, %arg1: i32) -> (i32, i32, i32) {
    %c0_i32 = arith.constant 0 : i32
    %c0_i32_0 = arith.constant 0 : i32
    %c0_i32_1 = arith.constant 0 : i32
    return %arg0, %c0_i32, %c0_i32_0 : i32, i32, i32
  }
  func.func @transform_3(%arg0: i32, %arg1: i32) -> (i32, i32, i32) {
    %c0_i32 = arith.constant 0 : i32
    %c0_i32_0 = arith.constant 0 : i32
    %c0_i32_1 = arith.constant 0 : i32
    %c0_i32_2 = arith.constant 0 : i32
    return %c0_i32, %c0_i32_0, %c0_i32_1 : i32, i32, i32
  }
  func.func @transform_4(%arg0: i32, %arg1: i32) -> (i32, i32, i32) {
    %c0_i32 = arith.constant 0 : i32
    %c0_i32_0 = arith.constant 0 : i32
    %c0_i32_1 = arith.constant 0 : i32
    %c0_i32_2 = arith.constant 0 : i32
    return %c0_i32, %c0_i32_0, %c0_i32_1 : i32, i32, i32
  }
  func.func @transform_5(%arg0: i32, %arg1: i32) -> (i32, i32, i32) {
    %c0_i32 = arith.constant 0 : i32
    %c0_i32_0 = arith.constant 0 : i32
    %c0_i32_1 = arith.constant 0 : i32
    %c0_i32_2 = arith.constant 0 : i32
    return %c0_i32, %c0_i32_0, %c0_i32_1 : i32, i32, i32
  }
  func.func @transform_6(%arg0: i32, %arg1: i32) -> (i32, i32, i32) {
    %c0_i32 = arith.constant 0 : i32
    %c0_i32_0 = arith.constant 0 : i32
    %c0_i32_1 = arith.constant 0 : i32
    %c0_i32_2 = arith.constant 0 : i32
    return %c0_i32, %c0_i32_0, %c0_i32_1 : i32, i32, i32
  }
  func.func @transform_7(%arg0: i32, %arg1: i32) -> (i32, i32, i32) {
    %c0_i32 = arith.constant 0 : i32
    %c0_i32_0 = arith.constant 0 : i32
    %c0_i32_1 = arith.constant 0 : i32
    %c0_i32_2 = arith.constant 0 : i32
    return %c0_i32, %c0_i32_0, %c0_i32_1 : i32, i32, i32
  }
  func.func @transform_8(%arg0: i32, %arg1: i32) -> (i32, i32, i32) {
    %c0_i32 = arith.constant 0 : i32
    %c0_i32_0 = arith.constant 0 : i32
    %c0_i32_1 = arith.constant 0 : i32
    %c0_i32_2 = arith.constant 0 : i32
    return %c0_i32, %c0_i32_0, %c0_i32_1 : i32, i32, i32
  }
  func.func @transform_9(%arg0: i32, %arg1: i32) -> (i32, i32, i32) {
    %c0_i32 = arith.constant 0 : i32
    %c0_i32_0 = arith.constant 0 : i32
    %c0_i32_1 = arith.constant 0 : i32
    %c0_i32_2 = arith.constant 0 : i32
    return %c0_i32, %c0_i32_0, %c0_i32_1 : i32, i32, i32
  }
  func.func @transform_10(%arg0: i32, %arg1: i32) -> (i32, i32, i32) {
    %c0_i32 = arith.constant 0 : i32
    %c0_i32_0 = arith.constant 0 : i32
    %c0_i32_1 = arith.constant 0 : i32
    %c0_i32_2 = arith.constant 0 : i32
    return %c0_i32, %c0_i32_0, %c0_i32_1 : i32, i32, i32
  }
  func.func @transform_11(%arg0: i32, %arg1: i32) -> (i32, i32, i32) {
    %c0_i32 = arith.constant 0 : i32
    %c0_i32_0 = arith.constant 0 : i32
    %c0_i32_1 = arith.constant 0 : i32
    %c0_i32_2 = arith.constant 0 : i32
    return %c0_i32, %c0_i32_0, %c0_i32_1 : i32, i32, i32
  }
  func.func @transform_12(%arg0: i32, %arg1: i32) -> (i32, i32, i32) {
    %c0_i32 = arith.constant 0 : i32
    %c0_i32_0 = arith.constant 0 : i32
    %c0_i32_1 = arith.constant 0 : i32
    %c0_i32_2 = arith.constant 0 : i32
    return %c0_i32, %c0_i32_0, %c0_i32_1 : i32, i32, i32
  }
  func.func @transform_13(%arg0: i32, %arg1: i32) -> (i32, i32, i32) {
    %c0_i32 = arith.constant 0 : i32
    %c0_i32_0 = arith.constant 0 : i32
    %c0_i32_1 = arith.constant 0 : i32
    %c0_i32_2 = arith.constant 0 : i32
    return %c0_i32, %c0_i32_0, %c0_i32_1 : i32, i32, i32
  }
  func.func @transform_14(%arg0: i32, %arg1: i32) -> (i32, i32, i32) {
    %c0_i32 = arith.constant 0 : i32
    %c0_i32_0 = arith.constant 0 : i32
    %c0_i32_1 = arith.constant 0 : i32
    %c0_i32_2 = arith.constant 0 : i32
    return %c0_i32, %c0_i32_0, %c0_i32_1 : i32, i32, i32
  }
  func.func @transform_15(%arg0: i32, %arg1: i32) -> (i32, i32) {
    %c0_i32 = arith.constant 0 : i32
    %c0_i32_0 = arith.constant 0 : i32
    %c0_i32_1 = arith.constant 0 : i32
    return %c0_i32, %c0_i32_0 : i32, i32
  }
  func.func @transform_16(%arg0: i32, %arg1: i32) -> (i32, i32) {
    %c0_i32 = arith.constant 0 : i32
    %c0_i32_0 = arith.constant 0 : i32
    %c0_i32_1 = arith.constant 0 : i32
    return %c0_i32, %c0_i32_0 : i32, i32
  }
  func.func @transform_17(%arg0: i32, %arg1: i32) -> (i32, i32) {
    %c0_i32 = arith.constant 0 : i32
    %c0_i32_0 = arith.constant 0 : i32
    return %arg0, %c0_i32 : i32, i32
  }
}

</mosaic_0001>

<llo_original>
// kernel: tpu_custom_call.1
$region0: #{tpu_custom_call.1}
  #allocation0 [shape = 'u32[]', space=smem, size = 0x4, offset = 0x4, fixed_abs, tag = 'smem constant byte address 0x4 - core index']
  #allocation1 [shape = 'u32[144,128]{1,0:T(1,128)}', space=vmem, size = 0x12000, scoped, tag = 'internal scratch']
  #allocation2 [shape = 'f32[32,128]{1,0:T(8,128)}', space=vmem, size = 0x4000, scoped, tag = 'scratch operand']
  #allocation3 [shape = 'f32[32,32]{1,0:T(8,128)}', space=vmem, size = 0x4000, scoped, tag = 'scratch operand']
  %s0 = inlined_call_operand.vmem [shape: f32[64,128], index: 0, kind: input, shape index: {}]
  %s1 = inlined_call_operand.vmem [shape: f32[2,32,1], index: 1, kind: input, shape index: {}]
  %s2 = inlined_call_operand.hbm [shape: f32[2,1,32], index: 2, kind: input, shape index: {}]
  %s3 = inlined_call_operand.hbm [shape: f32[2,1,128], index: 3, kind: input, shape index: {}]
  %s4 = inlined_call_operand.hbm [shape: f32[2,1,128], index: 4, kind: input, shape index: {}]
  %s5 = inlined_call_operand.hbm [shape: bf16[2,128,384], index: 5, kind: input, shape index: {}]
  %s6 = inlined_call_operand.vmem [shape: f32[2,1,384], index: 6, kind: input, shape index: {}]
  %s7 = inlined_call_operand.hbm [shape: bf16[2,128,128], index: 7, kind: input, shape index: {}]
  %s8 = inlined_call_operand.vmem [shape: f32[2,1,128], index: 8, kind: input, shape index: {}]
  %s9 = inlined_call_operand.vmem [shape: f32[2,1,128], index: 9, kind: input, shape index: {}]
  %s10 = inlined_call_operand.vmem [shape: f32[2,1,128], index: 10, kind: input, shape index: {}]
  %s11 = inlined_call_operand.hbm [shape: bf16[2,128,256], index: 11, kind: input, shape index: {}]
  %s12 = inlined_call_operand.vmem [shape: f32[2,1,256], index: 12, kind: input, shape index: {}]
  %s13 = inlined_call_operand.hbm [shape: bf16[2,256,128], index: 13, kind: input, shape index: {}]
  %s14 = inlined_call_operand.vmem [shape: f32[2,1,128], index: 14, kind: input, shape index: {}]
  %s15 = inlined_call_operand.vmem [shape: f32[1,128], index: 15, kind: input, shape index: {}]
  %s16 = inlined_call_operand.vmem [shape: f32[1,128], index: 16, kind: input, shape index: {}]
  %s17 = inlined_call_operand.hbm [shape: f32[64,128], index: 17, kind: output, shape index: {}]
  %s18 = sld [smem:[#allocation0]]
  $region141: #{tpu_custom_call.1} parent=0
    _
  %s20 = ssub.s32 1, %s18
  %s21 = scalar_select 0, %s20, %s18
  $region1: #{tpu_custom_call.1} parent=0
    #allocation4 [shape = 'u8[1024]{0}', space=vmem, size = 0x400, scoped, tag = 'input window, operand 2']
    #allocation5 [shape = 's32[2]{0}', space=sflag, size = 0x8, scoped, tag = 'scoped memory for tpu_custom_call.1']
    #allocation6 [shape = 's32[2]{0}', space=sflag, size = 0x8, scoped, tag = 'scoped memory for tpu_custom_call.1']
    #allocation7 [shape = 'u8[1024]{0}', space=vmem, size = 0x400, scoped, tag = 'input window, operand 3, single buffered']
    #allocation8 [shape = 's32[1]{0}', space=sflag, size = 0x4, scoped, tag = 'scoped memory for tpu_custom_call.1']
    #allocation9 [shape = 'u8[1024]{0}', space=vmem, size = 0x400, scoped, tag = 'input window, operand 4, single buffered']
    #allocation10 [shape = 'u8[196608]{0}', space=vmem, size = 0x30000, scoped, tag = 'input window, operand 5, single buffered']
    #allocation11 [shape = 's32[1]{0}', space=sflag, size = 0x4, scoped, tag = 'scoped memory for tpu_custom_call.1']
    #allocation12 [shape = 'u8[65536]{0}', space=vmem, size = 0x10000, scoped, tag = 'input window, operand 7, single buffered']
    #allocation13 [shape = 'u8[131072]{0}', space=vmem, size = 0x20000, scoped, tag = 'input window, operand 11, single buffered']
    #allocation14 [shape = 's32[1]{0}', space=sflag, size = 0x4, scoped, tag = 'scoped memory for tpu_custom_call.1']
    #allocation15 [shape = 'u8[131072]{0}', space=vmem, size = 0x20000, scoped, tag = 'input window, operand 13, single buffered']
    #allocation16 [shape = 'u8[32768]{0}', space=vmem, size = 0x8000, scoped, tag = 'output window, operand 0']
    %22 = vsyncpa [#allocation5], 0
    %s23 = scalar_lea.sflag [#allocation5], 1
    %24 = vsyncpa %s23, 0
    %25 = vsyncpa [#allocation8], 0
    %26 = vsyncpa [#allocation11], 0
    %27 = vsyncpa [#allocation14], 0
    %28 = vsyncpa [#allocation6], 0
    %s29 = scalar_lea.sflag [#allocation6], 1
    %30 = vsyncpa %s29, 0
    loop: start=0, step=1, limit=6
    $region2: #{tpu_custom_call.1} parent=1 // loop_pre_header
      _
    $region3: #{tpu_custom_call.1} parent=1 // loop_header
      %s32 = sphi 0, %s36
      %p33 = scmp.ge.s32.totalorder %s32, 6
      %s39 = sphi 0, %s51
      %s40 = sphi 0, %s47
      %s41 = sphi 0, %s39
      %s42 = sphi 0, %s40
      %s43 = sphi 0, %s41
      %s44 = sphi 0, %s42
      %s54 = sphi 0, %s56
      %s57 = sphi 0, %s54
      %s58 = sphi 0, %s57
      %s74 = sphi 0, %s58
      %s80 = sphi 0, %s82
      %s83 = sphi 0, %s80
      %s84 = sphi 0, %s83
      %s100 = sphi 0, %s84
      %s106 = sphi 0, %s108
      %s109 = sphi 0, %s106
      %s110 = sphi 0, %s109
      %s126 = sphi 0, %s110
      %s130 = sphi 0, %s130
      %s132 = sphi 0, %s130
      %s133 = sphi 0, %s132
      %s147 = sphi 0, %s133
      %s151 = sphi 0, %s151
      %s153 = sphi 0, %s151
      %s154 = sphi 0, %s153
      %s168 = sphi 0, %s154
      %s172 = sphi 0, %s172
      %s174 = sphi 0, %s172
      %s175 = sphi 0, %s174
      %s189 = sphi 0, %s175
      %s193 = sphi 0, %s193
      %s195 = sphi 0, %s193
      %s196 = sphi 0, %s195
      %s210 = sphi 0, %s196
      %s214 = sphi 0, %s214
      %s216 = sphi 0, %s214
      %s217 = sphi 0, %s216
      %s231 = sphi 0, %s217
      %s235 = sphi 0, %s235
      %s237 = sphi 0, %s235
      %s238 = sphi 0, %s237
      %s252 = sphi 0, %s238
      %s256 = sphi 0, %s256
      %s258 = sphi 0, %s256
      %s259 = sphi 0, %s258
      %s273 = sphi 0, %s259
      %s277 = sphi 0, %s277
      %s279 = sphi 0, %s277
      %s280 = sphi 0, %s279
      %s294 = sphi 0, %s280
      %s298 = sphi 0, %s298
      %s300 = sphi 0, %s298
      %s301 = sphi 0, %s300
      %s315 = sphi 0, %s301
      %s319 = sphi 0, %s319
      %s321 = sphi 0, %s319
      %s322 = sphi 0, %s321
      %s336 = sphi 0, %s322
      %s340 = sphi 0, %s340
      %s342 = sphi 0, %s340
      %s343 = sphi 0, %s342
      %s357 = sphi 0, %s343
      %s361 = sphi 0, %s361
      %s363 = sphi 0, %s361
      %s364 = sphi 0, %s363
      %s378 = sphi 0, %s364
      %s382 = sphi 0, %s382
      %s384 = sphi 0, %s382
      %s385 = sphi 0, %s384
      %s399 = sphi 0, %s385
      %s403 = sphi 0, %s403
      %s405 = sphi 0, %s403
      %s406 = sphi 0, %s405
      %s420 = sphi 0, %s406
      %s426 = sphi 0, %s428
      %s429 = sphi 0, %s426
      %s430 = sphi 0, %s429
      %s446 = sphi 0, %s430
    $region4: #{tpu_custom_call.1} parent=1 // loop_header_branch
      %35 = sbr.rel (%p33) target = $region8
    $region5: #{tpu_custom_call.1} parent=1 // loop_body
      %s37 = ssub.s32 %s32, 1
      %s38 = ssub.s32 %s32, 2
      %s45 = sadd.s32 1, %s40
      %p46 = scmp.ge.s32.totalorder %s45, 2
      %s47 = scalar_select %p46, 0, %s45
      %s48 = sadd.s32 1, %s39
      %s49 = scalar_select %p46, %s48, %s39
      %p50 = scmp.ge.s32.totalorder %s49, 2
      %s51 = scalar_select %p50, 0, %s49
      %s52 = ssub.s32 %s39, %s51
      %p53 = scmp.eq.s32.totalorder %s52, 0
      %s55 = sadd.s32 %s54, 1
      %s56 = scalar_select %p53, %s54, %s55
      %p59 = pneg %p53
      %p60 = scmp.eq.s32.totalorder %s32, 3
      %p61 = por %p59, %p60
      %p62 = scmp.ne.s32.totalorder %s54, %s57
      %p63 = scmp.eq.s32.totalorder %s32, 0
      %p64 = por %p62, %p63
      %p65 = scmp.ne.s32.totalorder %s54, %s57
      %p66 = scmp.eq.s32.totalorder %s37, 3
      %p67 = por %p65, %p66
      %p68 = scmp.ne.s32.totalorder %s57, %s58
      %p69 = scmp.eq.s32.totalorder %s37, 0
      %p70 = por %p68, %p69
      %p71 = scmp.ne.s32.totalorder %s57, %s58
      %p72 = scmp.eq.s32.totalorder %s38, 3
      %p73 = por %p71, %p72
      %p75 = scmp.ne.s32.totalorder %s58, %s74
      %p76 = scmp.eq.s32.totalorder %s38, 0
      %p77 = por %p75, %p76
      %s78 = ssub.s32 %s39, %s51
      %p79 = scmp.eq.s32.totalorder %s78, 0
      %s81 = sadd.s32 %s80, 1
      %s82 = scalar_select %p79, %s80, %s81
      %p85 = pneg %p79
      %p86 = scmp.eq.s32.totalorder %s32, 3
      %p87 = por %p85, %p86
      %p88 = scmp.ne.s32.totalorder %s80, %s83
      %p89 = scmp.eq.s32.totalorder %s32, 0
      %p90 = por %p88, %p89
      %p91 = scmp.ne.s32.totalorder %s80, %s83
      %p92 = scmp.eq.s32.totalorder %s37, 3
      %p93 = por %p91, %p92
      %p94 = scmp.ne.s32.totalorder %s83, %s84
      %p95 = scmp.eq.s32.totalorder %s37, 0
      %p96 = por %p94, %p95
      %p97 = scmp.ne.s32.totalorder %s83, %s84
      %p98 = scmp.eq.s32.totalorder %s38, 3
      %p99 = por %p97, %p98
      %p101 = scmp.ne.s32.totalorder %s84, %s100
      %p102 = scmp.eq.s32.totalorder %s38, 0
      %p103 = por %p101, %p102
      %s104 = ssub.s32 %s39, %s51
      %p105 = scmp.eq.s32.totalorder %s104, 0
      %s107 = sadd.s32 %s106, 1
      %s108 = scalar_select %p105, %s106, %s107
      %p111 = pneg %p105
      %p112 = scmp.eq.s32.totalorder %s32, 3
      %p113 = por %p111, %p112
      %p114 = scmp.ne.s32.totalorder %s106, %s109
      %p115 = scmp.eq.s32.totalorder %s32, 0
      %p116 = por %p114, %p115
      %p117 = scmp.ne.s32.totalorder %s106, %s109
      %p118 = scmp.eq.s32.totalorder %s37, 3
      %p119 = por %p117, %p118
      %p120 = scmp.ne.s32.totalorder %s109, %s110
      %p121 = scmp.eq.s32.totalorder %s37, 0
      %p122 = por %p120, %p121
      %p123 = scmp.ne.s32.totalorder %s109, %s110
      %p124 = scmp.eq.s32.totalorder %s38, 3
      %p125 = por %p123, %p124
      %p127 = scmp.ne.s32.totalorder %s110, %s126
      %p128 = scmp.eq.s32.totalorder %s38, 0
      %p129 = por %p127, %p128
      %s131 = sadd.s32 %s130, 1
      %p134 = scmp.eq.s32.totalorder %s32, 3
      %p135 = scmp.ne.s32.totalorder %s130, %s132
      %p136 = scmp.eq.s32.totalorder %s32, 0
      %p137 = por %p135, %p136
      %p138 = scmp.ne.s32.totalorder %s130, %s132
      %p139 = scmp.eq.s32.totalorder %s37, 3
      %p140 = por %p138, %p139
      %p141 = scmp.ne.s32.totalorder %s132, %s133
      %p142 = scmp.eq.s32.totalorder %s37, 0
      %p143 = por %p141, %p142
      %p144 = scmp.ne.s32.totalorder %s132, %s133
      %p145 = scmp.eq.s32.totalorder %s38, 3
      %p146 = por %p144, %p145
      %p148 = scmp.ne.s32.totalorder %s133, %s147
      %p149 = scmp.eq.s32.totalorder %s38, 0
      %p150 = por %p148, %p149
      %s152 = sadd.s32 %s151, 1
      %p155 = scmp.eq.s32.totalorder %s32, 3
      %p156 = scmp.ne.s32.totalorder %s151, %s153
      %p157 = scmp.eq.s32.totalorder %s32, 0
      %p158 = por %p156, %p157
      %p159 = scmp.ne.s32.totalorder %s151, %s153
      %p160 = scmp.eq.s32.totalorder %s37, 3
      %p161 = por %p159, %p160
      %p162 = scmp.ne.s32.totalorder %s153, %s154
      %p163 = scmp.eq.s32.totalorder %s37, 0
      %p164 = por %p162, %p163
      %p165 = scmp.ne.s32.totalorder %s153, %s154
      %p166 = scmp.eq.s32.totalorder %s38, 3
      %p167 = por %p165, %p166
      %p169 = scmp.ne.s32.totalorder %s154, %s168
      %p170 = scmp.eq.s32.totalorder %s38, 0
      %p171 = por %p169, %p170
      %s173 = sadd.s32 %s172, 1
      %p176 = scmp.eq.s32.totalorder %s32, 3
      %p177 = scmp.ne.s32.totalorder %s172, %s174
      %p178 = scmp.eq.s32.totalorder %s32, 0
      %p179 = por %p177, %p178
      %p180 = scmp.ne.s32.totalorder %s172, %s174
      %p181 = scmp.eq.s32.totalorder %s37, 3
      %p182 = por %p180, %p181
      %p183 = scmp.ne.s32.totalorder %s174, %s175
      %p184 = scmp.eq.s32.totalorder %s37, 0
      %p185 = por %p183, %p184
      %p186 = scmp.ne.s32.totalorder %s174, %s175
      %p187 = scmp.eq.s32.totalorder %s38, 3
      %p188 = por %p186, %p187
      %p190 = scmp.ne.s32.totalorder %s175, %s189
      %p191 = scmp.eq.s32.totalorder %s38, 0
      %p192 = por %p190, %p191
      %s194 = sadd.s32 %s193, 1
      %p197 = scmp.eq.s32.totalorder %s32, 3
      %p198 = scmp.ne.s32.totalorder %s193, %s195
      %p199 = scmp.eq.s32.totalorder %s32, 0
      %p200 = por %p198, %p199
      %p201 = scmp.ne.s32.totalorder %s193, %s195
      %p202 = scmp.eq.s32.totalorder %s37, 3
      %p203 = por %p201, %p202
      %p204 = scmp.ne.s32.totalorder %s195, %s196
      %p205 = scmp.eq.s32.totalorder %s37, 0
      %p206 = por %p204, %p205
      %p207 = scmp.ne.s32.totalorder %s195, %s196
      %p208 = scmp.eq.s32.totalorder %s38, 3
      %p209 = por %p207, %p208
      %p211 = scmp.ne.s32.totalorder %s196, %s210
      %p212 = scmp.eq.s32.totalorder %s38, 0
      %p213 = por %p211, %p212
      %s215 = sadd.s32 %s214, 1
      %p218 = scmp.eq.s32.totalorder %s32, 3
      %p219 = scmp.ne.s32.totalorder %s214, %s216
      %p220 = scmp.eq.s32.totalorder %s32, 0
      %p221 = por %p219, %p220
      %p222 = scmp.ne.s32.totalorder %s214, %s216
      %p223 = scmp.eq.s32.totalorder %s37, 3
      %p224 = por %p222, %p223
      %p225 = scmp.ne.s32.totalorder %s216, %s217
      %p226 = scmp.eq.s32.totalorder %s37, 0
      %p227 = por %p225, %p226
      %p228 = scmp.ne.s32.totalorder %s216, %s217
      %p229 = scmp.eq.s32.totalorder %s38, 3
      %p230 = por %p228, %p229
      %p232 = scmp.ne.s32.totalorder %s217, %s231
      %p233 = scmp.eq.s32.totalorder %s38, 0
      %p234 = por %p232, %p233
      %s236 = sadd.s32 %s235, 1
      %p239 = scmp.eq.s32.totalorder %s32, 3
      %p240 = scmp.ne.s32.totalorder %s235, %s237
      %p241 = scmp.eq.s32.totalorder %s32, 0
      %p242 = por %p240, %p241
      %p243 = scmp.ne.s32.totalorder %s235, %s237
      %p244 = scmp.eq.s32.totalorder %s37, 3
      %p245 = por %p243, %p244
      %p246 = scmp.ne.s32.totalorder %s237, %s238
      %p247 = scmp.eq.s32.totalorder %s37, 0
      %p248 = por %p246, %p247
      %p249 = scmp.ne.s32.totalorder %s237, %s238
      %p250 = scmp.eq.s32.totalorder %s38, 3
      %p251 = por %p249, %p250
      %p253 = scmp.ne.s32.totalorder %s238, %s252
      %p254 = scmp.eq.s32.totalorder %s38, 0
      %p255 = por %p253, %p254
      %s257 = sadd.s32 %s256, 1
      %p260 = scmp.eq.s32.totalorder %s32, 3
      %p261 = scmp.ne.s32.totalorder %s256, %s258
      %p262 = scmp.eq.s32.totalorder %s32, 0
      %p263 = por %p261, %p262
      %p264 = scmp.ne.s32.totalorder %s256, %s258
      %p265 = scmp.eq.s32.totalorder %s37, 3
      %p266 = por %p264, %p265
      %p267 = scmp.ne.s32.totalorder %s258, %s259
      %p268 = scmp.eq.s32.totalorder %s37, 0
      %p269 = por %p267, %p268
      %p270 = scmp.ne.s32.totalorder %s258, %s259
      %p271 = scmp.eq.s32.totalorder %s38, 3
      %p272 = por %p270, %p271
      %p274 = scmp.ne.s32.totalorder %s259, %s273
      %p275 = scmp.eq.s32.totalorder %s38, 0
      %p276 = por %p274, %p275
      %s278 = sadd.s32 %s277, 1
      %p281 = scmp.eq.s32.totalorder %s32, 3
      %p282 = scmp.ne.s32.totalorder %s277, %s279
      %p283 = scmp.eq.s32.totalorder %s32, 0
      %p284 = por %p282, %p283
      %p285 = scmp.ne.s32.totalorder %s277, %s279
      %p286 = scmp.eq.s32.totalorder %s37, 3
      %p287 = por %p285, %p286
      %p288 = scmp.ne.s32.totalorder %s279, %s280
      %p289 = scmp.eq.s32.totalorder %s37, 0
      %p290 = por %p288, %p289
      %p291 = scmp.ne.s32.totalorder %s279, %s280
      %p292 = scmp.eq.s32.totalorder %s38, 3
      %p293 = por %p291, %p292
      %p295 = scmp.ne.s32.totalorder %s280, %s294
      %p296 = scmp.eq.s32.totalorder %s38, 0
      %p297 = por %p295, %p296
      %s299 = sadd.s32 %s298, 1
      %p302 = scmp.eq.s32.totalorder %s32, 3
      %p303 = scmp.ne.s32.totalorder %s298, %s300
      %p304 = scmp.eq.s32.totalorder %s32, 0
      %p305 = por %p303, %p304
      %p306 = scmp.ne.s32.totalorder %s298, %s300
      %p307 = scmp.eq.s32.totalorder %s37, 3
      %p308 = por %p306, %p307
      %p309 = scmp.ne.s32.totalorder %s300, %s301
      %p310 = scmp.eq.s32.totalorder %s37, 0
      %p311 = por %p309, %p310
      %p312 = scmp.ne.s32.totalorder %s300, %s301
      %p313 = scmp.eq.s32.totalorder %s38, 3
      %p314 = por %p312, %p313
      %p316 = scmp.ne.s32.totalorder %s301, %s315
      %p317 = scmp.eq.s32.totalorder %s38, 0
      %p318 = por %p316, %p317
      %s320 = sadd.s32 %s319, 1
      %p323 = scmp.eq.s32.totalorder %s32, 3
      %p324 = scmp.ne.s32.totalorder %s319, %s321
      %p325 = scmp.eq.s32.totalorder %s32, 0
      %p326 = por %p324, %p325
      %p327 = scmp.ne.s32.totalorder %s319, %s321
      %p328 = scmp.eq.s32.totalorder %s37, 3
      %p329 = por %p327, %p328
      %p330 = scmp.ne.s32.totalorder %s321, %s322
      %p331 = scmp.eq.s32.totalorder %s37, 0
      %p332 = por %p330, %p331
      %p333 = scmp.ne.s32.totalorder %s321, %s322
      %p334 = scmp.eq.s32.totalorder %s38, 3
      %p335 = por %p333, %p334
      %p337 = scmp.ne.s32.totalorder %s322, %s336
      %p338 = scmp.eq.s32.totalorder %s38, 0
      %p339 = por %p337, %p338
      %s341 = sadd.s32 %s340, 1
      %p344 = scmp.eq.s32.totalorder %s32, 3
      %p345 = scmp.ne.s32.totalorder %s340, %s342
      %p346 = scmp.eq.s32.totalorder %s32, 0
      %p347 = por %p345, %p346
      %p348 = scmp.ne.s32.totalorder %s340, %s342
      %p349 = scmp.eq.s32.totalorder %s37, 3
      %p350 = por %p348, %p349
      %p351 = scmp.ne.s32.totalorder %s342, %s343
      %p352 = scmp.eq.s32.totalorder %s37, 0
      %p353 = por %p351, %p352
      %p354 = scmp.ne.s32.totalorder %s342, %s343
      %p355 = scmp.eq.s32.totalorder %s38, 3
      %p356 = por %p354, %p355
      %p358 = scmp.ne.s32.totalorder %s343, %s357
      %p359 = scmp.eq.s32.totalorder %s38, 0
      %p360 = por %p358, %p359
      %s362 = sadd.s32 %s361, 1
      %p365 = scmp.eq.s32.totalorder %s32, 3
      %p366 = scmp.ne.s32.totalorder %s361, %s363
      %p367 = scmp.eq.s32.totalorder %s32, 0
      %p368 = por %p366, %p367
      %p369 = scmp.ne.s32.totalorder %s361, %s363
      %p370 = scmp.eq.s32.totalorder %s37, 3
      %p371 = por %p369, %p370
      %p372 = scmp.ne.s32.totalorder %s363, %s364
      %p373 = scmp.eq.s32.totalorder %s37, 0
      %p374 = por %p372, %p373
      %p375 = scmp.ne.s32.totalorder %s363, %s364
      %p376 = scmp.eq.s32.totalorder %s38, 3
      %p377 = por %p375, %p376
      %p379 = scmp.ne.s32.totalorder %s364, %s378
      %p380 = scmp.eq.s32.totalorder %s38, 0
      %p381 = por %p379, %p380
      %s383 = sadd.s32 %s382, 1
      %p386 = scmp.eq.s32.totalorder %s32, 3
      %p387 = scmp.ne.s32.totalorder %s382, %s384
      %p388 = scmp.eq.s32.totalorder %s32, 0
      %p389 = por %p387, %p388
      %p390 = scmp.ne.s32.totalorder %s382, %s384
      %p391 = scmp.eq.s32.totalorder %s37, 3
      %p392 = por %p390, %p391
      %p393 = scmp.ne.s32.totalorder %s384, %s385
      %p394 = scmp.eq.s32.totalorder %s37, 0
      %p395 = por %p393, %p394
      %p396 = scmp.ne.s32.totalorder %s384, %s385
      %p397 = scmp.eq.s32.totalorder %s38, 3
      %p398 = por %p396, %p397
      %p400 = scmp.ne.s32.totalorder %s385, %s399
      %p401 = scmp.eq.s32.totalorder %s38, 0
      %p402 = por %p400, %p401
      %s404 = sadd.s32 %s403, 1
      %p407 = scmp.eq.s32.totalorder %s32, 3
      %p408 = scmp.ne.s32.totalorder %s403, %s405
      %p409 = scmp.eq.s32.totalorder %s32, 0
      %p410 = por %p408, %p409
      %p411 = scmp.ne.s32.totalorder %s403, %s405
      %p412 = scmp.eq.s32.totalorder %s37, 3
      %p413 = por %p411, %p412
      %p414 = scmp.ne.s32.totalorder %s405, %s406
      %p415 = scmp.eq.s32.totalorder %s37, 0
      %p416 = por %p414, %p415
      %p417 = scmp.ne.s32.totalorder %s405, %s406
      %p418 = scmp.eq.s32.totalorder %s38, 3
      %p419 = por %p417, %p418
      %p421 = scmp.ne.s32.totalorder %s406, %s420
      %p422 = scmp.eq.s32.totalorder %s38, 0
      %p423 = por %p421, %p422
      %s424 = ssub.s32 %s39, %s51
      %p425 = scmp.eq.s32.totalorder %s424, 0
      %s427 = sadd.s32 %s426, 1
      %s428 = scalar_select %p425, %s426, %s427
      %p431 = pneg %p425
      %p432 = scmp.eq.s32.totalorder %s32, 3
      %p433 = por %p431, %p432
      %p434 = scmp.ne.s32.totalorder %s426, %s429
      %p435 = scmp.eq.s32.totalorder %s32, 0
      %p436 = por %p434, %p435
      %p437 = scmp.ne.s32.totalorder %s426, %s429
      %p438 = scmp.eq.s32.totalorder %s37, 3
      %p439 = por %p437, %p438
      %p440 = scmp.ne.s32.totalorder %s429, %s430
      %p441 = scmp.eq.s32.totalorder %s37, 0
      %p442 = por %p440, %p441
      %p443 = scmp.ne.s32.totalorder %s429, %s430
      %p444 = scmp.eq.s32.totalorder %s38, 3
      %p445 = por %p443, %p444
      %p447 = scmp.ne.s32.totalorder %s430, %s446
      %p448 = scmp.eq.s32.totalorder %s38, 0
      %p449 = por %p447, %p448
      %p450 = scmp.le.s32.totalorder 1, %s32
      %p451 = scmp.lt.s32.totalorder %s32, 5
      %p452 = pnand %p450, %p451
      %p453 = pneg %p452
      // Predicated region
      $region9: #{tpu_custom_call.1} parent=5 // pred_check
        _
      $region10: #{tpu_custom_call.1} parent=5 // pred_check_branch
        %455 = sbr.rel (%p452) target = $region12
      $region11: #{tpu_custom_call.1} parent=5 // pred_region
        %s456 = ssub.s32 %s32, 1
        // Predicated region
        $region13: #{tpu_custom_call.1} parent=11 // pred_check
          %p457 = pneg %p143
        $region14: #{tpu_custom_call.1} parent=11 // pred_check_branch
          %459 = sbr.rel (%p457) target = $region16
        $region15: #{tpu_custom_call.1} parent=11 // pred_region
          %s461 = ssub.s32 32, 32
          %462 = vsyncadd [#allocation8], %s461
          %s463 = sshll.u32 [#allocation7], 4
          %s464 = int_to_ptr.vmem [resolvable:$true] %s463
          %469 = dma.hbm_to_vmem [thread:$0]  %s3, 32, %s464, [#allocation8], 16, 16, 1
        $region16: #{tpu_custom_call.1} parent=11 // pred_fallthru
          _
        // Predicated region
        $region17: #{tpu_custom_call.1} parent=11 // pred_check
          %p470 = pneg %p164
        $region18: #{tpu_custom_call.1} parent=11 // pred_check_branch
          %472 = sbr.rel (%p470) target = $region20
        $region19: #{tpu_custom_call.1} parent=11 // pred_region
          %s474 = ssub.s32 32, 32
          %475 = vsyncadd [#allocation8], %s474
          %s476 = sshll.u32 [#allocation9], 4
          %s477 = int_to_ptr.vmem [resolvable:$true] %s476
          %482 = dma.hbm_to_vmem [thread:$0]  %s4, 32, %s477, [#allocation8], 16, 16, 1
        $region20: #{tpu_custom_call.1} parent=11 // pred_fallthru
          _
        // Predicated region
        $region21: #{tpu_custom_call.1} parent=11 // pred_check
          %p483 = pneg %p185
        $region22: #{tpu_custom_call.1} parent=11 // pred_check_branch
          %485 = sbr.rel (%p483) target = $region24
        $region23: #{tpu_custom_call.1} parent=11 // pred_region
          %s487 = ssub.s32 6144, 6144
          %488 = vsyncadd [#allocation11], %s487
          %s489 = sshll.u32 [#allocation10], 4
          %s490 = int_to_ptr.vmem [resolvable:$true] %s489
          %495 = dma.hbm_to_vmem [thread:$0]  %s5, 6144, %s490, [#allocation11], 192, 192, 12
        $region24: #{tpu_custom_call.1} parent=11 // pred_fallthru
          _
        // Predicated region
        $region25: #{tpu_custom_call.1} parent=11 // pred_check
          %p496 = pneg %p206
        $region26: #{tpu_custom_call.1} parent=11 // pred_check_branch
          %498 = sbr.rel (%p496) target = $region28
        $region27: #{tpu_custom_call.1} parent=11 // pred_region
          _
        $region28: #{tpu_custom_call.1} parent=11 // pred_fallthru
          _
        // Predicated region
        $region29: #{tpu_custom_call.1} parent=11 // pred_check
          %p499 = pneg %p227
        $region30: #{tpu_custom_call.1} parent=11 // pred_check_branch
          %501 = sbr.rel (%p499) target = $region32
        $region31: #{tpu_custom_call.1} parent=11 // pred_region
          %s503 = ssub.s32 2048, 2048
          %504 = vsyncadd [#allocation11], %s503
          %s505 = sshll.u32 [#allocation12], 4
          %s506 = int_to_ptr.vmem [resolvable:$true] %s505
          %511 = dma.hbm_to_vmem [thread:$0]  %s7, 2048, %s506, [#allocation11], 64, 64, 4
        $region32: #{tpu_custom_call.1} parent=11 // pred_fallthru
          _
        // Predicated region
        $region33: #{tpu_custom_call.1} parent=11 // pred_check
          %p512 = pneg %p248
        $region34: #{tpu_custom_call.1} parent=11 // pred_check_branch
          %514 = sbr.rel (%p512) target = $region36
        $region35: #{tpu_custom_call.1} parent=11 // pred_region
          _
        $region36: #{tpu_custom_call.1} parent=11 // pred_fallthru
          _
        // Predicated region
        $region37: #{tpu_custom_call.1} parent=11 // pred_check
          %p515 = pneg %p269
        $region38: #{tpu_custom_call.1} parent=11 // pred_check_branch
          %517 = sbr.rel (%p515) target = $region40
        $region39: #{tpu_custom_call.1} parent=11 // pred_region
          _
        $region40: #{tpu_custom_call.1} parent=11 // pred_fallthru
          _
        // Predicated region
        $region41: #{tpu_custom_call.1} parent=11 // pred_check
          %p518 = pneg %p290
        $region42: #{tpu_custom_call.1} parent=11 // pred_check_branch
          %520 = sbr.rel (%p518) target = $region44
        $region43: #{tpu_custom_call.1} parent=11 // pred_region
          _
        $region44: #{tpu_custom_call.1} parent=11 // pred_fallthru
          _
        // Predicated region
        $region45: #{tpu_custom_call.1} parent=11 // pred_check
          %p521 = pneg %p311
        $region46: #{tpu_custom_call.1} parent=11 // pred_check_branch
          %523 = sbr.rel (%p521) target = $region48
        $region47: #{tpu_custom_call.1} parent=11 // pred_region
          %s525 = ssub.s32 4096, 4096
          %526 = vsyncadd [#allocation14], %s525
          %s527 = sshll.u32 [#allocation13], 4
          %s528 = int_to_ptr.vmem [resolvable:$true] %s527
          %533 = dma.hbm_to_vmem [thread:$0]  %s11, 4096, %s528, [#allocation14], 128, 128, 8
        $region48: #{tpu_custom_call.1} parent=11 // pred_fallthru
          _
        // Predicated region
        $region49: #{tpu_custom_call.1} parent=11 // pred_check
          %p534 = pneg %p332
        $region50: #{tpu_custom_call.1} parent=11 // pred_check_branch
          %536 = sbr.rel (%p534) target = $region52
        $region51: #{tpu_custom_call.1} parent=11 // pred_region
          _
        $region52: #{tpu_custom_call.1} parent=11 // pred_fallthru
          _
        // Predicated region
        $region53: #{tpu_custom_call.1} parent=11 // pred_check
          %p537 = pneg %p353
        $region54: #{tpu_custom_call.1} parent=11 // pred_check_branch
          %539 = sbr.rel (%p537) target = $region56
        $region55: #{tpu_custom_call.1} parent=11 // pred_region
          %s541 = ssub.s32 4096, 4096
          %542 = vsyncadd [#allocation14], %s541
          %s543 = sshll.u32 [#allocation15], 4
          %s544 = int_to_ptr.vmem [resolvable:$true] %s543
          %549 = dma.hbm_to_vmem [thread:$0]  %s13, 4096, %s544, [#allocation14], 64, 64, 4
        $region56: #{tpu_custom_call.1} parent=11 // pred_fallthru
          _
        // Predicated region
        $region57: #{tpu_custom_call.1} parent=11 // pred_check
          %p550 = pneg %p374
        $region58: #{tpu_custom_call.1} parent=11 // pred_check_branch
          %552 = sbr.rel (%p550) target = $region60
        $region59: #{tpu_custom_call.1} parent=11 // pred_region
          _
        $region60: #{tpu_custom_call.1} parent=11 // pred_fallthru
          _
        // Predicated region
        $region61: #{tpu_custom_call.1} parent=11 // pred_check
          %p553 = pneg %p395
        $region62: #{tpu_custom_call.1} parent=11 // pred_check_branch
          %555 = sbr.rel (%p553) target = $region64
        $region63: #{tpu_custom_call.1} parent=11 // pred_region
          _
        $region64: #{tpu_custom_call.1} parent=11 // pred_fallthru
          _
        // Predicated region
        $region65: #{tpu_custom_call.1} parent=11 // pred_check
          %p556 = pneg %p416
        $region66: #{tpu_custom_call.1} parent=11 // pred_check_branch
          %558 = sbr.rel (%p556) target = $region68
        $region67: #{tpu_custom_call.1} parent=11 // pred_region
          _
        $region68: #{tpu_custom_call.1} parent=11 // pred_fallthru
          _
      $region12: #{tpu_custom_call.1} parent=5 // pred_fallthru
        _
      %p559 = scmp.lt.s32.totalorder %s32, 4
      // Predicated region
      $region69: #{tpu_custom_call.1} parent=5 // pred_check
        %p560 = pneg %p559
      $region70: #{tpu_custom_call.1} parent=5 // pred_check_branch
        %562 = sbr.rel (%p560) target = $region72
      $region71: #{tpu_custom_call.1} parent=5 // pred_region
        // Predicated region
        $region73: #{tpu_custom_call.1} parent=71 // pred_check
          %p563 = pneg %p64
        $region74: #{tpu_custom_call.1} parent=71 // pred_check_branch
          %565 = sbr.rel (%p563) target = $region76
        $region75: #{tpu_custom_call.1} parent=71 // pred_region
          %s566 = smul.u32 4, %s39
          %p567 = scmp.lt.s32.totalorder %s566, 7
          %s568 = scalar_select %p567, %s566, 7
          %s569 = smul.addr %s568, 8
          %s570 = scalar_lea.vmem %s0, %s569
          %s571 = smul.u32 4, %s39
        $region76: #{tpu_custom_call.1} parent=71 // pred_fallthru
          _
        // Predicated region
        $region77: #{tpu_custom_call.1} parent=71 // pred_check
          %p572 = pneg %p90
        $region78: #{tpu_custom_call.1} parent=71 // pred_check_branch
          %574 = sbr.rel (%p572) target = $region80
        $region79: #{tpu_custom_call.1} parent=71 // pred_region
          %p575 = scmp.lt.s32.totalorder %s39, 1
          %s576 = scalar_select %p575, %s39, 1
          %s577 = smul.addr %s576, 4
          %s578 = smul.addr %s577, 8
          %s579 = scalar_lea.vmem %s1, %s578
        $region80: #{tpu_custom_call.1} parent=71 // pred_fallthru
          _
        // Predicated region
        $region81: #{tpu_custom_call.1} parent=71 // pred_check
          %p580 = pneg %p116
        $region82: #{tpu_custom_call.1} parent=71 // pred_check_branch
          %582 = sbr.rel (%p580) target = $region84
        $region83: #{tpu_custom_call.1} parent=71 // pred_region
          %s583 = sand.u32 %s106, 1
          %s584 = scalar_lea.sflag [#allocation5], %s583
          %s585 = sand.u32 %s106, 1
          %s586 = scalar_lea.vmem [#allocation4], %s585
          %s588 = ssub.s32 16, 16
          %589 = vsyncadd %s584, %s588
          %s590 = smul.addr %s39, 16
          %s591 = scalar_lea.hbm %s2, %s590
          %s593 = sshll.u32 %s586, 4
          %s594 = int_to_ptr.vmem [resolvable:$true] %s593
          %596 = dma.hbm_to_vmem [thread:$0]  %s591, 16, %s594, %s584
        $region84: #{tpu_custom_call.1} parent=71 // pred_fallthru
          _
      $region72: #{tpu_custom_call.1} parent=5 // pred_fallthru
        _
      %p597 = scmp.le.s32.totalorder 1, %s32
      %p598 = scmp.lt.s32.totalorder %s32, 5
      %p599 = pnand %p597, %p598
      %p600 = pneg %p599
      // Predicated region
      $region85: #{tpu_custom_call.1} parent=5 // pred_check
        _
      $region86: #{tpu_custom_call.1} parent=5 // pred_check_branch
        %602 = sbr.rel (%p599) target = $region88
      $region87: #{tpu_custom_call.1} parent=5 // pred_region
        %s603 = ssub.s32 %s32, 1
        %s604 = sand.u32 %s109, 1
        %s605 = scalar_lea.sflag [#allocation5], %s604
        %s606 = sand.u32 %s109, 1
        %s607 = scalar_lea.vmem [#allocation4], %s606
        // Predicated region
        $region89: #{tpu_custom_call.1} parent=87 // pred_check
          %p608 = pneg %p122
        $region90: #{tpu_custom_call.1} parent=87 // pred_check_branch
          %610 = sbr.rel (%p608) target = $region92
        $region91: #{tpu_custom_call.1} parent=87 // pred_region
          %611 = dma.done %s605, 16
        $region92: #{tpu_custom_call.1} parent=87 // pred_fallthru
          _
        // Predicated region
        $region93: #{tpu_custom_call.1} parent=87 // pred_check
          %p612 = pneg %p143
        $region94: #{tpu_custom_call.1} parent=87 // pred_check_branch
          %614 = sbr.rel (%p612) target = $region96
        $region95: #{tpu_custom_call.1} parent=87 // pred_region
          %615 = dma.done [#allocation8], 32
        $region96: #{tpu_custom_call.1} parent=87 // pred_fallthru
          _
        // Predicated region
        $region97: #{tpu_custom_call.1} parent=87 // pred_check
          %p616 = pneg %p164
        $region98: #{tpu_custom_call.1} parent=87 // pred_check_branch
          %618 = sbr.rel (%p616) target = $region100
        $region99: #{tpu_custom_call.1} parent=87 // pred_region
          %619 = dma.done [#allocation8], 32
        $region100: #{tpu_custom_call.1} parent=87 // pred_fallthru
          _
        // Predicated region
        $region101: #{tpu_custom_call.1} parent=87 // pred_check
          %p620 = pneg %p185
        $region102: #{tpu_custom_call.1} parent=87 // pred_check_branch
          %622 = sbr.rel (%p620) target = $region104
        $region103: #{tpu_custom_call.1} parent=87 // pred_region
          %623 = dma.done [#allocation11], 6144
        $region104: #{tpu_custom_call.1} parent=87 // pred_fallthru
          _
        // Predicated region
        $region105: #{tpu_custom_call.1} parent=87 // pred_check
          %p624 = pneg %p227
        $region106: #{tpu_custom_call.1} parent=87 // pred_check_branch
          %626 = sbr.rel (%p624) target = $region108
        $region107: #{tpu_custom_call.1} parent=87 // pred_region
          %627 = dma.done [#allocation11], 2048
        $region108: #{tpu_custom_call.1} parent=87 // pred_fallthru
          _
        // Predicated region
        $region109: #{tpu_custom_call.1} parent=87 // pred_check
          %p628 = pneg %p311
        $region110: #{tpu_custom_call.1} parent=87 // pred_check_branch
          %630 = sbr.rel (%p628) target = $region112
        $region111: #{tpu_custom_call.1} parent=87 // pred_region
          %631 = dma.done [#allocation14], 4096
        $region112: #{tpu_custom_call.1} parent=87 // pred_fallthru
          _
        // Predicated region
        $region113: #{tpu_custom_call.1} parent=87 // pred_check
          %p632 = pneg %p353
        $region114: #{tpu_custom_call.1} parent=87 // pred_check_branch
          %634 = sbr.rel (%p632) target = $region116
        $region115: #{tpu_custom_call.1} parent=87 // pred_region
          %635 = dma.done [#allocation14], 4096
        $region116: #{tpu_custom_call.1} parent=87 // pred_fallthru
          _
        %s636 = smul.u32 4, %s41
        %p637 = scmp.lt.s32.totalorder %s636, 7
        %s638 = scalar_select %p637, %s636, 7
        %s639 = smul.addr %s638, 8
        %s640 = scalar_lea.vmem %s0, %s639
        %p641 = pneg %p70
        %p642 = pneg %p67
        %p643 = scmp.lt.s32.totalorder %s41, 1
        %s644 = scalar_select %p643, %s41, 1
        %s645 = smul.addr %s644, 4
        %s646 = smul.addr %s645, 8
        %s647 = scalar_lea.vmem %s1, %s646
        %p648 = pneg %p96
        %p649 = pneg %p93
        %s650 = sand.u32 %s109, 1
        %s651 = scalar_lea.sflag [#allocation5], %s650
        %s652 = sand.u32 %s109, 1
        %s653 = scalar_lea.vmem [#allocation4], %s652
        %p654 = pneg %p122
        %p655 = pneg %p119
        %p656 = pneg %p143
        %p657 = pneg %p140
        %p658 = pneg %p164
        %p659 = pneg %p161
        %p660 = pneg %p185
        %p661 = pneg %p182
        %p662 = pneg %p206
        %p663 = pneg %p203
        %p664 = pneg %p227
        %p665 = pneg %p224
        %p666 = pneg %p248
        %p667 = pneg %p245
        %p668 = pneg %p269
        %p669 = pneg %p266
        %p670 = pneg %p290
        %p671 = pneg %p287
        %p672 = pneg %p311
        %p673 = pneg %p308
        %p674 = pneg %p332
        %p675 = pneg %p329
        %p676 = pneg %p353
        %p677 = pneg %p350
        %p678 = pneg %p374
        %p679 = pneg %p371
        %p680 = pneg %p395
        %p681 = pneg %p392
        %p682 = pneg %p416
        %p683 = pneg %p413
        %p684 = pneg %p442
        %p685 = pneg %p439
        %s686 = sand.u32 %s429, 1
        %s687 = scalar_lea.sflag [#allocation6], %s686
        %s688 = sand.u32 %s429, 1
        %s689 = smul.addr %s688, 32
        %s690 = scalar_lea.vmem [#allocation16], %s689
        %s691 = smul.u32 4, %s41
        %p692 = scmp.lt.s32.totalorder %s691, 7
        %s693 = scalar_select %p692, %s691, 7
        %s694 = smul.addr %s693, 8
        %s695 = scalar_lea.vmem %s0, %s694
        %s696 = smul.u32 4, %s41
        %p697 = scmp.lt.s32.totalorder %s41, 1
        %s698 = scalar_select %p697, %s41, 1
        %s699 = smul.addr %s698, 4
        %s700 = smul.addr %s699, 8
        %s701 = scalar_lea.vmem %s1, %s700
        %s702 = smul.u32 4, %s41
        %p704 = scmp.eq.s32.totalorder %s42, 0
        // Predicated region
        $region117: #{tpu_custom_call.1} parent=87 // pred_check
          %p705 = pneg %p704
        $region118: #{tpu_custom_call.1} parent=87 // pred_check_branch
          %707 = sbr.rel (%p705) target = $region120
        $region119: #{tpu_custom_call.1} parent=87 // pred_region
          %v708 = vld [vmem:[%s695] sm:$0xff]
          %v709 = vld [vmem:[%s695 + $0x8] sm:$0xff]
          %v710 = vld [vmem:[%s695 + $0x10] sm:$0xff]
          %v711 = vld [vmem:[%s695 + $0x18] sm:$0xff]
          %712 = vst [vmem:[#allocation2] sm:$0xff] %v708
          %713 = vst [vmem:[#allocation2 + $0x8] sm:$0xff] %v709
          %714 = vst [vmem:[#allocation2 + $0x10] sm:$0xff] %v710
          %715 = vst [vmem:[#allocation2 + $0x18] sm:$0xff] %v711
          %v716 = vld [vmem:[%s701] sm:$0xff]
          %v717 = vld [vmem:[%s701 + $0x8] sm:$0xff]
          %v718 = vld [vmem:[%s701 + $0x10] sm:$0xff]
          %v719 = vld [vmem:[%s701 + $0x18] sm:$0xff]
          %v720 = vld [vmem:[%s607] sm:$0x1]
          %722 = vset.pattern.permute.xlu0 0
          %723 = vperm.xlu0 %722, %v716
          %v724 = vpop.permute.xlu0 %723
          %727 = vset.pattern.permute.xlu0 0
          %728 = vperm.xlu0 %727, %v717
          %v729 = vpop.permute.xlu0 %728
          %732 = vset.pattern.permute.xlu0 0
          %733 = vperm.xlu0 %732, %v718
          %v734 = vpop.permute.xlu0 %733
          %737 = vset.pattern.permute.xlu0 0
          %738 = vperm.xlu0 %737, %v719
          %v739 = vpop.permute.xlu0 %738
          %v742 = vlaneseq
          %v743 = vshrl.u32 %v742, 7
          %v744 = vsub.s32 0, %v743
          %v745 = vrot.slane %v720, %v744
          %vm747 = vcmp.eq.f32.partialorder %v724, %v745
          %vm748 = vcmp.eq.f32.partialorder %v729, %v745
          %vm749 = vcmp.eq.f32.partialorder %v734, %v745
          %vm750 = vcmp.eq.f32.partialorder %v739, %v745
          %v751 = vsel %vm747, 0.0, -1e+09
          %v752 = vsel %vm748, 0.0, -1e+09
          %v753 = vsel %vm749, 0.0, -1e+09
          %v754 = vsel %vm750, 0.0, -1e+09
          %vm755 = vcmask 261120
          %756 = vst.msk [vmem:[#allocation3] sm:$0xff] %vm755, %v751
          %757 = vst.msk [vmem:[#allocation3 + $0x8] sm:$0xff] %vm755, %v752
          %758 = vst.msk [vmem:[#allocation3 + $0x10] sm:$0xff] %vm755, %v753
          %759 = vst.msk [vmem:[#allocation3 + $0x18] sm:$0xff] %vm755, %v754
        $region120: #{tpu_custom_call.1} parent=87 // pred_fallthru
          _
        %v760 = vld [vmem:[#allocation2] sm:$0xff]
        %v761 = vld [vmem:[#allocation2 + $0x8] sm:$0xff]
        %v762 = vld [vmem:[#allocation2 + $0x10] sm:$0xff]
        %v763 = vld [vmem:[#allocation2 + $0x18] sm:$0xff]
        %v764 = vld [vmem:[#allocation3] sm:$0xff]
        %v765 = vld [vmem:[#allocation3 + $0x8] sm:$0xff]
        %v766 = vld [vmem:[#allocation3 + $0x10] sm:$0xff]
        %v767 = vld [vmem:[#allocation3 + $0x18] sm:$0xff]
        %s768 = scalar_lea.vmem [#allocation7], %s42
        %v769 = vld [vmem:[%s768] sm:$0x1]
        %s770 = scalar_lea.vmem [#allocation9], %s42
        %v771 = vld [vmem:[%s770] sm:$0x1]
        %772 = vadd.xlane.f32.xlu0 %v760
        %v773 = vpop.xlane.xlu0 %772
        %774 = vadd.xlane.f32.xlu0 %v761
        %v775 = vpop.xlane.xlu0 %774
        %776 = vadd.xlane.f32.xlu0 %v762
        %v777 = vpop.xlane.xlu0 %776
        %778 = vadd.xlane.f32.xlu0 %v763
        %v779 = vpop.xlane.xlu0 %778
        %v780 = vmul.f32 %v760, %v760
        %v781 = vmul.f32 %v761, %v761
        %v782 = vmul.f32 %v762, %v762
        %v783 = vmul.f32 %v763, %v763
        %784 = vadd.xlane.f32.xlu0 %v780
        %v785 = vpop.xlane.xlu0 %784
        %786 = vadd.xlane.f32.xlu0 %v781
        %v787 = vpop.xlane.xlu0 %786
        %788 = vadd.xlane.f32.xlu0 %v782
        %v789 = vpop.xlane.xlu0 %788
        %790 = vadd.xlane.f32.xlu0 %v783
        %v791 = vpop.xlane.xlu0 %790
        %v792 = vmul.f32 %v773, 0.0078125
        %v793 = vmul.f32 %v775, 0.0078125
        %v794 = vmul.f32 %v777, 0.0078125
        %v795 = vmul.f32 %v779, 0.0078125
        %v796 = vmul.f32 %v773, %v792
        %v797 = vmul.f32 %v775, %v793
        %v798 = vmul.f32 %v777, %v794
        %v799 = vmul.f32 %v779, %v795
        %v800 = vsub.f32 %v785, %v796
        %v801 = vsub.f32 %v787, %v797
        %v802 = vsub.f32 %v789, %v798
        %v803 = vsub.f32 %v791, %v799
        %v804 = vmul.f32 %v800, 0.007874016
        %v805 = vmul.f32 %v801, 0.007874016
        %v806 = vmul.f32 %v802, 0.007874016
        %v807 = vmul.f32 %v803, 0.007874016
        %v808 = vmax.f32 %v804, 0.0
        %v809 = vmax.f32 %v805, 0.0
        %v810 = vmax.f32 %v806, 0.0
        %v811 = vmax.f32 %v807, 0.0
        %v812 = vrsqrt.pop %v808
        %v813 = vmul.f32 %v808, %v812
        %vm814 = vcmp.eq.f32.partialorder %v808, inf
        %v815 = vsel %vm814, %v808, %v813
        %vm816 = vcmp.eq.f32.partialorder %v808, 0.0
        %v817 = vand.u32 %v808, 2147483648
        %v818 = vsel %vm816, %v817, %v815
        %v819 = vrsqrt.pop %v809
        %v820 = vmul.f32 %v809, %v819
        %vm821 = vcmp.eq.f32.partialorder %v809, inf
        %v822 = vsel %vm821, %v809, %v820
        %vm823 = vcmp.eq.f32.partialorder %v809, 0.0
        %v824 = vand.u32 %v809, 2147483648
        %v825 = vsel %vm823, %v824, %v822
        %v826 = vrsqrt.pop %v810
        %v827 = vmul.f32 %v810, %v826
        %vm828 = vcmp.eq.f32.partialorder %v810, inf
        %v829 = vsel %vm828, %v810, %v827
        %vm830 = vcmp.eq.f32.partialorder %v810, 0.0
        %v831 = vand.u32 %v810, 2147483648
        %v832 = vsel %vm830, %v831, %v829
        %v833 = vrsqrt.pop %v811
        %v834 = vmul.f32 %v811, %v833
        %vm835 = vcmp.eq.f32.partialorder %v811, inf
        %v836 = vsel %vm835, %v811, %v834
        %vm837 = vcmp.eq.f32.partialorder %v811, 0.0
        %v838 = vand.u32 %v811, 2147483648
        %v839 = vsel %vm837, %v838, %v836
        %v840 = vadd.f32 %v818, 1e-06
        %v841 = vadd.f32 %v825, 1e-06
        %v842 = vadd.f32 %v832, 1e-06
        %v843 = vadd.f32 %v839, 1e-06
        %v844 = vrcp.pop %v840
        %v845 = vrcp.pop %v841
        %v846 = vrcp.pop %v842
        %v847 = vrcp.pop %v843
        %v848 = vsub.f32 %v760, %v792
        %v849 = vsub.f32 %v761, %v793
        %v850 = vsub.f32 %v762, %v794
        %v851 = vsub.f32 %v763, %v795
        %v853 = vlaneseq
        %v854 = vshrl.u32 %v853, 7
        %v855 = vsub.s32 0, %v854
        %v856 = vrot.slane %v769, %v855
        %v858 = vmul.f32 %v856, %v844
        %v859 = vmul.f32 %v856, %v845
        %v860 = vmul.f32 %v856, %v846
        %v861 = vmul.f32 %v856, %v847
        %v862 = vmul.f32 %v848, %v858
        %v863 = vmul.f32 %v849, %v859
        %v864 = vmul.f32 %v850, %v860
        %v865 = vmul.f32 %v851, %v861
        %v867 = vlaneseq
        %v868 = vshrl.u32 %v867, 7
        %v869 = vsub.s32 0, %v868
        %v870 = vrot.slane %v771, %v869
        %v872 = vadd.f32 %v862, %v870
        %v873 = vadd.f32 %v863, %v870
        %v874 = vadd.f32 %v864, %v870
        %v875 = vadd.f32 %v865, %v870
        %v876 = vpack.c.bf16 %v873, %v872
        %v877 = vpack.c.bf16 %v875, %v874
        %s878 = smul.u32 %s42, 48
        %s879 = smul.addr %s878, 4
        %s880 = scalar_lea.vmem [#allocation10], %s879
        %v881 = vld [vmem:[%s880] sm:$0xff]
        %v882 = vld [vmem:[%s880 + $0x8] sm:$0xf]
        %v883 = vld [vmem:[%s880 + $0xc] sm:$0xff]
        %v884 = vld [vmem:[%s880 + $0x14] sm:$0xf]
        %v885 = vld [vmem:[%s880 + $0x18] sm:$0xff]
        %v886 = vld [vmem:[%s880 + $0x20] sm:$0xf]
        %v887 = vld [vmem:[%s880 + $0x24] sm:$0xff]
        %v888 = vld [vmem:[%s880 + $0x2c] sm:$0xf]
        %v889 = vld [vmem:[%s880 + $0x30] sm:$0xff]
        %v890 = vld [vmem:[%s880 + $0x38] sm:$0xf]
        %v891 = vld [vmem:[%s880 + $0x3c] sm:$0xff]
        %v892 = vld [vmem:[%s880 + $0x44] sm:$0xf]
        %v893 = vld [vmem:[%s880 + $0x48] sm:$0xff]
        %v894 = vld [vmem:[%s880 + $0x50] sm:$0xf]
        %v895 = vld [vmem:[%s880 + $0x54] sm:$0xff]
        %v896 = vld [vmem:[%s880 + $0x5c] sm:$0xf]
        %v897 = vld [vmem:[%s880 + $0x60] sm:$0xff]
        %v898 = vld [vmem:[%s880 + $0x68] sm:$0xf]
        %v899 = vld [vmem:[%s880 + $0x6c] sm:$0xff]
        %v900 = vld [vmem:[%s880 + $0x74] sm:$0xf]
        %v901 = vld [vmem:[%s880 + $0x78] sm:$0xff]
        %v902 = vld [vmem:[%s880 + $0x80] sm:$0xf]
        %v903 = vld [vmem:[%s880 + $0x84] sm:$0xff]
        %v904 = vld [vmem:[%s880 + $0x8c] sm:$0xf]
        %v905 = vld [vmem:[%s880 + $0x90] sm:$0xff]
        %v906 = vld [vmem:[%s880 + $0x98] sm:$0xf]
        %v907 = vld [vmem:[%s880 + $0x9c] sm:$0xff]
        %v908 = vld [vmem:[%s880 + $0xa4] sm:$0xf]
        %v909 = vld [vmem:[%s880 + $0xa8] sm:$0xff]
        %v910 = vld [vmem:[%s880 + $0xb0] sm:$0xf]
        %v911 = vld [vmem:[%s880 + $0xb4] sm:$0xff]
        %v912 = vld [vmem:[%s880 + $0xbc] sm:$0xf]
        %s913 = smul.u32 %s42, 3
        %s914 = scalar_lea.vmem %s6, %s913
        %v915 = vld [vmem:[%s914] sm:$0x7]
        %v917 = vlaneseq
        %v918 = vshrl.u32 %v917, 7
        %v919 = vsub.s32 0, %v918
        %v920 = vrot.slane %v915, %v919
        %v921 = vlaneseq
        %v922 = vshrl.u32 %v921, 7
        %v923 = vsub.s32 1, %v922
        %v924 = vrot.slane %v915, %v923
        %v925 = vlaneseq
        %v926 = vshrl.u32 %v925, 7
        %v927 = vsub.s32 2, %v926
        %v928 = vrot.slane %v915, %v927
        %v964 = vunpack.c.l.b16 %v881
        %v965 = vunpack.c.h.b16 %v881
        %v966 = vunpack.c.l.b16 %v882
        %v967 = vunpack.c.l.b16 %v883
        %v968 = vunpack.c.h.b16 %v883
        %v969 = vunpack.c.l.b16 %v884
        %v970 = vunpack.c.l.b16 %v885
        %v971 = vunpack.c.h.b16 %v885
        %v972 = vunpack.c.l.b16 %v886
        %v973 = vunpack.c.l.b16 %v887
        %v974 = vunpack.c.h.b16 %v887
        %v975 = vunpack.c.l.b16 %v888
        %v976 = vunpack.c.l.b16 %v889
        %v977 = vunpack.c.h.b16 %v889
        %v978 = vunpack.c.l.b16 %v890
        %v979 = vunpack.c.l.b16 %v891
        %v980 = vunpack.c.h.b16 %v891
        %v981 = vunpack.c.l.b16 %v892
        %v982 = vunpack.c.l.b16 %v893
        %v983 = vunpack.c.h.b16 %v893
        %v984 = vunpack.c.l.b16 %v894
        %v985 = vunpack.c.l.b16 %v895
        %v986 = vunpack.c.h.b16 %v895
        %v987 = vunpack.c.l.b16 %v896
        %v988 = vunpack.c.l.b16 %v897
        %v989 = vunpack.c.h.b16 %v897
        %v990 = vunpack.c.l.b16 %v898
        %v991 = vunpack.c.l.b16 %v899
        %v992 = vunpack.c.h.b16 %v899
        %v993 = vunpack.c.l.b16 %v900
        %v994 = vunpack.c.l.b16 %v901
        %v995 = vunpack.c.h.b16 %v901
        %v996 = vunpack.c.l.b16 %v902
        %v997 = vunpack.c.l.b16 %v903
        %v998 = vunpack.c.h.b16 %v903
        %v999 = vunpack.c.l.b16 %v904
        %v1000 = vunpack.c.l.b16 %v905
        %v1001 = vunpack.c.h.b16 %v905
        %v1002 = vunpack.c.l.b16 %v906
        %v1003 = vunpack.c.l.b16 %v907
        %v1004 = vunpack.c.h.b16 %v907
        %v1005 = vunpack.c.l.b16 %v908
        %v1006 = vunpack.c.l.b16 %v909
        %v1007 = vunpack.c.h.b16 %v909
        %v1008 = vunpack.c.l.b16 %v910
        %v1009 = vunpack.c.l.b16 %v911
        %v1010 = vunpack.c.h.b16 %v911
        %v1011 = vunpack.c.l.b16 %v912
        %v1012 = vpack.c.b16 %v967, %v964
        %v1013 = vpack.c.b16 %v968, %v965
        %v1014 = vpack.c.b16 %v969, %v966
        %v1015 = vpack.c.b16 %v973, %v970
        %v1016 = vpack.c.b16 %v974, %v971
        %v1017 = vpack.c.b16 %v975, %v972
        %v1018 = vpack.c.b16 %v979, %v976
        %v1019 = vpack.c.b16 %v980, %v977
        %v1020 = vpack.c.b16 %v981, %v978
        %v1021 = vpack.c.b16 %v985, %v982
        %v1022 = vpack.c.b16 %v986, %v983
        %v1023 = vpack.c.b16 %v987, %v984
        %v1024 = vpack.c.b16 %v991, %v988
        %v1025 = vpack.c.b16 %v992, %v989
        %v1026 = vpack.c.b16 %v993, %v990
        %v1027 = vpack.c.b16 %v997, %v994
        %v1028 = vpack.c.b16 %v998, %v995
        %v1029 = vpack.c.b16 %v999, %v996
        %v1030 = vpack.c.b16 %v1003, %v1000
        %v1031 = vpack.c.b16 %v1004, %v1001
        %v1032 = vpack.c.b16 %v1005, %v1002
        %v1033 = vpack.c.b16 %v1009, %v1006
        %v1034 = vpack.c.b16 %v1010, %v1007
        %v1035 = vpack.c.b16 %v1011, %v1008
        %1060 = vmatprep.subr.bf16.mxu0 %v1034
        %1061 = vmatpush1.bf16.msra.mxu0 %v1033
        %1062 = vmatprep.subr.bf16.mxu0 %v1031
        %1063 = vmatpush1.bf16.msra.mxu0 %v1030
        %1064 = vmatprep.subr.bf16.mxu0 %v1028
        %1065 = vmatpush1.bf16.msra.mxu0 %v1027
        %1066 = vmatprep.subr.bf16.mxu0 %v1025
        %1067 = vmatpush1.bf16.msra.mxu0 %v1024
        %1068 = vmatprep.subr.bf16.mxu0 %v1022
        %1069 = vmatpush1.bf16.msra.mxu0 %v1021
        %1070 = vmatprep.subr.bf16.mxu0 %v1019
        %1071 = vmatpush1.bf16.msra.mxu0 %v1018
        %1072 = vmatprep.subr.bf16.mxu0 %v1016
        %1073 = vmatpush1.bf16.msra.mxu0 %v1015
        %1074 = vmatprep.subr.bf16.mxu0 %v1013
        %1075 = vmatpush1.bf16.msra.mxu0 %v1012
        %1076 = vmatprep.subr.bf16.mxu0 0
        %1077 = vmatpush2.bf16.msra.mxu0 0
        %1078 = vmatprep.subr.bf16.mxu0 0
        %1079 = vmatpush2.bf16.msra.mxu0 0
        %1080 = vmatprep.subr.bf16.mxu0 0
        %1081 = vmatpush2.bf16.msra.mxu0 0
        %1082 = vmatprep.subr.bf16.mxu0 0
        %1083 = vmatpush2.bf16.msra.mxu0 0
        %1084 = vmatprep.subr.bf16.mxu0 0
        %1085 = vmatpush2.bf16.msra.mxu0 0
        %1086 = vmatprep.subr.bf16.mxu0 0
        %1087 = vmatpush2.bf16.msra.mxu0 0
        %1088 = vmatprep.subr.bf16.mxu0 0
        %1089 = vmatpush2.bf16.msra.mxu0 0
        %1090 = vmatprep.subr.bf16.mxu0 0
        %1091 = vmatpush2.bf16.msra.mxu0 0
        %1092 = vmatprep.mubr.bf16.mxu0 0
        %1093 = vmatmul.mubr.bf16.gmra.mxu0 %v876
        %v1094 = vpop.f32.mrf.mxu0
        %v1095 = vadd.f32 %v920, %v1094
        %v1096 = vpop.f32.mrf.mxu0
        %v1097 = vadd.f32 %v924, %v1096
        %v1098 = vpop.f32.mrf.mxu0
        %v1099 = vadd.f32 %v920, %v1098
        %v1100 = vpop.f32.mrf.mxu0
        %v1101 = vadd.f32 %v924, %v1100
        %1102 = vmatprep.mubr.bf16.mxu0 0
        %1103 = vmatmul.mubr.bf16.gmra.mxu0 %v877
        %v1104 = vpop.f32.mrf.mxu0
        %v1105 = vadd.f32 %v920, %v1104
        %v1106 = vpop.f32.mrf.mxu0
        %v1107 = vadd.f32 %v924, %v1106
        %v1108 = vpop.f32.mrf.mxu0
        %v1109 = vadd.f32 %v920, %v1108
        %v1110 = vpop.f32.mrf.mxu0
        %v1111 = vadd.f32 %v924, %v1110
        %1112 = vdwg.mxu0
        %1113 = vmatprep.subr.bf16.mxu0 0
        %1114 = vmatpush1.bf16.msra.mxu0 %v1035
        %1115 = vmatprep.subr.bf16.mxu0 0
        %1116 = vmatpush1.bf16.msra.mxu0 %v1032
        %1117 = vmatprep.subr.bf16.mxu0 0
        %1118 = vmatpush1.bf16.msra.mxu0 %v1029
        %1119 = vmatprep.subr.bf16.mxu0 0
        %1120 = vmatpush1.bf16.msra.mxu0 %v1026
        %1121 = vmatprep.subr.bf16.mxu0 0
        %1122 = vmatpush1.bf16.msra.mxu0 %v1023
        %1123 = vmatprep.subr.bf16.mxu0 0
        %1124 = vmatpush1.bf16.msra.mxu0 %v1020
        %1125 = vmatprep.subr.bf16.mxu0 0
        %1126 = vmatpush1.bf16.msra.mxu0 %v1017
        %1127 = vmatprep.subr.bf16.mxu0 0
        %1128 = vmatpush1.bf16.msra.mxu0 %v1014
        %1129 = vmatprep.subr.bf16.mxu0 0
        %1130 = vmatpush2.bf16.msra.mxu0 0
        %1131 = vmatprep.subr.bf16.mxu0 0
        %1132 = vmatpush2.bf16.msra.mxu0 0
        %1133 = vmatprep.subr.bf16.mxu0 0
        %1134 = vmatpush2.bf16.msra.mxu0 0
        %1135 = vmatprep.subr.bf16.mxu0 0
        %1136 = vmatpush2.bf16.msra.mxu0 0
        %1137 = vmatprep.subr.bf16.mxu0 0
        %1138 = vmatpush2.bf16.msra.mxu0 0
        %1139 = vmatprep.subr.bf16.mxu0 0
        %1140 = vmatpush2.bf16.msra.mxu0 0
        %1141 = vmatprep.subr.bf16.mxu0 0
        %1142 = vmatpush2.bf16.msra.mxu0 0
        %1143 = vmatprep.subr.bf16.mxu0 0
        %1144 = vmatpush2.bf16.msra.mxu0 0
        %1145 = vmatprep.mubr.bf16.mxu0 0
        %1146 = vmatmul.mubr.bf16.gmra.mxu0 %v876
        %v1147 = vpop.f32.mrf.mxu0
        %v1148 = vadd.f32 %v928, %v1147
        %v1149 = vpop.f32.mrf.mxu0
        %v1150 = vpop.f32.mrf.mxu0
        %v1151 = vadd.f32 %v928, %v1150
        %v1152 = vpop.f32.mrf.mxu0
        %1153 = vmatprep.mubr.bf16.mxu0 0
        %1154 = vmatmul.mubr.bf16.gmra.mxu0 %v877
        %v1155 = vpop.f32.mrf.mxu0
        %v1156 = vadd.f32 %v928, %v1155
        %v1157 = vpop.f32.mrf.mxu0
        %v1158 = vpop.f32.mrf.mxu0
        %v1159 = vadd.f32 %v928, %v1158
        %v1160 = vpop.f32.mrf.mxu0
        %1161 = vdwg.mxu0
        %v1162 = vpack.c.bf16 %v1099, %v1095
        %v1163 = vpack.c.bf16 %v1109, %v1105
        %v1164 = vpack.c.bf16 %v1101, %v1097
        %v1165 = vpack.c.bf16 %v1111, %v1107
        %v1166 = vpack.c.bf16 %v1151, %v1148
        %v1167 = vpack.c.bf16 %v1159, %v1156
        %vm1168 = vcmask 261120
        %v1170 = vsel %vm1168, %v1162, 0
        %v1173 = vsel %vm1168, %v1163, 0
        %v1176 = vsel %vm1168, %v1164, 0
        %v1179 = vsel %vm1168, %v1165, 0
        %1181 = vmatprep.subr.bf16.mxu0 0
        %1182 = vmatpush1.bf16.xpose.msra.mxu0 0
        %1183 = vmatprep.subr.bf16.mxu0 0
        %1184 = vmatpush1.bf16.xpose.msra.mxu0 0
        %1185 = vmatprep.subr.bf16.mxu0 0
        %1186 = vmatpush1.bf16.xpose.msra.mxu0 0
        %1187 = vmatprep.subr.bf16.mxu0 0
        %1188 = vmatpush1.bf16.xpose.msra.mxu0 0
        %1189 = vmatprep.subr.bf16.mxu0 0
        %1190 = vmatpush1.bf16.xpose.msra.mxu0 0
        %1191 = vmatprep.subr.bf16.mxu0 0
        %1192 = vmatpush1.bf16.xpose.msra.mxu0 0
        %1193 = vmatprep.subr.bf16.mxu0 0
        %1194 = vmatpush1.bf16.xpose.msra.mxu0 %v1179
        %1195 = vmatprep.subr.bf16.mxu0 0
        %1196 = vmatpush1.bf16.xpose.msra.mxu0 %v1176
        %1197 = vmatprep.subr.bf16.mxu0 0
        %1198 = vmatpush2.bf16.xpose.msra.mxu0 0
        %1199 = vmatprep.subr.bf16.mxu0 0
        %1200 = vmatpush2.bf16.xpose.msra.mxu0 0
        %1201 = vmatprep.subr.bf16.mxu0 0
        %1202 = vmatpush2.bf16.xpose.msra.mxu0 0
        %1203 = vmatprep.subr.bf16.mxu0 0
        %1204 = vmatpush2.bf16.xpose.msra.mxu0 0
        %1205 = vmatprep.subr.bf16.mxu0 0
        %1206 = vmatpush2.bf16.xpose.msra.mxu0 0
        %1207 = vmatprep.subr.bf16.mxu0 0
        %1208 = vmatpush2.bf16.xpose.msra.mxu0 0
        %1209 = vmatprep.subr.bf16.mxu0 0
        %1210 = vmatpush2.bf16.xpose.msra.mxu0 0
        %1211 = vmatprep.subr.bf16.mxu0 0
        %1212 = vmatpush2.bf16.xpose.msra.mxu0 0
        %1213 = vmatprep.mubr.bf16.mxu0 0
        %1214 = vmatmul.mubr.bf16.gmra.mxu0 %v1170
        %v1215 = vpop.f32.mrf.mxu0
        %v1216 = vadd.f32 %v764, %v1215
        %v1217 = vpop.f32.mrf.mxu0
        %v1218 = vpop.f32.mrf.mxu0
        %v1219 = vadd.f32 %v765, %v1218
        %v1220 = vpop.f32.mrf.mxu0
        %1221 = vmatprep.mubr.bf16.mxu0 0
        %1222 = vmatmul.mubr.bf16.gmra.mxu0 %v1173
        %v1223 = vpop.f32.mrf.mxu0
        %v1224 = vadd.f32 %v766, %v1223
        %v1225 = vpop.f32.mrf.mxu0
        %v1226 = vpop.f32.mrf.mxu0
        %v1227 = vadd.f32 %v767, %v1226
        %v1228 = vpop.f32.mrf.mxu0
        %1229 = vdwg.mxu0
        %v1230 = vsel %vm1168, %v1216, -inf
        %1231 = vmax.xlane.f32.xlu0 %v1230
        %v1232 = vpop.xlane.xlu0 %1231
        %v1233 = vsel %vm1168, %v1219, -inf
        %1234 = vmax.xlane.f32.xlu0 %v1233
        %v1235 = vpop.xlane.xlu0 %1234
        %v1236 = vsel %vm1168, %v1224, -inf
        %1237 = vmax.xlane.f32.xlu0 %v1236
        %v1238 = vpop.xlane.xlu0 %1237
        %v1239 = vsel %vm1168, %v1227, -inf
        %1240 = vmax.xlane.f32.xlu0 %v1239
        %v1241 = vpop.xlane.xlu0 %1240
        %v1242 = vsub.f32 %v1216, %v1232
        %v1243 = vsub.f32 %v1219, %v1235
        %v1244 = vsub.f32 %v1224, %v1238
        %v1245 = vsub.f32 %v1227, %v1241
        %v1246 = vmul.f32 %v1242, 1.442695
        %v1247 = vpow.pop %v1246
        %v1248 = vmul.f32 %v1243, 1.442695
        %v1249 = vpow.pop %v1248
        %v1250 = vmul.f32 %v1244, 1.442695
        %v1251 = vpow.pop %v1250
        %v1252 = vmul.f32 %v1245, 1.442695
        %v1253 = vpow.pop %v1252
        %v1254 = vsel %vm1168, %v1247, 0.0
        %1255 = vadd.xlane.f32.xlu0 %v1254
        %v1256 = vpop.xlane.xlu0 %1255
        %v1257 = vsel %vm1168, %v1249, 0.0
        %1258 = vadd.xlane.f32.xlu0 %v1257
        %v1259 = vpop.xlane.xlu0 %1258
        %v1260 = vsel %vm1168, %v1251, 0.0
        %1261 = vadd.xlane.f32.xlu0 %v1260
        %v1262 = vpop.xlane.xlu0 %1261
        %v1263 = vsel %vm1168, %v1253, 0.0
        %1264 = vadd.xlane.f32.xlu0 %v1263
        %v1265 = vpop.xlane.xlu0 %1264
        %v1266 = vrcp.pop %v1256
        %v1267 = vrcp.pop %v1259
        %v1268 = vrcp.pop %v1262
        %v1269 = vrcp.pop %v1265
        %v1270 = vmul.f32 %v1247, %v1266
        %v1271 = vmul.f32 %v1249, %v1267
        %v1272 = vmul.f32 %v1251, %v1268
        %v1273 = vmul.f32 %v1253, %v1269
        %v1274 = vpack.c.bf16 %v1271, %v1270
        %v1275 = vpack.c.bf16 %v1273, %v1272
        %v1277 = vsel %vm1168, %v1274, 0
        %v1280 = vsel %vm1168, %v1275, 0
        %1282 = vmatprep.subr.bf16.mxu0 0
        %1283 = vmatpush1.bf16.msra.mxu0 0
        %1284 = vmatprep.subr.bf16.mxu0 0
        %1285 = vmatpush1.bf16.msra.mxu0 0
        %1286 = vmatprep.subr.bf16.mxu0 0
        %1287 = vmatpush1.bf16.msra.mxu0 0
        %1288 = vmatprep.subr.bf16.mxu0 0
        %1289 = vmatpush1.bf16.msra.mxu0 0
        %1290 = vmatprep.subr.bf16.mxu0 0
        %1291 = vmatpush1.bf16.msra.mxu0 0
        %1292 = vmatprep.subr.bf16.mxu0 0
        %1293 = vmatpush1.bf16.msra.mxu0 0
        %1294 = vmatprep.subr.bf16.mxu0 0
        %1295 = vmatpush1.bf16.msra.mxu0 %v1167
        %1296 = vmatprep.subr.bf16.mxu0 0
        %1297 = vmatpush1.bf16.msra.mxu0 %v1166
        %1298 = vmatprep.subr.bf16.mxu0 0
        %1299 = vmatpush2.bf16.msra.mxu0 0
        %1300 = vmatprep.subr.bf16.mxu0 0
        %1301 = vmatpush2.bf16.msra.mxu0 0
        %1302 = vmatprep.subr.bf16.mxu0 0
        %1303 = vmatpush2.bf16.msra.mxu0 0
        %1304 = vmatprep.subr.bf16.mxu0 0
        %1305 = vmatpush2.bf16.msra.mxu0 0
        %1306 = vmatprep.subr.bf16.mxu0 0
        %1307 = vmatpush2.bf16.msra.mxu0 0
        %1308 = vmatprep.subr.bf16.mxu0 0
        %1309 = vmatpush2.bf16.msra.mxu0 0
        %1310 = vmatprep.subr.bf16.mxu0 0
        %1311 = vmatpush2.bf16.msra.mxu0 0
        %1312 = vmatprep.subr.bf16.mxu0 0
        %1313 = vmatpush2.bf16.msra.mxu0 0
        %1314 = vmatprep.mubr.bf16.mxu0 0
        %1315 = vmatmul.mubr.bf16.gmra.mxu0 %v1277
        %v1316 = vpop.f32.mrf.mxu0
        %v1317 = vadd.f32 0.0, %v1316
        %v1318 = vpop.f32.mrf.mxu0
        %v1319 = vpop.f32.mrf.mxu0
        %v1320 = vadd.f32 0.0, %v1319
        %v1321 = vpop.f32.mrf.mxu0
        %1322 = vmatprep.mubr.bf16.mxu0 0
        %1323 = vmatmul.mubr.bf16.gmra.mxu0 %v1280
        %v1324 = vpop.f32.mrf.mxu0
        %v1325 = vadd.f32 0.0, %v1324
        %v1326 = vpop.f32.mrf.mxu0
        %v1327 = vpop.f32.mrf.mxu0
        %v1328 = vadd.f32 0.0, %v1327
        %v1329 = vpop.f32.mrf.mxu0
        %1330 = vdwg.mxu0
        %1333 = vrot.lane.b32.xlu0 %v1162, 96
        %v1334 = vpop.permute.xlu0 %1333
        %1335 = vrot.lane.b32.xlu0 %v1163, 96
        %v1336 = vpop.permute.xlu0 %1335
        %1339 = vrot.lane.b32.xlu0 %v1164, 96
        %v1340 = vpop.permute.xlu0 %1339
        %1341 = vrot.lane.b32.xlu0 %v1165, 96
        %v1342 = vpop.permute.xlu0 %1341
        %v1344 = vsel %vm1168, %v1334, 0
        %v1347 = vsel %vm1168, %v1336, 0
        %v1350 = vsel %vm1168, %v1340, 0
        %v1353 = vsel %vm1168, %v1342, 0
        %1355 = vmatprep.subr.bf16.mxu0 0
        %1356 = vmatpush1.bf16.xpose.msra.mxu0 0
        %1357 = vmatprep.subr.bf16.mxu0 0
        %1358 = vmatpush1.bf16.xpose.msra.mxu0 0
        %1359 = vmatprep.subr.bf16.mxu0 0
        %1360 = vmatpush1.bf16.xpose.msra.mxu0 0
        %1361 = vmatprep.subr.bf16.mxu0 0
        %1362 = vmatpush1.bf16.xpose.msra.mxu0 0
        %1363 = vmatprep.subr.bf16.mxu0 0
        %1364 = vmatpush1.bf16.xpose.msra.mxu0 0
        %1365 = vmatprep.subr.bf16.mxu0 0
        %1366 = vmatpush1.bf16.xpose.msra.mxu0 0
        %1367 = vmatprep.subr.bf16.mxu0 0
        %1368 = vmatpush1.bf16.xpose.msra.mxu0 %v1353
        %1369 = vmatprep.subr.bf16.mxu0 0
        %1370 = vmatpush1.bf16.xpose.msra.mxu0 %v1350
        %1371 = vmatprep.subr.bf16.mxu0 0
        %1372 = vmatpush2.bf16.xpose.msra.mxu0 0
        %1373 = vmatprep.subr.bf16.mxu0 0
        %1374 = vmatpush2.bf16.xpose.msra.mxu0 0
        %1375 = vmatprep.subr.bf16.mxu0 0
        %1376 = vmatpush2.bf16.xpose.msra.mxu0 0
        %1377 = vmatprep.subr.bf16.mxu0 0
        %1378 = vmatpush2.bf16.xpose.msra.mxu0 0
        %1379 = vmatprep.subr.bf16.mxu0 0
        %1380 = vmatpush2.bf16.xpose.msra.mxu0 0
        %1381 = vmatprep.subr.bf16.mxu0 0
        %1382 = vmatpush2.bf16.xpose.msra.mxu0 0
        %1383 = vmatprep.subr.bf16.mxu0 0
        %1384 = vmatpush2.bf16.xpose.msra.mxu0 0
        %1385 = vmatprep.subr.bf16.mxu0 0
        %1386 = vmatpush2.bf16.xpose.msra.mxu0 0
        %1387 = vmatprep.mubr.bf16.mxu0 0
        %1388 = vmatmul.mubr.bf16.gmra.mxu0 %v1344
        %v1389 = vpop.f32.mrf.mxu0
        %v1390 = vadd.f32 %v764, %v1389
        %v1391 = vpop.f32.mrf.mxu0
        %v1392 = vpop.f32.mrf.mxu0
        %v1393 = vadd.f32 %v765, %v1392
        %v1394 = vpop.f32.mrf.mxu0
        %1395 = vmatprep.mubr.bf16.mxu0 0
        %1396 = vmatmul.mubr.bf16.gmra.mxu0 %v1347
        %v1397 = vpop.f32.mrf.mxu0
        %v1398 = vadd.f32 %v766, %v1397
        %v1399 = vpop.f32.mrf.mxu0
        %v1400 = vpop.f32.mrf.mxu0
        %v1401 = vadd.f32 %v767, %v1400
        %v1402 = vpop.f32.mrf.mxu0
        %1403 = vdwg.mxu0
        %v1404 = vsel %vm1168, %v1390, -inf
        %1405 = vmax.xlane.f32.xlu0 %v1404
        %v1406 = vpop.xlane.xlu0 %1405
        %v1407 = vsel %vm1168, %v1393, -inf
        %1408 = vmax.xlane.f32.xlu0 %v1407
        %v1409 = vpop.xlane.xlu0 %1408
        %v1410 = vsel %vm1168, %v1398, -inf
        %1411 = vmax.xlane.f32.xlu0 %v1410
        %v1412 = vpop.xlane.xlu0 %1411
        %v1413 = vsel %vm1168, %v1401, -inf
        %1414 = vmax.xlane.f32.xlu0 %v1413
        %v1415 = vpop.xlane.xlu0 %1414
        %v1416 = vsub.f32 %v1390, %v1406
        %v1417 = vsub.f32 %v1393, %v1409
        %v1418 = vsub.f32 %v1398, %v1412
        %v1419 = vsub.f32 %v1401, %v1415
        %v1420 = vmul.f32 %v1416, 1.442695
        %v1421 = vpow.pop %v1420
        %v1422 = vmul.f32 %v1417, 1.442695
        %v1423 = vpow.pop %v1422
        %v1424 = vmul.f32 %v1418, 1.442695
        %v1425 = vpow.pop %v1424
        %v1426 = vmul.f32 %v1419, 1.442695
        %v1427 = vpow.pop %v1426
        %v1428 = vsel %vm1168, %v1421, 0.0
        %1429 = vadd.xlane.f32.xlu0 %v1428
        %v1430 = vpop.xlane.xlu0 %1429
        %v1431 = vsel %vm1168, %v1423, 0.0
        %1432 = vadd.xlane.f32.xlu0 %v1431
        %v1433 = vpop.xlane.xlu0 %1432
        %v1434 = vsel %vm1168, %v1425, 0.0
        %1435 = vadd.xlane.f32.xlu0 %v1434
        %v1436 = vpop.xlane.xlu0 %1435
        %v1437 = vsel %vm1168, %v1427, 0.0
        %1438 = vadd.xlane.f32.xlu0 %v1437
        %v1439 = vpop.xlane.xlu0 %1438
        %v1440 = vrcp.pop %v1430
        %v1441 = vrcp.pop %v1433
        %v1442 = vrcp.pop %v1436
        %v1443 = vrcp.pop %v1439
        %v1444 = vmul.f32 %v1421, %v1440
        %v1445 = vmul.f32 %v1423, %v1441
        %v1446 = vmul.f32 %v1425, %v1442
        %v1447 = vmul.f32 %v1427, %v1443
        %v1448 = vpack.c.bf16 %v1445, %v1444
        %v1449 = vpack.c.bf16 %v1447, %v1446
        %1452 = vrot.lane.b32.xlu0 %v1166, 96
        %v1453 = vpop.permute.xlu0 %1452
        %1454 = vrot.lane.b32.xlu0 %v1167, 96
        %v1455 = vpop.permute.xlu0 %1454
        %v1459 = vsel %vm1168, %v1448, 0
        %v1462 = vsel %vm1168, %v1449, 0
        %1464 = vmatprep.subr.bf16.mxu0 0
        %1465 = vmatpush1.bf16.msra.mxu0 0
        %1466 = vmatprep.subr.bf16.mxu0 0
        %1467 = vmatpush1.bf16.msra.mxu0 0
        %1468 = vmatprep.subr.bf16.mxu0 0
        %1469 = vmatpush1.bf16.msra.mxu0 0
        %1470 = vmatprep.subr.bf16.mxu0 0
        %1471 = vmatpush1.bf16.msra.mxu0 0
        %1472 = vmatprep.subr.bf16.mxu0 0
        %1473 = vmatpush1.bf16.msra.mxu0 0
        %1474 = vmatprep.subr.bf16.mxu0 0
        %1475 = vmatpush1.bf16.msra.mxu0 0
        %1476 = vmatprep.subr.bf16.mxu0 0
        %1477 = vmatpush1.bf16.msra.mxu0 %v1455
        %1478 = vmatprep.subr.bf16.mxu0 0
        %1479 = vmatpush1.bf16.msra.mxu0 %v1453
        %1480 = vmatprep.subr.bf16.mxu0 0
        %1481 = vmatpush2.bf16.msra.mxu0 0
        %1482 = vmatprep.subr.bf16.mxu0 0
        %1483 = vmatpush2.bf16.msra.mxu0 0
        %1484 = vmatprep.subr.bf16.mxu0 0
        %1485 = vmatpush2.bf16.msra.mxu0 0
        %1486 = vmatprep.subr.bf16.mxu0 0
        %1487 = vmatpush2.bf16.msra.mxu0 0
        %1488 = vmatprep.subr.bf16.mxu0 0
        %1489 = vmatpush2.bf16.msra.mxu0 0
        %1490 = vmatprep.subr.bf16.mxu0 0
        %1491 = vmatpush2.bf16.msra.mxu0 0
        %1492 = vmatprep.subr.bf16.mxu0 0
        %1493 = vmatpush2.bf16.msra.mxu0 0
        %1494 = vmatprep.subr.bf16.mxu0 0
        %1495 = vmatpush2.bf16.msra.mxu0 0
        %1496 = vmatprep.mubr.bf16.mxu0 0
        %1497 = vmatmul.mubr.bf16.gmra.mxu0 %v1459
        %v1498 = vpop.f32.mrf.mxu0
        %v1499 = vadd.f32 0.0, %v1498
        %v1500 = vpop.f32.mrf.mxu0
        %v1501 = vpop.f32.mrf.mxu0
        %v1502 = vadd.f32 0.0, %v1501
        %v1503 = vpop.f32.mrf.mxu0
        %1504 = vmatprep.mubr.bf16.mxu0 0
        %1505 = vmatmul.mubr.bf16.gmra.mxu0 %v1462
        %v1506 = vpop.f32.mrf.mxu0
        %v1507 = vadd.f32 0.0, %v1506
        %v1508 = vpop.f32.mrf.mxu0
        %v1509 = vpop.f32.mrf.mxu0
        %v1510 = vadd.f32 0.0, %v1509
        %v1511 = vpop.f32.mrf.mxu0
        %1512 = vdwg.mxu0
        %1513 = vrot.lane.b32.xlu0 %v1162, 64
        %v1514 = vpop.permute.xlu0 %1513
        %1515 = vrot.lane.b32.xlu0 %v1163, 64
        %v1516 = vpop.permute.xlu0 %1515
        %1517 = vrot.lane.b32.xlu0 %v1164, 64
        %v1518 = vpop.permute.xlu0 %1517
        %1519 = vrot.lane.b32.xlu0 %v1165, 64
        %v1520 = vpop.permute.xlu0 %1519
        %v1522 = vsel %vm1168, %v1514, 0
        %v1525 = vsel %vm1168, %v1516, 0
        %v1528 = vsel %vm1168, %v1518, 0
        %v1531 = vsel %vm1168, %v1520, 0
        %1533 = vmatprep.subr.bf16.mxu0 0
        %1534 = vmatpush1.bf16.xpose.msra.mxu0 0
        %1535 = vmatprep.subr.bf16.mxu0 0
        %1536 = vmatpush1.bf16.xpose.msra.mxu0 0
        %1537 = vmatprep.subr.bf16.mxu0 0
        %1538 = vmatpush1.bf16.xpose.msra.mxu0 0
        %1539 = vmatprep.subr.bf16.mxu0 0
        %1540 = vmatpush1.bf16.xpose.msra.mxu0 0
        %1541 = vmatprep.subr.bf16.mxu0 0
        %1542 = vmatpush1.bf16.xpose.msra.mxu0 0
        %1543 = vmatprep.subr.bf16.mxu0 0
        %1544 = vmatpush1.bf16.xpose.msra.mxu0 0
        %1545 = vmatprep.subr.bf16.mxu0 0
        %1546 = vmatpush1.bf16.xpose.msra.mxu0 %v1531
        %1547 = vmatprep.subr.bf16.mxu0 0
        %1548 = vmatpush1.bf16.xpose.msra.mxu0 %v1528
        %1549 = vmatprep.subr.bf16.mxu0 0
        %1550 = vmatpush2.bf16.xpose.msra.mxu0 0
        %1551 = vmatprep.subr.bf16.mxu0 0
        %1552 = vmatpush2.bf16.xpose.msra.mxu0 0
        %1553 = vmatprep.subr.bf16.mxu0 0
        %1554 = vmatpush2.bf16.xpose.msra.mxu0 0
        %1555 = vmatprep.subr.bf16.mxu0 0
        %1556 = vmatpush2.bf16.xpose.msra.mxu0 0
        %1557 = vmatprep.subr.bf16.mxu0 0
        %1558 = vmatpush2.bf16.xpose.msra.mxu0 0
        %1559 = vmatprep.subr.bf16.mxu0 0
        %1560 = vmatpush2.bf16.xpose.msra.mxu0 0
        %1561 = vmatprep.subr.bf16.mxu0 0
        %1562 = vmatpush2.bf16.xpose.msra.mxu0 0
        %1563 = vmatprep.subr.bf16.mxu0 0
        %1564 = vmatpush2.bf16.xpose.msra.mxu0 0
        %1565 = vmatprep.mubr.bf16.mxu0 0
        %1566 = vmatmul.mubr.bf16.gmra.mxu0 %v1522
        %v1567 = vpop.f32.mrf.mxu0
        %v1568 = vadd.f32 %v764, %v1567
        %v1569 = vpop.f32.mrf.mxu0
        %v1570 = vpop.f32.mrf.mxu0
        %v1571 = vadd.f32 %v765, %v1570
        %v1572 = vpop.f32.mrf.mxu0
        %1573 = vmatprep.mubr.bf16.mxu0 0
        %1574 = vmatmul.mubr.bf16.gmra.mxu0 %v1525
        %v1575 = vpop.f32.mrf.mxu0
        %v1576 = vadd.f32 %v766, %v1575
        %v1577 = vpop.f32.mrf.mxu0
        %v1578 = vpop.f32.mrf.mxu0
        %v1579 = vadd.f32 %v767, %v1578
        %v1580 = vpop.f32.mrf.mxu0
        %1581 = vdwg.mxu0
        %v1582 = vsel %vm1168, %v1568, -inf
        %1583 = vmax.xlane.f32.xlu0 %v1582
        %v1584 = vpop.xlane.xlu0 %1583
        %v1585 = vsel %vm1168, %v1571, -inf
        %1586 = vmax.xlane.f32.xlu0 %v1585
        %v1587 = vpop.xlane.xlu0 %1586
        %v1588 = vsel %vm1168, %v1576, -inf
        %1589 = vmax.xlane.f32.xlu0 %v1588
        %v1590 = vpop.xlane.xlu0 %1589
        %v1591 = vsel %vm1168, %v1579, -inf
        %1592 = vmax.xlane.f32.xlu0 %v1591
        %v1593 = vpop.xlane.xlu0 %1592
        %v1594 = vsub.f32 %v1568, %v1584
        %v1595 = vsub.f32 %v1571, %v1587
        %v1596 = vsub.f32 %v1576, %v1590
        %v1597 = vsub.f32 %v1579, %v1593
        %v1598 = vmul.f32 %v1594, 1.442695
        %v1599 = vpow.pop %v1598
        %v1600 = vmul.f32 %v1595, 1.442695
        %v1601 = vpow.pop %v1600
        %v1602 = vmul.f32 %v1596, 1.442695
        %v1603 = vpow.pop %v1602
        %v1604 = vmul.f32 %v1597, 1.442695
        %v1605 = vpow.pop %v1604
        %v1606 = vsel %vm1168, %v1599, 0.0
        %1607 = vadd.xlane.f32.xlu0 %v1606
        %v1608 = vpop.xlane.xlu0 %1607
        %v1609 = vsel %vm1168, %v1601, 0.0
        %1610 = vadd.xlane.f32.xlu0 %v1609
        %v1611 = vpop.xlane.xlu0 %1610
        %v1612 = vsel %vm1168, %v1603, 0.0
        %1613 = vadd.xlane.f32.xlu0 %v1612
        %v1614 = vpop.xlane.xlu0 %1613
        %v1615 = vsel %vm1168, %v1605, 0.0
        %1616 = vadd.xlane.f32.xlu0 %v1615
        %v1617 = vpop.xlane.xlu0 %1616
        %v1618 = vrcp.pop %v1608
        %v1619 = vrcp.pop %v1611
        %v1620 = vrcp.pop %v1614
        %v1621 = vrcp.pop %v1617
        %v1622 = vmul.f32 %v1599, %v1618
        %v1623 = vmul.f32 %v1601, %v1619
        %v1624 = vmul.f32 %v1603, %v1620
        %v1625 = vmul.f32 %v1605, %v1621
        %v1626 = vpack.c.bf16 %v1623, %v1622
        %v1627 = vpack.c.bf16 %v1625, %v1624
        %1628 = vrot.lane.b32.xlu0 %v1166, 64
        %v1629 = vpop.permute.xlu0 %1628
        %1630 = vrot.lane.b32.xlu0 %v1167, 64
        %v1631 = vpop.permute.xlu0 %1630
        %v1635 = vsel %vm1168, %v1626, 0
        %v1638 = vsel %vm1168, %v1627, 0
        %1640 = vmatprep.subr.bf16.mxu0 0
        %1641 = vmatpush1.bf16.msra.mxu0 0
        %1642 = vmatprep.subr.bf16.mxu0 0
        %1643 = vmatpush1.bf16.msra.mxu0 0
        %1644 = vmatprep.subr.bf16.mxu0 0
        %1645 = vmatpush1.bf16.msra.mxu0 0
        %1646 = vmatprep.subr.bf16.mxu0 0
        %1647 = vmatpush1.bf16.msra.mxu0 0
        %1648 = vmatprep.subr.bf16.mxu0 0
        %1649 = vmatpush1.bf16.msra.mxu0 0
        %1650 = vmatprep.subr.bf16.mxu0 0
        %1651 = vmatpush1.bf16.msra.mxu0 0
        %1652 = vmatprep.subr.bf16.mxu0 0
        %1653 = vmatpush1.bf16.msra.mxu0 %v1631
        %1654 = vmatprep.subr.bf16.mxu0 0
        %1655 = vmatpush1.bf16.msra.mxu0 %v1629
        %1656 = vmatprep.subr.bf16.mxu0 0
        %1657 = vmatpush2.bf16.msra.mxu0 0
        %1658 = vmatprep.subr.bf16.mxu0 0
        %1659 = vmatpush2.bf16.msra.mxu0 0
        %1660 = vmatprep.subr.bf16.mxu0 0
        %1661 = vmatpush2.bf16.msra.mxu0 0
        %1662 = vmatprep.subr.bf16.mxu0 0
        %1663 = vmatpush2.bf16.msra.mxu0 0
        %1664 = vmatprep.subr.bf16.mxu0 0
        %1665 = vmatpush2.bf16.msra.mxu0 0
        %1666 = vmatprep.subr.bf16.mxu0 0
        %1667 = vmatpush2.bf16.msra.mxu0 0
        %1668 = vmatprep.subr.bf16.mxu0 0
        %1669 = vmatpush2.bf16.msra.mxu0 0
        %1670 = vmatprep.subr.bf16.mxu0 0
        %1671 = vmatpush2.bf16.msra.mxu0 0
        %1672 = vmatprep.mubr.bf16.mxu0 0
        %1673 = vmatmul.mubr.bf16.gmra.mxu0 %v1635
        %v1674 = vpop.f32.mrf.mxu0
        %v1675 = vadd.f32 0.0, %v1674
        %v1676 = vpop.f32.mrf.mxu0
        %v1677 = vpop.f32.mrf.mxu0
        %v1678 = vadd.f32 0.0, %v1677
        %v1679 = vpop.f32.mrf.mxu0
        %1680 = vmatprep.mubr.bf16.mxu0 0
        %1681 = vmatmul.mubr.bf16.gmra.mxu0 %v1638
        %v1682 = vpop.f32.mrf.mxu0
        %v1683 = vadd.f32 0.0, %v1682
        %v1684 = vpop.f32.mrf.mxu0
        %v1685 = vpop.f32.mrf.mxu0
        %v1686 = vadd.f32 0.0, %v1685
        %v1687 = vpop.f32.mrf.mxu0
        %1688 = vdwg.mxu0
        %1689 = vrot.lane.b32.xlu0 %v1162, 32
        %v1690 = vpop.permute.xlu0 %1689
        %1691 = vrot.lane.b32.xlu0 %v1163, 32
        %v1692 = vpop.permute.xlu0 %1691
        %1693 = vrot.lane.b32.xlu0 %v1164, 32
        %v1694 = vpop.permute.xlu0 %1693
        %1695 = vrot.lane.b32.xlu0 %v1165, 32
        %v1696 = vpop.permute.xlu0 %1695
        %v1698 = vsel %vm1168, %v1690, 0
        %v1701 = vsel %vm1168, %v1692, 0
        %v1704 = vsel %vm1168, %v1694, 0
        %v1707 = vsel %vm1168, %v1696, 0
        %1709 = vmatprep.subr.bf16.mxu0 0
        %1710 = vmatpush1.bf16.xpose.msra.mxu0 0
        %1711 = vmatprep.subr.bf16.mxu0 0
        %1712 = vmatpush1.bf16.xpose.msra.mxu0 0
        %1713 = vmatprep.subr.bf16.mxu0 0
        %1714 = vmatpush1.bf16.xpose.msra.mxu0 0
        %1715 = vmatprep.subr.bf16.mxu0 0
        %1716 = vmatpush1.bf16.xpose.msra.mxu0 0
        %1717 = vmatprep.subr.bf16.mxu0 0
        %1718 = vmatpush1.bf16.xpose.msra.mxu0 0
        %1719 = vmatprep.subr.bf16.mxu0 0
        %1720 = vmatpush1.bf16.xpose.msra.mxu0 0
        %1721 = vmatprep.subr.bf16.mxu0 0
        %1722 = vmatpush1.bf16.xpose.msra.mxu0 %v1707
        %1723 = vmatprep.subr.bf16.mxu0 0
        %1724 = vmatpush1.bf16.xpose.msra.mxu0 %v1704
        %1725 = vmatprep.subr.bf16.mxu0 0
        %1726 = vmatpush2.bf16.xpose.msra.mxu0 0
        %1727 = vmatprep.subr.bf16.mxu0 0
        %1728 = vmatpush2.bf16.xpose.msra.mxu0 0
        %1729 = vmatprep.subr.bf16.mxu0 0
        %1730 = vmatpush2.bf16.xpose.msra.mxu0 0
        %1731 = vmatprep.subr.bf16.mxu0 0
        %1732 = vmatpush2.bf16.xpose.msra.mxu0 0
        %1733 = vmatprep.subr.bf16.mxu0 0
        %1734 = vmatpush2.bf16.xpose.msra.mxu0 0
        %1735 = vmatprep.subr.bf16.mxu0 0
        %1736 = vmatpush2.bf16.xpose.msra.mxu0 0
        %1737 = vmatprep.subr.bf16.mxu0 0
        %1738 = vmatpush2.bf16.xpose.msra.mxu0 0
        %1739 = vmatprep.subr.bf16.mxu0 0
        %1740 = vmatpush2.bf16.xpose.msra.mxu0 0
        %1741 = vmatprep.mubr.bf16.mxu0 0
        %1742 = vmatmul.mubr.bf16.gmra.mxu0 %v1698
        %v1743 = vpop.f32.mrf.mxu0
        %v1744 = vadd.f32 %v764, %v1743
        %v1745 = vpop.f32.mrf.mxu0
        %v1746 = vpop.f32.mrf.mxu0
        %v1747 = vadd.f32 %v765, %v1746
        %v1748 = vpop.f32.mrf.mxu0
        %1749 = vmatprep.mubr.bf16.mxu0 0
        %1750 = vmatmul.mubr.bf16.gmra.mxu0 %v1701
        %v1751 = vpop.f32.mrf.mxu0
        %v1752 = vadd.f32 %v766, %v1751
        %v1753 = vpop.f32.mrf.mxu0
        %v1754 = vpop.f32.mrf.mxu0
        %v1755 = vadd.f32 %v767, %v1754
        %v1756 = vpop.f32.mrf.mxu0
        %1757 = vdwg.mxu0
        %v1758 = vsel %vm1168, %v1744, -inf
        %1759 = vmax.xlane.f32.xlu0 %v1758
        %v1760 = vpop.xlane.xlu0 %1759
        %v1761 = vsel %vm1168, %v1747, -inf
        %1762 = vmax.xlane.f32.xlu0 %v1761
        %v1763 = vpop.xlane.xlu0 %1762
        %v1764 = vsel %vm1168, %v1752, -inf
        %1765 = vmax.xlane.f32.xlu0 %v1764
        %v1766 = vpop.xlane.xlu0 %1765
        %v1767 = vsel %vm1168, %v1755, -inf
        %1768 = vmax.xlane.f32.xlu0 %v1767
        %v1769 = vpop.xlane.xlu0 %1768
        %v1770 = vsub.f32 %v1744, %v1760
        %v1771 = vsub.f32 %v1747, %v1763
        %v1772 = vsub.f32 %v1752, %v1766
        %v1773 = vsub.f32 %v1755, %v1769
        %v1774 = vmul.f32 %v1770, 1.442695
        %v1775 = vpow.pop %v1774
        %v1776 = vmul.f32 %v1771, 1.442695
        %v1777 = vpow.pop %v1776
        %v1778 = vmul.f32 %v1772, 1.442695
        %v1779 = vpow.pop %v1778
        %v1780 = vmul.f32 %v1773, 1.442695
        %v1781 = vpow.pop %v1780
        %v1782 = vsel %vm1168, %v1775, 0.0
        %1783 = vadd.xlane.f32.xlu0 %v1782
        %v1784 = vpop.xlane.xlu0 %1783
        %v1785 = vsel %vm1168, %v1777, 0.0
        %1786 = vadd.xlane.f32.xlu0 %v1785
        %v1787 = vpop.xlane.xlu0 %1786
        %v1788 = vsel %vm1168, %v1779, 0.0
        %1789 = vadd.xlane.f32.xlu0 %v1788
        %v1790 = vpop.xlane.xlu0 %1789
        %v1791 = vsel %vm1168, %v1781, 0.0
        %1792 = vadd.xlane.f32.xlu0 %v1791
        %v1793 = vpop.xlane.xlu0 %1792
        %v1794 = vrcp.pop %v1784
        %v1795 = vrcp.pop %v1787
        %v1796 = vrcp.pop %v1790
        %v1797 = vrcp.pop %v1793
        %v1798 = vmul.f32 %v1775, %v1794
        %v1799 = vmul.f32 %v1777, %v1795
        %v1800 = vmul.f32 %v1779, %v1796
        %v1801 = vmul.f32 %v1781, %v1797
        %v1802 = vpack.c.bf16 %v1799, %v1798
        %v1803 = vpack.c.bf16 %v1801, %v1800
        %1804 = vrot.lane.b32.xlu0 %v1166, 32
        %v1805 = vpop.permute.xlu0 %1804
        %1806 = vrot.lane.b32.xlu0 %v1167, 32
        %v1807 = vpop.permute.xlu0 %1806
        %v1811 = vsel %vm1168, %v1802, 0
        %v1814 = vsel %vm1168, %v1803, 0
        %1816 = vmatprep.subr.bf16.mxu0 0
        %1817 = vmatpush1.bf16.msra.mxu0 0
        %1818 = vmatprep.subr.bf16.mxu0 0
        %1819 = vmatpush1.bf16.msra.mxu0 0
        %1820 = vmatprep.subr.bf16.mxu0 0
        %1821 = vmatpush1.bf16.msra.mxu0 0
        %1822 = vmatprep.subr.bf16.mxu0 0
        %1823 = vmatpush1.bf16.msra.mxu0 0
        %1824 = vmatprep.subr.bf16.mxu0 0
        %1825 = vmatpush1.bf16.msra.mxu0 0
        %1826 = vmatprep.subr.bf16.mxu0 0
        %1827 = vmatpush1.bf16.msra.mxu0 0
        %1828 = vmatprep.subr.bf16.mxu0 0
        %1829 = vmatpush1.bf16.msra.mxu0 %v1807
        %1830 = vmatprep.subr.bf16.mxu0 0
        %1831 = vmatpush1.bf16.msra.mxu0 %v1805
        %1832 = vmatprep.subr.bf16.mxu0 0
        %1833 = vmatpush2.bf16.msra.mxu0 0
        %1834 = vmatprep.subr.bf16.mxu0 0
        %1835 = vmatpush2.bf16.msra.mxu0 0
        %1836 = vmatprep.subr.bf16.mxu0 0
        %1837 = vmatpush2.bf16.msra.mxu0 0
        %1838 = vmatprep.subr.bf16.mxu0 0
        %1839 = vmatpush2.bf16.msra.mxu0 0
        %1840 = vmatprep.subr.bf16.mxu0 0
        %1841 = vmatpush2.bf16.msra.mxu0 0
        %1842 = vmatprep.subr.bf16.mxu0 0
        %1843 = vmatpush2.bf16.msra.mxu0 0
        %1844 = vmatprep.subr.bf16.mxu0 0
        %1845 = vmatpush2.bf16.msra.mxu0 0
        %1846 = vmatprep.subr.bf16.mxu0 0
        %1847 = vmatpush2.bf16.msra.mxu0 0
        %1848 = vmatprep.mubr.bf16.mxu0 0
        %1849 = vmatmul.mubr.bf16.gmra.mxu0 %v1811
        %v1850 = vpop.f32.mrf.mxu0
        %v1851 = vadd.f32 0.0, %v1850
        %v1852 = vpop.f32.mrf.mxu0
        %v1853 = vpop.f32.mrf.mxu0
        %v1854 = vadd.f32 0.0, %v1853
        %v1855 = vpop.f32.mrf.mxu0
        %1856 = vmatprep.mubr.bf16.mxu0 0
        %1857 = vmatmul.mubr.bf16.gmra.mxu0 %v1814
        %v1858 = vpop.f32.mrf.mxu0
        %v1859 = vadd.f32 0.0, %v1858
        %v1860 = vpop.f32.mrf.mxu0
        %v1861 = vpop.f32.mrf.mxu0
        %v1862 = vadd.f32 0.0, %v1861
        %v1863 = vpop.f32.mrf.mxu0
        %1864 = vdwg.mxu0
        %1869 = vrot.lane.b32.xlu0 %v1499, 32
        %v1870 = vpop.permute.xlu0 %1869
        %1871 = vrot.lane.b32.xlu0 %v1502, 32
        %v1872 = vpop.permute.xlu0 %1871
        %1873 = vrot.lane.b32.xlu0 %v1507, 32
        %v1874 = vpop.permute.xlu0 %1873
        %1875 = vrot.lane.b32.xlu0 %v1510, 32
        %v1876 = vpop.permute.xlu0 %1875
        %1885 = vrot.lane.b32.xlu0 %v1675, 64
        %v1886 = vpop.permute.xlu0 %1885
        %1887 = vrot.lane.b32.xlu0 %v1678, 64
        %v1888 = vpop.permute.xlu0 %1887
        %1889 = vrot.lane.b32.xlu0 %v1683, 64
        %v1890 = vpop.permute.xlu0 %1889
        %1891 = vrot.lane.b32.xlu0 %v1686, 64
        %v1892 = vpop.permute.xlu0 %1891
        %1901 = vrot.lane.b32.xlu0 %v1851, 96
        %v1902 = vpop.permute.xlu0 %1901
        %1903 = vrot.lane.b32.xlu0 %v1854, 96
        %v1904 = vpop.permute.xlu0 %1903
        %1905 = vrot.lane.b32.xlu0 %v1859, 96
        %v1906 = vpop.permute.xlu0 %1905
        %1907 = vrot.lane.b32.xlu0 %v1862, 96
        %v1908 = vpop.permute.xlu0 %1907
        %v1913 = vsel %vm1168, %v1317, %v1870
        %v1914 = vsel %vm1168, %v1320, %v1872
        %v1915 = vsel %vm1168, %v1325, %v1874
        %v1916 = vsel %vm1168, %v1328, %v1876
        %vm1917 = vcmask 523264
        %v1918 = vsel %vm1917, %v1913, %v1886
        %v1919 = vsel %vm1917, %v1914, %v1888
        %v1920 = vsel %vm1917, %v1915, %v1890
        %v1921 = vsel %vm1917, %v1916, %v1892
        %vm1922 = vcmask 785408
        %v1923 = vsel %vm1922, %v1918, %v1902
        %v1924 = vsel %vm1922, %v1919, %v1904
        %v1925 = vsel %vm1922, %v1920, %v1906
        %v1926 = vsel %vm1922, %v1921, %v1908
        %v1927 = vpack.c.bf16 %v1924, %v1923
        %v1928 = vpack.c.bf16 %v1926, %v1925
        %s1929 = smul.u32 %s42, 16
        %s1930 = smul.addr %s1929, 4
        %s1931 = scalar_lea.vmem [#allocation12], %s1930
        %v1932 = vld [vmem:[%s1931] sm:$0xf]
        %v1933 = vld [vmem:[%s1931 + $0x4] sm:$0xf]
        %v1934 = vld [vmem:[%s1931 + $0x8] sm:$0xf]
        %v1935 = vld [vmem:[%s1931 + $0xc] sm:$0xf]
        %v1936 = vld [vmem:[%s1931 + $0x10] sm:$0xf]
        %v1937 = vld [vmem:[%s1931 + $0x14] sm:$0xf]
        %v1938 = vld [vmem:[%s1931 + $0x18] sm:$0xf]
        %v1939 = vld [vmem:[%s1931 + $0x1c] sm:$0xf]
        %v1940 = vld [vmem:[%s1931 + $0x20] sm:$0xf]
        %v1941 = vld [vmem:[%s1931 + $0x24] sm:$0xf]
        %v1942 = vld [vmem:[%s1931 + $0x28] sm:$0xf]
        %v1943 = vld [vmem:[%s1931 + $0x2c] sm:$0xf]
        %v1944 = vld [vmem:[%s1931 + $0x30] sm:$0xf]
        %v1945 = vld [vmem:[%s1931 + $0x34] sm:$0xf]
        %v1946 = vld [vmem:[%s1931 + $0x38] sm:$0xf]
        %v1947 = vld [vmem:[%s1931 + $0x3c] sm:$0xf]
        %s1948 = scalar_lea.vmem %s8, %s42
        %v1949 = vld [vmem:[%s1948] sm:$0x1]
        %v1951 = vlaneseq
        %v1952 = vshrl.u32 %v1951, 7
        %v1953 = vsub.s32 0, %v1952
        %v1954 = vrot.slane %v1949, %v1953
        %v1972 = vunpack.c.l.b16 %v1932
        %v1973 = vunpack.c.l.b16 %v1933
        %v1974 = vunpack.c.l.b16 %v1934
        %v1975 = vunpack.c.l.b16 %v1935
        %v1976 = vunpack.c.l.b16 %v1936
        %v1977 = vunpack.c.l.b16 %v1937
        %v1978 = vunpack.c.l.b16 %v1938
        %v1979 = vunpack.c.l.b16 %v1939
        %v1980 = vunpack.c.l.b16 %v1940
        %v1981 = vunpack.c.l.b16 %v1941
        %v1982 = vunpack.c.l.b16 %v1942
        %v1983 = vunpack.c.l.b16 %v1943
        %v1984 = vunpack.c.l.b16 %v1944
        %v1985 = vunpack.c.l.b16 %v1945
        %v1986 = vunpack.c.l.b16 %v1946
        %v1987 = vunpack.c.l.b16 %v1947
        %v1988 = vpack.c.b16 %v1973, %v1972
        %v1989 = vpack.c.b16 %v1975, %v1974
        %v1990 = vpack.c.b16 %v1977, %v1976
        %v1991 = vpack.c.b16 %v1979, %v1978
        %v1992 = vpack.c.b16 %v1981, %v1980
        %v1993 = vpack.c.b16 %v1983, %v1982
        %v1994 = vpack.c.b16 %v1985, %v1984
        %v1995 = vpack.c.b16 %v1987, %v1986
        %2004 = vmatprep.subr.bf16.mxu0 0
        %2005 = vmatpush1.bf16.msra.mxu0 %v1995
        %2006 = vmatprep.subr.bf16.mxu0 0
        %2007 = vmatpush1.bf16.msra.mxu0 %v1994
        %2008 = vmatprep.subr.bf16.mxu0 0
        %2009 = vmatpush1.bf16.msra.mxu0 %v1993
        %2010 = vmatprep.subr.bf16.mxu0 0
        %2011 = vmatpush1.bf16.msra.mxu0 %v1992
        %2012 = vmatprep.subr.bf16.mxu0 0
        %2013 = vmatpush1.bf16.msra.mxu0 %v1991
        %2014 = vmatprep.subr.bf16.mxu0 0
        %2015 = vmatpush1.bf16.msra.mxu0 %v1990
        %2016 = vmatprep.subr.bf16.mxu0 0
        %2017 = vmatpush1.bf16.msra.mxu0 %v1989
        %2018 = vmatprep.subr.bf16.mxu0 0
        %2019 = vmatpush1.bf16.msra.mxu0 %v1988
        %2020 = vmatprep.subr.bf16.mxu0 0
        %2021 = vmatpush2.bf16.msra.mxu0 0
        %2022 = vmatprep.subr.bf16.mxu0 0
        %2023 = vmatpush2.bf16.msra.mxu0 0
        %2024 = vmatprep.subr.bf16.mxu0 0
        %2025 = vmatpush2.bf16.msra.mxu0 0
        %2026 = vmatprep.subr.bf16.mxu0 0
        %2027 = vmatpush2.bf16.msra.mxu0 0
        %2028 = vmatprep.subr.bf16.mxu0 0
        %2029 = vmatpush2.bf16.msra.mxu0 0
        %2030 = vmatprep.subr.bf16.mxu0 0
        %2031 = vmatpush2.bf16.msra.mxu0 0
        %2032 = vmatprep.subr.bf16.mxu0 0
        %2033 = vmatpush2.bf16.msra.mxu0 0
        %2034 = vmatprep.subr.bf16.mxu0 0
        %2035 = vmatpush2.bf16.msra.mxu0 0
        %2036 = vmatprep.mubr.bf16.mxu0 0
        %2037 = vmatmul.mubr.bf16.gmra.mxu0 %v1927
        %v2038 = vpop.f32.mrf.mxu0
        %v2039 = vadd.f32 %v1954, %v2038
        %v2040 = vpop.f32.mrf.mxu0
        %v2041 = vpop.f32.mrf.mxu0
        %v2042 = vadd.f32 %v1954, %v2041
        %v2043 = vpop.f32.mrf.mxu0
        %2044 = vmatprep.mubr.bf16.mxu0 0
        %2045 = vmatmul.mubr.bf16.gmra.mxu0 %v1928
        %v2046 = vpop.f32.mrf.mxu0
        %v2047 = vadd.f32 %v1954, %v2046
        %v2048 = vpop.f32.mrf.mxu0
        %v2049 = vpop.f32.mrf.mxu0
        %v2050 = vadd.f32 %v1954, %v2049
        %v2051 = vpop.f32.mrf.mxu0
        %2052 = vdwg.mxu0
        %v2053 = vadd.f32 %v760, %v2039
        %v2054 = vadd.f32 %v761, %v2042
        %v2055 = vadd.f32 %v762, %v2047
        %v2056 = vadd.f32 %v763, %v2050
        %s2057 = scalar_lea.vmem %s9, %s42
        %v2058 = vld [vmem:[%s2057] sm:$0x1]
        %s2059 = scalar_lea.vmem %s10, %s42
        %v2060 = vld [vmem:[%s2059] sm:$0x1]
        %2061 = vadd.xlane.f32.xlu0 %v2053
        %v2062 = vpop.xlane.xlu0 %2061
        %2063 = vadd.xlane.f32.xlu0 %v2054
        %v2064 = vpop.xlane.xlu0 %2063
        %2065 = vadd.xlane.f32.xlu0 %v2055
        %v2066 = vpop.xlane.xlu0 %2065
        %2067 = vadd.xlane.f32.xlu0 %v2056
        %v2068 = vpop.xlane.xlu0 %2067
        %v2069 = vmul.f32 %v2053, %v2053
        %v2070 = vmul.f32 %v2054, %v2054
        %v2071 = vmul.f32 %v2055, %v2055
        %v2072 = vmul.f32 %v2056, %v2056
        %2073 = vadd.xlane.f32.xlu0 %v2069
        %v2074 = vpop.xlane.xlu0 %2073
        %2075 = vadd.xlane.f32.xlu0 %v2070
        %v2076 = vpop.xlane.xlu0 %2075
        %2077 = vadd.xlane.f32.xlu0 %v2071
        %v2078 = vpop.xlane.xlu0 %2077
        %2079 = vadd.xlane.f32.xlu0 %v2072
        %v2080 = vpop.xlane.xlu0 %2079
        %v2081 = vmul.f32 %v2062, 0.0078125
        %v2082 = vmul.f32 %v2064, 0.0078125
        %v2083 = vmul.f32 %v2066, 0.0078125
        %v2084 = vmul.f32 %v2068, 0.0078125
        %v2085 = vmul.f32 %v2062, %v2081
        %v2086 = vmul.f32 %v2064, %v2082
        %v2087 = vmul.f32 %v2066, %v2083
        %v2088 = vmul.f32 %v2068, %v2084
        %v2089 = vsub.f32 %v2074, %v2085
        %v2090 = vsub.f32 %v2076, %v2086
        %v2091 = vsub.f32 %v2078, %v2087
        %v2092 = vsub.f32 %v2080, %v2088
        %v2093 = vmul.f32 %v2089, 0.007874016
        %v2094 = vmul.f32 %v2090, 0.007874016
        %v2095 = vmul.f32 %v2091, 0.007874016
        %v2096 = vmul.f32 %v2092, 0.007874016
        %v2097 = vmax.f32 %v2093, 0.0
        %v2098 = vmax.f32 %v2094, 0.0
        %v2099 = vmax.f32 %v2095, 0.0
        %v2100 = vmax.f32 %v2096, 0.0
        %v2101 = vrsqrt.pop %v2097
        %v2102 = vmul.f32 %v2097, %v2101
        %vm2103 = vcmp.eq.f32.partialorder %v2097, inf
        %v2104 = vsel %vm2103, %v2097, %v2102
        %vm2105 = vcmp.eq.f32.partialorder %v2097, 0.0
        %v2106 = vand.u32 %v2097, 2147483648
        %v2107 = vsel %vm2105, %v2106, %v2104
        %v2108 = vrsqrt.pop %v2098
        %v2109 = vmul.f32 %v2098, %v2108
        %vm2110 = vcmp.eq.f32.partialorder %v2098, inf
        %v2111 = vsel %vm2110, %v2098, %v2109
        %vm2112 = vcmp.eq.f32.partialorder %v2098, 0.0
        %v2113 = vand.u32 %v2098, 2147483648
        %v2114 = vsel %vm2112, %v2113, %v2111
        %v2115 = vrsqrt.pop %v2099
        %v2116 = vmul.f32 %v2099, %v2115
        %vm2117 = vcmp.eq.f32.partialorder %v2099, inf
        %v2118 = vsel %vm2117, %v2099, %v2116
        %vm2119 = vcmp.eq.f32.partialorder %v2099, 0.0
        %v2120 = vand.u32 %v2099, 2147483648
        %v2121 = vsel %vm2119, %v2120, %v2118
        %v2122 = vrsqrt.pop %v2100
        %v2123 = vmul.f32 %v2100, %v2122
        %vm2124 = vcmp.eq.f32.partialorder %v2100, inf
        %v2125 = vsel %vm2124, %v2100, %v2123
        %vm2126 = vcmp.eq.f32.partialorder %v2100, 0.0
        %v2127 = vand.u32 %v2100, 2147483648
        %v2128 = vsel %vm2126, %v2127, %v2125
        %v2129 = vadd.f32 %v2107, 1e-06
        %v2130 = vadd.f32 %v2114, 1e-06
        %v2131 = vadd.f32 %v2121, 1e-06
        %v2132 = vadd.f32 %v2128, 1e-06
        %v2133 = vrcp.pop %v2129
        %v2134 = vrcp.pop %v2130
        %v2135 = vrcp.pop %v2131
        %v2136 = vrcp.pop %v2132
        %v2137 = vsub.f32 %v2053, %v2081
        %v2138 = vsub.f32 %v2054, %v2082
        %v2139 = vsub.f32 %v2055, %v2083
        %v2140 = vsub.f32 %v2056, %v2084
        %v2142 = vlaneseq
        %v2143 = vshrl.u32 %v2142, 7
        %v2144 = vsub.s32 0, %v2143
        %v2145 = vrot.slane %v2058, %v2144
        %v2147 = vmul.f32 %v2145, %v2133
        %v2148 = vmul.f32 %v2145, %v2134
        %v2149 = vmul.f32 %v2145, %v2135
        %v2150 = vmul.f32 %v2145, %v2136
        %v2151 = vmul.f32 %v2137, %v2147
        %v2152 = vmul.f32 %v2138, %v2148
        %v2153 = vmul.f32 %v2139, %v2149
        %v2154 = vmul.f32 %v2140, %v2150
        %v2156 = vlaneseq
        %v2157 = vshrl.u32 %v2156, 7
        %v2158 = vsub.s32 0, %v2157
        %v2159 = vrot.slane %v2060, %v2158
        %v2161 = vadd.f32 %v2151, %v2159
        %v2162 = vadd.f32 %v2152, %v2159
        %v2163 = vadd.f32 %v2153, %v2159
        %v2164 = vadd.f32 %v2154, %v2159
        %v2165 = vpack.c.bf16 %v2162, %v2161
        %v2166 = vpack.c.bf16 %v2164, %v2163
        %s2167 = smul.u32 %s42, 32
        %s2168 = smul.addr %s2167, 4
        %s2169 = scalar_lea.vmem [#allocation13], %s2168
        %v2170 = vld [vmem:[%s2169] sm:$0xff]
        %v2171 = vld [vmem:[%s2169 + $0x8] sm:$0xff]
        %v2172 = vld [vmem:[%s2169 + $0x10] sm:$0xff]
        %v2173 = vld [vmem:[%s2169 + $0x18] sm:$0xff]
        %v2174 = vld [vmem:[%s2169 + $0x20] sm:$0xff]
        %v2175 = vld [vmem:[%s2169 + $0x28] sm:$0xff]
        %v2176 = vld [vmem:[%s2169 + $0x30] sm:$0xff]
        %v2177 = vld [vmem:[%s2169 + $0x38] sm:$0xff]
        %v2178 = vld [vmem:[%s2169 + $0x40] sm:$0xff]
        %v2179 = vld [vmem:[%s2169 + $0x48] sm:$0xff]
        %v2180 = vld [vmem:[%s2169 + $0x50] sm:$0xff]
        %v2181 = vld [vmem:[%s2169 + $0x58] sm:$0xff]
        %v2182 = vld [vmem:[%s2169 + $0x60] sm:$0xff]
        %v2183 = vld [vmem:[%s2169 + $0x68] sm:$0xff]
        %v2184 = vld [vmem:[%s2169 + $0x70] sm:$0xff]
        %v2185 = vld [vmem:[%s2169 + $0x78] sm:$0xff]
        %s2186 = smul.u32 %s42, 2
        %s2187 = scalar_lea.vmem %s12, %s2186
        %v2188 = vld [vmem:[%s2187] sm:$0x3]
        %v2190 = vlaneseq
        %v2191 = vshrl.u32 %v2190, 7
        %v2192 = vsub.s32 0, %v2191
        %v2193 = vrot.slane %v2188, %v2192
        %v2194 = vlaneseq
        %v2195 = vshrl.u32 %v2194, 7
        %v2196 = vsub.s32 1, %v2195
        %v2197 = vrot.slane %v2188, %v2196
        %v2216 = vunpack.c.l.b16 %v2170
        %v2217 = vunpack.c.h.b16 %v2170
        %v2218 = vunpack.c.l.b16 %v2171
        %v2219 = vunpack.c.h.b16 %v2171
        %v2220 = vunpack.c.l.b16 %v2172
        %v2221 = vunpack.c.h.b16 %v2172
        %v2222 = vunpack.c.l.b16 %v2173
        %v2223 = vunpack.c.h.b16 %v2173
        %v2224 = vunpack.c.l.b16 %v2174
        %v2225 = vunpack.c.h.b16 %v2174
        %v2226 = vunpack.c.l.b16 %v2175
        %v2227 = vunpack.c.h.b16 %v2175
        %v2228 = vunpack.c.l.b16 %v2176
        %v2229 = vunpack.c.h.b16 %v2176
        %v2230 = vunpack.c.l.b16 %v2177
        %v2231 = vunpack.c.h.b16 %v2177
        %v2232 = vunpack.c.l.b16 %v2178
        %v2233 = vunpack.c.h.b16 %v2178
        %v2234 = vunpack.c.l.b16 %v2179
        %v2235 = vunpack.c.h.b16 %v2179
        %v2236 = vunpack.c.l.b16 %v2180
        %v2237 = vunpack.c.h.b16 %v2180
        %v2238 = vunpack.c.l.b16 %v2181
        %v2239 = vunpack.c.h.b16 %v2181
        %v2240 = vunpack.c.l.b16 %v2182
        %v2241 = vunpack.c.h.b16 %v2182
        %v2242 = vunpack.c.l.b16 %v2183
        %v2243 = vunpack.c.h.b16 %v2183
        %v2244 = vunpack.c.l.b16 %v2184
        %v2245 = vunpack.c.h.b16 %v2184
        %v2246 = vunpack.c.l.b16 %v2185
        %v2247 = vunpack.c.h.b16 %v2185
        %v2248 = vpack.c.b16 %v2218, %v2216
        %v2249 = vpack.c.b16 %v2219, %v2217
        %v2250 = vpack.c.b16 %v2222, %v2220
        %v2251 = vpack.c.b16 %v2223, %v2221
        %v2252 = vpack.c.b16 %v2226, %v2224
        %v2253 = vpack.c.b16 %v2227, %v2225
        %v2254 = vpack.c.b16 %v2230, %v2228
        %v2255 = vpack.c.b16 %v2231, %v2229
        %v2256 = vpack.c.b16 %v2234, %v2232
        %v2257 = vpack.c.b16 %v2235, %v2233
        %v2258 = vpack.c.b16 %v2238, %v2236
        %v2259 = vpack.c.b16 %v2239, %v2237
        %v2260 = vpack.c.b16 %v2242, %v2240
        %v2261 = vpack.c.b16 %v2243, %v2241
        %v2262 = vpack.c.b16 %v2246, %v2244
        %v2263 = vpack.c.b16 %v2247, %v2245
        %2280 = vmatprep.subr.bf16.mxu0 %v2263
        %2281 = vmatpush1.bf16.msra.mxu0 %v2262
        %2282 = vmatprep.subr.bf16.mxu0 %v2261
        %2283 = vmatpush1.bf16.msra.mxu0 %v2260
        %2284 = vmatprep.subr.bf16.mxu0 %v2259
        %2285 = vmatpush1.bf16.msra.mxu0 %v2258
        %2286 = vmatprep.subr.bf16.mxu0 %v2257
        %2287 = vmatpush1.bf16.msra.mxu0 %v2256
        %2288 = vmatprep.subr.bf16.mxu0 %v2255
        %2289 = vmatpush1.bf16.msra.mxu0 %v2254
        %2290 = vmatprep.subr.bf16.mxu0 %v2253
        %2291 = vmatpush1.bf16.msra.mxu0 %v2252
        %2292 = vmatprep.subr.bf16.mxu0 %v2251
        %2293 = vmatpush1.bf16.msra.mxu0 %v2250
        %2294 = vmatprep.subr.bf16.mxu0 %v2249
        %2295 = vmatpush1.bf16.msra.mxu0 %v2248
        %2296 = vmatprep.subr.bf16.mxu0 0
        %2297 = vmatpush2.bf16.msra.mxu0 0
        %2298 = vmatprep.subr.bf16.mxu0 0
        %2299 = vmatpush2.bf16.msra.mxu0 0
        %2300 = vmatprep.subr.bf16.mxu0 0
        %2301 = vmatpush2.bf16.msra.mxu0 0
        %2302 = vmatprep.subr.bf16.mxu0 0
        %2303 = vmatpush2.bf16.msra.mxu0 0
        %2304 = vmatprep.subr.bf16.mxu0 0
        %2305 = vmatpush2.bf16.msra.mxu0 0
        %2306 = vmatprep.subr.bf16.mxu0 0
        %2307 = vmatpush2.bf16.msra.mxu0 0
        %2308 = vmatprep.subr.bf16.mxu0 0
        %2309 = vmatpush2.bf16.msra.mxu0 0
        %2310 = vmatprep.subr.bf16.mxu0 0
        %2311 = vmatpush2.bf16.msra.mxu0 0
        %2312 = vmatprep.mubr.bf16.mxu0 0
        %2313 = vmatmul.mubr.bf16.gmra.mxu0 %v2165
        %v2314 = vpop.f32.mrf.mxu0
        %v2315 = vadd.f32 %v2193, %v2314
        %v2316 = vpop.f32.mrf.mxu0
        %v2317 = vadd.f32 %v2197, %v2316
        %v2318 = vpop.f32.mrf.mxu0
        %v2319 = vadd.f32 %v2193, %v2318
        %v2320 = vpop.f32.mrf.mxu0
        %v2321 = vadd.f32 %v2197, %v2320
        %2322 = vmatprep.mubr.bf16.mxu0 0
        %2323 = vmatmul.mubr.bf16.gmra.mxu0 %v2166
        %v2324 = vpop.f32.mrf.mxu0
        %v2325 = vadd.f32 %v2193, %v2324
        %v2326 = vpop.f32.mrf.mxu0
        %v2327 = vadd.f32 %v2197, %v2326
        %v2328 = vpop.f32.mrf.mxu0
        %v2329 = vadd.f32 %v2193, %v2328
        %v2330 = vpop.f32.mrf.mxu0
        %v2331 = vadd.f32 %v2197, %v2330
        %2332 = vdwg.mxu0
        %v2333 = vmax.f32 %v2315, 0.0
        %v2334 = vmax.f32 %v2317, 0.0
        %v2335 = vmax.f32 %v2319, 0.0
        %v2336 = vmax.f32 %v2321, 0.0
        %v2337 = vmax.f32 %v2325, 0.0
        %v2338 = vmax.f32 %v2327, 0.0
        %v2339 = vmax.f32 %v2329, 0.0
        %v2340 = vmax.f32 %v2331, 0.0
        %v2341 = vpack.c.bf16 %v2335, %v2333
        %v2342 = vpack.c.bf16 %v2336, %v2334
        %v2343 = vpack.c.bf16 %v2339, %v2337
        %v2344 = vpack.c.bf16 %v2340, %v2338
        %s2345 = smul.addr %s2167, 4
        %s2346 = scalar_lea.vmem [#allocation15], %s2345
        %v2347 = vld [vmem:[%s2346] sm:$0xf]
        %v2348 = vld [vmem:[%s2346 + $0x4] sm:$0xf]
        %v2349 = vld [vmem:[%s2346 + $0x8] sm:$0xf]
        %v2350 = vld [vmem:[%s2346 + $0xc] sm:$0xf]
        %v2351 = vld [vmem:[%s2346 + $0x10] sm:$0xf]
        %v2352 = vld [vmem:[%s2346 + $0x14] sm:$0xf]
        %v2353 = vld [vmem:[%s2346 + $0x18] sm:$0xf]
        %v2354 = vld [vmem:[%s2346 + $0x1c] sm:$0xf]
        %v2355 = vld [vmem:[%s2346 + $0x20] sm:$0xf]
        %v2356 = vld [vmem:[%s2346 + $0x24] sm:$0xf]
        %v2357 = vld [vmem:[%s2346 + $0x28] sm:$0xf]
        %v2358 = vld [vmem:[%s2346 + $0x2c] sm:$0xf]
        %v2359 = vld [vmem:[%s2346 + $0x30] sm:$0xf]
        %v2360 = vld [vmem:[%s2346 + $0x34] sm:$0xf]
        %v2361 = vld [vmem:[%s2346 + $0x38] sm:$0xf]
        %v2362 = vld [vmem:[%s2346 + $0x3c] sm:$0xf]
        %v2363 = vld [vmem:[%s2346 + $0x40] sm:$0xf]
        %v2364 = vld [vmem:[%s2346 + $0x44] sm:$0xf]
        %v2365 = vld [vmem:[%s2346 + $0x48] sm:$0xf]
        %v2366 = vld [vmem:[%s2346 + $0x4c] sm:$0xf]
        %v2367 = vld [vmem:[%s2346 + $0x50] sm:$0xf]
        %v2368 = vld [vmem:[%s2346 + $0x54] sm:$0xf]
        %v2369 = vld [vmem:[%s2346 + $0x58] sm:$0xf]
        %v2370 = vld [vmem:[%s2346 + $0x5c] sm:$0xf]
        %v2371 = vld [vmem:[%s2346 + $0x60] sm:$0xf]
        %v2372 = vld [vmem:[%s2346 + $0x64] sm:$0xf]
        %v2373 = vld [vmem:[%s2346 + $0x68] sm:$0xf]
        %v2374 = vld [vmem:[%s2346 + $0x6c] sm:$0xf]
        %v2375 = vld [vmem:[%s2346 + $0x70] sm:$0xf]
        %v2376 = vld [vmem:[%s2346 + $0x74] sm:$0xf]
        %v2377 = vld [vmem:[%s2346 + $0x78] sm:$0xf]
        %v2378 = vld [vmem:[%s2346 + $0x7c] sm:$0xf]
        %s2379 = scalar_lea.vmem %s14, %s42
        %v2380 = vld [vmem:[%s2379] sm:$0x1]
        %v2382 = vlaneseq
        %v2383 = vshrl.u32 %v2382, 7
        %v2384 = vsub.s32 0, %v2383
        %v2385 = vrot.slane %v2380, %v2384
        %v2419 = vunpack.c.l.b16 %v2347
        %v2420 = vunpack.c.l.b16 %v2348
        %v2421 = vunpack.c.l.b16 %v2349
        %v2422 = vunpack.c.l.b16 %v2350
        %v2423 = vunpack.c.l.b16 %v2351
        %v2424 = vunpack.c.l.b16 %v2352
        %v2425 = vunpack.c.l.b16 %v2353
        %v2426 = vunpack.c.l.b16 %v2354
        %v2427 = vunpack.c.l.b16 %v2355
        %v2428 = vunpack.c.l.b16 %v2356
        %v2429 = vunpack.c.l.b16 %v2357
        %v2430 = vunpack.c.l.b16 %v2358
        %v2431 = vunpack.c.l.b16 %v2359
        %v2432 = vunpack.c.l.b16 %v2360
        %v2433 = vunpack.c.l.b16 %v2361
        %v2434 = vunpack.c.l.b16 %v2362
        %v2435 = vunpack.c.l.b16 %v2363
        %v2436 = vunpack.c.l.b16 %v2364
        %v2437 = vunpack.c.l.b16 %v2365
        %v2438 = vunpack.c.l.b16 %v2366
        %v2439 = vunpack.c.l.b16 %v2367
        %v2440 = vunpack.c.l.b16 %v2368
        %v2441 = vunpack.c.l.b16 %v2369
        %v2442 = vunpack.c.l.b16 %v2370
        %v2443 = vunpack.c.l.b16 %v2371
        %v2444 = vunpack.c.l.b16 %v2372
        %v2445 = vunpack.c.l.b16 %v2373
        %v2446 = vunpack.c.l.b16 %v2374
        %v2447 = vunpack.c.l.b16 %v2375
        %v2448 = vunpack.c.l.b16 %v2376
        %v2449 = vunpack.c.l.b16 %v2377
        %v2450 = vunpack.c.l.b16 %v2378
        %v2451 = vpack.c.b16 %v2420, %v2419
        %v2452 = vpack.c.b16 %v2422, %v2421
        %v2453 = vpack.c.b16 %v2424, %v2423
        %v2454 = vpack.c.b16 %v2426, %v2425
        %v2455 = vpack.c.b16 %v2428, %v2427
        %v2456 = vpack.c.b16 %v2430, %v2429
        %v2457 = vpack.c.b16 %v2432, %v2431
        %v2458 = vpack.c.b16 %v2434, %v2433
        %v2459 = vpack.c.b16 %v2436, %v2435
        %v2460 = vpack.c.b16 %v2438, %v2437
        %v2461 = vpack.c.b16 %v2440, %v2439
        %v2462 = vpack.c.b16 %v2442, %v2441
        %v2463 = vpack.c.b16 %v2444, %v2443
        %v2464 = vpack.c.b16 %v2446, %v2445
        %v2465 = vpack.c.b16 %v2448, %v2447
        %v2466 = vpack.c.b16 %v2450, %v2449
        %2483 = vmatprep.subr.bf16.mxu0 0
        %2484 = vmatpush1.bf16.msra.mxu0 %v2458
        %2485 = vmatprep.subr.bf16.mxu0 0
        %2486 = vmatpush1.bf16.msra.mxu0 %v2457
        %2487 = vmatprep.subr.bf16.mxu0 0
        %2488 = vmatpush1.bf16.msra.mxu0 %v2456
        %2489 = vmatprep.subr.bf16.mxu0 0
        %2490 = vmatpush1.bf16.msra.mxu0 %v2455
        %2491 = vmatprep.subr.bf16.mxu0 0
        %2492 = vmatpush1.bf16.msra.mxu0 %v2454
        %2493 = vmatprep.subr.bf16.mxu0 0
        %2494 = vmatpush1.bf16.msra.mxu0 %v2453
        %2495 = vmatprep.subr.bf16.mxu0 0
        %2496 = vmatpush1.bf16.msra.mxu0 %v2452
        %2497 = vmatprep.subr.bf16.mxu0 0
        %2498 = vmatpush1.bf16.msra.mxu0 %v2451
        %2499 = vmatprep.subr.bf16.mxu0 0
        %2500 = vmatpush2.bf16.msra.mxu0 %v2466
        %2501 = vmatprep.subr.bf16.mxu0 0
        %2502 = vmatpush2.bf16.msra.mxu0 %v2465
        %2503 = vmatprep.subr.bf16.mxu0 0
        %2504 = vmatpush2.bf16.msra.mxu0 %v2464
        %2505 = vmatprep.subr.bf16.mxu0 0
        %2506 = vmatpush2.bf16.msra.mxu0 %v2463
        %2507 = vmatprep.subr.bf16.mxu0 0
        %2508 = vmatpush2.bf16.msra.mxu0 %v2462
        %2509 = vmatprep.subr.bf16.mxu0 0
        %2510 = vmatpush2.bf16.msra.mxu0 %v2461
        %2511 = vmatprep.subr.bf16.mxu0 0
        %2512 = vmatpush2.bf16.msra.mxu0 %v2460
        %2513 = vmatprep.subr.bf16.mxu0 0
        %2514 = vmatpush2.bf16.msra.mxu0 %v2459
        %2515 = vmatprep.mubr.bf16.mxu0 %v2342
        %2516 = vmatmul.mubr.bf16.gmra.mxu0 %v2341
        %v2517 = vpop.f32.mrf.mxu0
        %v2518 = vadd.f32 %v2385, %v2517
        %v2519 = vpop.f32.mrf.mxu0
        %v2520 = vpop.f32.mrf.mxu0
        %v2521 = vadd.f32 %v2385, %v2520
        %v2522 = vpop.f32.mrf.mxu0
        %2523 = vmatprep.mubr.bf16.mxu0 %v2344
        %2524 = vmatmul.mubr.bf16.gmra.mxu0 %v2343
        %v2525 = vpop.f32.mrf.mxu0
        %v2526 = vadd.f32 %v2385, %v2525
        %v2527 = vpop.f32.mrf.mxu0
        %v2528 = vpop.f32.mrf.mxu0
        %v2529 = vadd.f32 %v2385, %v2528
        %v2530 = vpop.f32.mrf.mxu0
        %2531 = vdwg.mxu0
        %v2532 = vadd.f32 %v2053, %v2518
        %v2533 = vadd.f32 %v2054, %v2521
        %v2534 = vadd.f32 %v2055, %v2526
        %v2535 = vadd.f32 %v2056, %v2529
        %p2536 = scmp.ne.s32.totalorder %s42, 1
        // Predicated region
        $region121: #{tpu_custom_call.1} parent=87 // pred_check
          %p2537 = pneg %p2536
        $region122: #{tpu_custom_call.1} parent=87 // pred_check_branch
          %2539 = sbr.rel (%p2537) target = $region124
        $region123: #{tpu_custom_call.1} parent=87 // pred_region
          %2540 = vst [vmem:[#allocation2] sm:$0xff] %v2532
          %2541 = vst [vmem:[#allocation2 + $0x8] sm:$0xff] %v2533
          %2542 = vst [vmem:[#allocation2 + $0x10] sm:$0xff] %v2534
          %2543 = vst [vmem:[#allocation2 + $0x18] sm:$0xff] %v2535
        $region124: #{tpu_custom_call.1} parent=87 // pred_fallthru
          _
        %p2544 = scmp.eq.s32.totalorder %s42, 1
        // Predicated region
        $region125: #{tpu_custom_call.1} parent=87 // pred_check
          %p2545 = pneg %p2544
        $region126: #{tpu_custom_call.1} parent=87 // pred_check_branch
          %2547 = sbr.rel (%p2545) target = $region128
        $region127: #{tpu_custom_call.1} parent=87 // pred_region
          %v2548 = vld [vmem:[%s15] sm:$0x1]
          %v2549 = vld [vmem:[%s16] sm:$0x1]
          %2550 = vadd.xlane.f32.xlu0 %v2532
          %v2551 = vpop.xlane.xlu0 %2550
          %2552 = vadd.xlane.f32.xlu0 %v2533
          %v2553 = vpop.xlane.xlu0 %2552
          %2554 = vadd.xlane.f32.xlu0 %v2534
          %v2555 = vpop.xlane.xlu0 %2554
          %2556 = vadd.xlane.f32.xlu0 %v2535
          %v2557 = vpop.xlane.xlu0 %2556
          %v2558 = vmul.f32 %v2532, %v2532
          %v2559 = vmul.f32 %v2533, %v2533
          %v2560 = vmul.f32 %v2534, %v2534
          %v2561 = vmul.f32 %v2535, %v2535
          %2562 = vadd.xlane.f32.xlu0 %v2558
          %v2563 = vpop.xlane.xlu0 %2562
          %2564 = vadd.xlane.f32.xlu0 %v2559
          %v2565 = vpop.xlane.xlu0 %2564
          %2566 = vadd.xlane.f32.xlu0 %v2560
          %v2567 = vpop.xlane.xlu0 %2566
          %2568 = vadd.xlane.f32.xlu0 %v2561
          %v2569 = vpop.xlane.xlu0 %2568
          %v2570 = vmul.f32 %v2551, 0.0078125
          %v2571 = vmul.f32 %v2553, 0.0078125
          %v2572 = vmul.f32 %v2555, 0.0078125
          %v2573 = vmul.f32 %v2557, 0.0078125
          %v2574 = vmul.f32 %v2551, %v2570
          %v2575 = vmul.f32 %v2553, %v2571
          %v2576 = vmul.f32 %v2555, %v2572
          %v2577 = vmul.f32 %v2557, %v2573
          %v2578 = vsub.f32 %v2563, %v2574
          %v2579 = vsub.f32 %v2565, %v2575
          %v2580 = vsub.f32 %v2567, %v2576
          %v2581 = vsub.f32 %v2569, %v2577
          %v2582 = vmul.f32 %v2578, 0.007874016
          %v2583 = vmul.f32 %v2579, 0.007874016
          %v2584 = vmul.f32 %v2580, 0.007874016
          %v2585 = vmul.f32 %v2581, 0.007874016
          %v2586 = vmax.f32 %v2582, 0.0
          %v2587 = vmax.f32 %v2583, 0.0
          %v2588 = vmax.f32 %v2584, 0.0
          %v2589 = vmax.f32 %v2585, 0.0
          %v2590 = vrsqrt.pop %v2586
          %v2591 = vmul.f32 %v2586, %v2590
          %vm2592 = vcmp.eq.f32.partialorder %v2586, inf
          %v2593 = vsel %vm2592, %v2586, %v2591
          %vm2594 = vcmp.eq.f32.partialorder %v2586, 0.0
          %v2595 = vand.u32 %v2586, 2147483648
          %v2596 = vsel %vm2594, %v2595, %v2593
          %v2597 = vrsqrt.pop %v2587
          %v2598 = vmul.f32 %v2587, %v2597
          %vm2599 = vcmp.eq.f32.partialorder %v2587, inf
          %v2600 = vsel %vm2599, %v2587, %v2598
          %vm2601 = vcmp.eq.f32.partialorder %v2587, 0.0
          %v2602 = vand.u32 %v2587, 2147483648
          %v2603 = vsel %vm2601, %v2602, %v2600
          %v2604 = vrsqrt.pop %v2588
          %v2605 = vmul.f32 %v2588, %v2604
          %vm2606 = vcmp.eq.f32.partialorder %v2588, inf
          %v2607 = vsel %vm2606, %v2588, %v2605
          %vm2608 = vcmp.eq.f32.partialorder %v2588, 0.0
          %v2609 = vand.u32 %v2588, 2147483648
          %v2610 = vsel %vm2608, %v2609, %v2607
          %v2611 = vrsqrt.pop %v2589
          %v2612 = vmul.f32 %v2589, %v2611
          %vm2613 = vcmp.eq.f32.partialorder %v2589, inf
          %v2614 = vsel %vm2613, %v2589, %v2612
          %vm2615 = vcmp.eq.f32.partialorder %v2589, 0.0
          %v2616 = vand.u32 %v2589, 2147483648
          %v2617 = vsel %vm2615, %v2616, %v2614
          %v2618 = vadd.f32 %v2596, 1e-06
          %v2619 = vadd.f32 %v2603, 1e-06
          %v2620 = vadd.f32 %v2610, 1e-06
          %v2621 = vadd.f32 %v2617, 1e-06
          %v2622 = vrcp.pop %v2618
          %v2623 = vrcp.pop %v2619
          %v2624 = vrcp.pop %v2620
          %v2625 = vrcp.pop %v2621
          %v2626 = vsub.f32 %v2532, %v2570
          %v2627 = vsub.f32 %v2533, %v2571
          %v2628 = vsub.f32 %v2534, %v2572
          %v2629 = vsub.f32 %v2535, %v2573
          %v2631 = vlaneseq
          %v2632 = vshrl.u32 %v2631, 7
          %v2633 = vsub.s32 0, %v2632
          %v2634 = vrot.slane %v2548, %v2633
          %v2636 = vmul.f32 %v2634, %v2622
          %v2637 = vmul.f32 %v2634, %v2623
          %v2638 = vmul.f32 %v2634, %v2624
          %v2639 = vmul.f32 %v2634, %v2625
          %v2640 = vmul.f32 %v2626, %v2636
          %v2641 = vmul.f32 %v2627, %v2637
          %v2642 = vmul.f32 %v2628, %v2638
          %v2643 = vmul.f32 %v2629, %v2639
          %v2645 = vlaneseq
          %v2646 = vshrl.u32 %v2645, 7
          %v2647 = vsub.s32 0, %v2646
          %v2648 = vrot.slane %v2549, %v2647
          %v2650 = vadd.f32 %v2640, %v2648
          %v2651 = vadd.f32 %v2641, %v2648
          %v2652 = vadd.f32 %v2642, %v2648
          %v2653 = vadd.f32 %v2643, %v2648
          %2654 = vst [vmem:[%s690] sm:$0xff] %v2650
          %2655 = vst [vmem:[%s690 + $0x8] sm:$0xff] %v2651
          %2656 = vst [vmem:[%s690 + $0x10] sm:$0xff] %v2652
          %2657 = vst [vmem:[%s690 + $0x18] sm:$0xff] %v2653
        $region128: #{tpu_custom_call.1} parent=87 // pred_fallthru
          _
        %s2658 = sand.u32 %s429, 1
        %s2659 = scalar_lea.sflag [#allocation6], %s2658
        %s2660 = sand.u32 %s429, 1
        %s2661 = smul.addr %s2660, 32
        %s2662 = scalar_lea.vmem [#allocation16], %s2661
        // Predicated region
        $region129: #{tpu_custom_call.1} parent=87 // pred_check
          %p2663 = pneg %p439
        $region130: #{tpu_custom_call.1} parent=87 // pred_check_branch
          %2665 = sbr.rel (%p2663) target = $region132
        $region131: #{tpu_custom_call.1} parent=87 // pred_region
          %s2666 = smul.u32 4, %s41
          %s2668 = ssub.s32 512, 512
          %2669 = vsyncadd %s2659, %s2668
          %s2670 = smul.addr %s2666, 128
          %s2671 = scalar_lea.hbm %s17, %s2670
          %s2672 = sshll.u32 %s2662, 4
          %s2673 = int_to_ptr.vmem [resolvable:$true] %s2672
          %2678 = dma.vmem_to_hbm [thread:$0]  %s2673, 512, %s2671, %s2659, 128, 128, 8
        $region132: #{tpu_custom_call.1} parent=87 // pred_fallthru
          _
      $region88: #{tpu_custom_call.1} parent=5 // pred_fallthru
        _
      %p2679 = scmp.le.s32.totalorder 2, %s32
      // Predicated region
      $region133: #{tpu_custom_call.1} parent=5 // pred_check
        %p2680 = pneg %p2679
      $region134: #{tpu_custom_call.1} parent=5 // pred_check_branch
        %2682 = sbr.rel (%p2680) target = $region136
      $region135: #{tpu_custom_call.1} parent=5 // pred_region
        %s2683 = ssub.s32 %s32, 2
        // Predicated region
        $region137: #{tpu_custom_call.1} parent=135 // pred_check
          %p2684 = pneg %p445
        $region138: #{tpu_custom_call.1} parent=135 // pred_check_branch
          %2686 = sbr.rel (%p2684) target = $region140
        $region139: #{tpu_custom_call.1} parent=135 // pred_region
          %s2687 = sand.u32 %s430, 1
          %s2688 = scalar_lea.sflag [#allocation6], %s2687
          %s2689 = sand.u32 %s430, 1
          %s2690 = smul.addr %s2689, 32
          %s2691 = scalar_lea.vmem [#allocation16], %s2690
          %2692 = dma.done %s2688, 512
        $region140: #{tpu_custom_call.1} parent=135 // pred_fallthru
          _
      $region136: #{tpu_custom_call.1} parent=5 // pred_fallthru
        _
    $region6: #{tpu_custom_call.1} parent=1 // loop_footer
      %s36 = sadd.s32 1, %s32
    $region7: #{tpu_custom_call.1} parent=1 // loop_footer_branch
      %31 = sbr.rel target = $region3
    $region8: #{tpu_custom_call.1} parent=1 // loop_exit
      _
    %2693 = vsyncpa [#allocation5], 1
    %s2694 = scalar_lea.sflag [#allocation5], 1
    %2695 = vsyncpa %s2694, 1
    %2696 = vsyncpa [#allocation8], 1
    %2697 = vsyncpa [#allocation11], 1
    %2698 = vsyncpa [#allocation14], 1
    %2699 = vsyncpa [#allocation6], 1
    %s2700 = scalar_lea.sflag [#allocation6], 1
    %2701 = vsyncpa %s2700, 1

</llo_original>
